<compile_context>
chip_gen: v5e
topology: v5e:2x2
jax: 0.10.0
libtpu: 0.0.40
codegen_flags: <defaults>
</compile_context>

<pallas_src>
import functools
import math

import jax
import jax.numpy as jnp
import numpy as np
from jax.experimental import pallas as pl
from jax.experimental.pallas import tpu as pltpu


# ----------------------------------------------------------------------------
# Pallas kernel: whole autoregressive decode loop (fused embedding+LSTM ->
# fc -> greedy pack feedback), plus the final activation heads, all on
# VMEM-resident tensors.
# ----------------------------------------------------------------------------
def decoder_kernel(w_ref, b_ref, wfc_ref, bfc_ref, h0_ref, c0_ref, out_ref,
                   *, sos, A, M):
    L, B, H = h0_ref.shape            # num_layers, batch, hidden_size
    T, _, OP = out_ref.shape          # max_length, batch, padded output lanes

    dur_lane = A
    mode_lo = A + 1
    mode_hi = A + 1 + M
    dist_lane = A + 1 + M

    # ---- hoisted loads / constants (emitted once, reused by unrolled loop) --
    w_l = [w_ref[l] for l in range(L)]           # each (2H, 4H), layer-0 has E folded in
    b_l = [b_ref[l:l + 1, :] for l in range(L)]  # each (1, 4H), b_ih + b_hh pre-summed
    w_fc = wfc_ref[...]                          # (H, OP)  (zero-padded lanes >= O)
    b_fc = bfc_ref[...]                          # (1, OP)

    lane_h = jax.lax.broadcasted_iota(jnp.int32, (B, H), 1)
    act_valid_h = lane_h < A
    mode_valid_h = (lane_h >= mode_lo) & (lane_h < mode_hi)

    def pack(pred):
        # Build the next-step *sparse* input row directly from the logits:
        # [one_hot(argmax act) | 1.0 | one_hot(argmax mode) | sigmoid(dist) | 0...]
        p = pred[:, :H]                                        # (B, H)
        a_vals = jnp.where(act_valid_h, p, -jnp.inf)
        a_max = jnp.max(a_vals, axis=-1, keepdims=True)
        a_first = jnp.min(jnp.where((a_vals == a_max) & act_valid_h, lane_h, H),
                          axis=-1, keepdims=True)
        m_vals = jnp.where(mode_valid_h, p, -jnp.inf)
        m_max = jnp.max(m_vals, axis=-1, keepdims=True)
        m_first = jnp.min(jnp.where((m_vals == m_max) & mode_valid_h, lane_h, H),
                          axis=-1, keepdims=True)
        dist = jax.nn.sigmoid(p[:, dist_lane:dist_lane + 1])   # (B, 1)
        onehot = (lane_h == a_first) | (lane_h == m_first)
        u = jnp.where(onehot | (lane_h == dur_lane), 1.0, 0.0)
        u = jnp.where(lane_h == dist_lane, dist, u)
        return u.astype(jnp.float32)

    def step(t, carry):
        hs, cs, u = carry             # hs/cs: tuples of L x (B,H); u: (B,H) sparse input
        xin = u
        new_hs, new_cs = [], []
        for l in range(L):
            xh = jnp.concatenate([xin, hs[l]], axis=-1)        # (B, 2H)
            gates = (jnp.dot(xh, w_l[l], preferred_element_type=jnp.float32)
                     + b_l[l])                                 # (B, 4H)
            sg = jax.nn.sigmoid(gates)                         # whole-vreg EUP push
            tg = jnp.tanh(gates)                               # whole-vreg EUP push
            i_g = sg[:, 0 * H:1 * H]
            f_g = sg[:, 1 * H:2 * H]
            g_g = tg[:, 2 * H:3 * H]
            o_g = sg[:, 3 * H:4 * H]
            c_new = f_g * cs[l] + i_g * g_g
            h_new = o_g * jnp.tanh(c_new)
            new_hs.append(h_new)
            new_cs.append(c_new)
            xin = h_new

        pred = jnp.dot(xin, w_fc, preferred_element_type=jnp.float32) + b_fc
        out_ref[t] = pred             # full-width (lane-dense) store of raw logits
        return (tuple(new_hs), tuple(new_cs), pack(pred))

    # initial input: act=sos (one-hot), dur=0, mode=0 (one-hot at mode_lo), dist=0
    u0 = jnp.where((lane_h == int(sos)) | (lane_h == mode_lo),
                   1.0, 0.0).astype(jnp.float32)
    h_init = tuple(h0_ref[l] for l in range(L))
    c_init = tuple(c0_ref[l] for l in range(L))
    jax.lax.fori_loop(0, T, step, (h_init, c_init, u0), unroll=True)

    # ---- epilogue: masked-lane activations on the full (T, B, OP) buffer ----
    outs = out_ref[...]
    lane3 = jax.lax.broadcasted_iota(jnp.int32, outs.shape, 2)
    act_m = lane3 < A
    mode_m = (lane3 >= mode_lo) & (lane3 < mode_hi)
    dur_m = lane3 == dur_lane
    dist_m = lane3 == dist_lane

    a_vals = jnp.where(act_m, outs, -jnp.inf)
    a_max = jnp.max(a_vals, axis=-1, keepdims=True)
    a_lse = jnp.log(jnp.sum(jnp.exp(a_vals - a_max), axis=-1, keepdims=True))

    m_vals = jnp.where(mode_m, outs, -jnp.inf)
    m_max = jnp.max(m_vals, axis=-1, keepdims=True)
    m_lse = jnp.log(jnp.sum(jnp.exp(m_vals - m_max), axis=-1, keepdims=True))

    # duration softmax over the sequence dim (axis 0 of (T,B,OP))
    d_max = jnp.max(outs, axis=0, keepdims=True)
    d_exp = jnp.exp(outs - d_max)
    d_sm = d_exp / jnp.sum(d_exp, axis=0, keepdims=True)

    result = jnp.where(
        act_m, outs - a_max - a_lse,
        jnp.where(mode_m, outs - m_max - m_lse,
                  jnp.where(dur_m, d_sm,
                            jnp.where(dist_m, jax.nn.sigmoid(outs),
                                      jnp.zeros_like(outs)))))
    out_ref[...] = result


# ----------------------------------------------------------------------------
# Wrapper (glue): embedding/weight fusion + padding + pallas_call + layout
# ----------------------------------------------------------------------------
def decoder_forward(params, h0, c0, max_length, sos):
    act_tab, mode_tab, w_ih, w_hh, b_ih, b_hh, w_fc, b_fc = params
    L, B, H = h0.shape
    O = w_fc.shape[0]
    A = act_tab.shape[0]
    M = mode_tab.shape[0]
    HA = act_tab.shape[1] + 1     # hidden_act_size
    HM = mode_tab.shape[1] + 1    # hidden_mode_size
    assert HA + HM == H
    assert O == A + 1 + M + 1
    assert O <= H                 # sparse feedback vector is padded to H lanes

    OP = 128                      # lane-dense padded output width
    hp = jax.lax.Precision.HIGHEST

    # combined embedding matrix E: maps [oh_act | dur | oh_mode | dist] -> xin
    E = jnp.zeros((O, H), jnp.float32)
    E = E.at[:A, :HA - 1].set(act_tab)
    E = E.at[A, HA - 1].set(1.0)
    E = E.at[A + 1:A + 1 + M, HA:HA + HM - 1].set(mode_tab)
    E = E.at[A + 1 + M, H - 1].set(1.0)
    E_pad = jnp.zeros((H, H), jnp.float32).at[:O].set(E)     # rows padded to H

    w_ih_t = jnp.transpose(w_ih, (0, 2, 1))                  # (L, H, 4H)
    w_hh_t = jnp.transpose(w_hh, (0, 2, 1))                  # (L, H, 4H)

    # fold embedding into layer 0, then fuse [W_ih ; W_hh] per layer
    w0_in = jnp.dot(E_pad, w_ih_t[0], precision=hp)          # (H, 4H)
    w_in = jnp.concatenate([w0_in[None], w_ih_t[1:]], axis=0)
    w_fused = jnp.concatenate([w_in, w_hh_t], axis=1)        # (L, 2H, 4H)

    b_fused = b_ih + b_hh                                    # (L, 4H)

    w_fc_pad = jnp.zeros((H, OP), jnp.float32).at[:, :O].set(w_fc.T)
    b_fc_pad = jnp.zeros((1, OP), jnp.float32).at[0, :O].set(b_fc)

    kernel = functools.partial(decoder_kernel, sos=int(sos), A=A, M=M)
    vmem = pl.BlockSpec(memory_space=pltpu.MemorySpace.VMEM)
    out_pad = pl.pallas_call(
        kernel,
        out_shape=jax.ShapeDtypeStruct((max_length, B, OP), jnp.float32),
        in_specs=[vmem] * 6,
        out_specs=vmem,
    )(w_fused, b_fused, w_fc_pad, b_fc_pad, h0, c0)

    return jnp.transpose(out_pad[..., :O], (1, 0, 2))        # (B, max_length, O)


# ----------------------------------------------------------------------------
# Pure-JAX reference (mirrors the PyTorch forward) for correctness checking
# ----------------------------------------------------------------------------
def decoder_reference(params, h0, c0, max_length, sos, A, M):
    act_tab, mode_tab, w_ih, w_hh, b_ih, b_hh, w_fc, b_fc = params
    L, B, H = h0.shape
    O = w_fc.shape[0]
    hp = jax.lax.Precision.HIGHEST

    x = jnp.zeros((B, 4), jnp.float32).at[:, 0].set(float(sos))
    h, c = h0, c0
    outs = []
    for _ in range(max_length):
        act_oh = jax.nn.one_hot(x[:, 0].astype(jnp.int32), A, dtype=jnp.float32)
        mode_oh = jax.nn.one_hot(x[:, 2].astype(jnp.int32), M, dtype=jnp.float32)
        xin = jnp.concatenate(
            [jnp.dot(act_oh, act_tab, precision=hp), x[:, 1:2],
             jnp.dot(mode_oh, mode_tab, precision=hp), x[:, 3:4]], axis=-1)
        hs, cs = [], []
        for l in range(L):
            gates = (jnp.dot(xin, w_ih[l].T, precision=hp)
                     + jnp.dot(h[l], w_hh[l].T, precision=hp)
                     + b_ih[l] + b_hh[l])
            i_g = jax.nn.sigmoid(gates[:, :H])
            f_g = jax.nn.sigmoid(gates[:, H:2 * H])
            g_g = jnp.tanh(gates[:, 2 * H:3 * H])
            o_g = jax.nn.sigmoid(gates[:, 3 * H:4 * H])
            c_new = f_g * c[l] + i_g * g_g
            h_new = o_g * jnp.tanh(c_new)
            hs.append(h_new)
            cs.append(c_new)
            xin = h_new
        h, c = jnp.stack(hs), jnp.stack(cs)
        pred = jnp.dot(xin, w_fc.T, precision=hp) + b_fc
        outs.append(pred)
        act_next = jnp.argmax(pred[:, :A], axis=-1).astype(jnp.float32)
        mode_next = jnp.argmax(pred[:, A + 1:A + 1 + M], axis=-1).astype(jnp.float32)
        dist_next = jax.nn.sigmoid(pred[:, -1])
        x = jnp.stack([act_next, jnp.ones_like(act_next), mode_next, dist_next],
                      axis=-1)
    outputs = jnp.stack(outs, axis=1)             # (B, T, O)
    acts = outputs[..., :A]
    durs = outputs[..., A:A + 1]
    modes = outputs[..., A + 1:A + 1 + M]
    dists = outputs[..., A + 1 + M:]
    return jnp.concatenate(
        [jax.nn.log_softmax(acts, axis=-1),
         jax.nn.softmax(durs, axis=-2),
         jax.nn.log_softmax(modes, axis=-1),
         jax.nn.sigmoid(dists)], axis=-1)


if __name__ == "__main__":
    # ---- module hyper-parameters (small, consistent with the forward) ----
    act_embeddings = 6
    mode_embeddings = 5
    hidden_act_size = 20
    hidden_mode_size = 12
    hidden_size = hidden_act_size + hidden_mode_size          # 32
    output_size = act_embeddings + 1 + mode_embeddings + 1    # 13
    num_layers = 2
    max_length = 8
    batch_size = 4
    sos = 0

    key = jax.random.PRNGKey(0)
    ks = jax.random.split(key, 10)
    k = 1.0 / math.sqrt(hidden_size)

    act_tab = jax.random.normal(ks[0], (act_embeddings, hidden_act_size - 1),
                                jnp.float32)
    mode_tab = jax.random.normal(ks[1], (mode_embeddings, hidden_mode_size - 1),
                                 jnp.float32)
    w_ih = jax.random.uniform(ks[2], (num_layers, 4 * hidden_size, hidden_size),
                              jnp.float32, -k, k)
    w_hh = jax.random.uniform(ks[3], (num_layers, 4 * hidden_size, hidden_size),
                              jnp.float32, -k, k)
    b_ih = jax.random.uniform(ks[4], (num_layers, 4 * hidden_size),
                              jnp.float32, -k, k)
    b_hh = jax.random.uniform(ks[5], (num_layers, 4 * hidden_size),
                              jnp.float32, -k, k)
    w_fc = jax.random.uniform(ks[6], (output_size, hidden_size),
                              jnp.float32, -k, k)
    b_fc = jax.random.uniform(ks[7], (output_size,), jnp.float32, -k, k)
    h0 = jax.random.normal(ks[8], (num_layers, batch_size, hidden_size),
                           jnp.float32)
    c0 = jax.random.normal(ks[9], (num_layers, batch_size, hidden_size),
                           jnp.float32)

    params = (act_tab, mode_tab, w_ih, w_hh, b_ih, b_hh, w_fc, b_fc)

    out = decoder_forward(params, h0, c0, max_length, sos)
    out = jax.block_until_ready(out)

    ref = decoder_reference(params, h0, c0, max_length, sos,
                            act_embeddings, mode_embeddings)
    ref = jax.block_until_ready(ref)

    assert out.shape == (batch_size, max_length, output_size), out.shape
    assert bool(jnp.all(jnp.isfinite(out)))
    np.testing.assert_allclose(np.asarray(out), np.asarray(ref),
                               atol=2e-3, rtol=2e-3)
    print("KERNEL_OK")
</pallas_src>

<mosaic_0001>
module attributes {stable_mosaic.version = 11 : i64} {
  func.func @decoder_kernel(%arg0: memref<2x64x128xf32, #tpu.memory_space<vmem>>, %arg1: memref<2x128xf32, #tpu.memory_space<vmem>>, %arg2: memref<32x128xf32, #tpu.memory_space<vmem>>, %arg3: memref<1x128xf32, #tpu.memory_space<vmem>>, %arg4: memref<2x4x32xf32, #tpu.memory_space<vmem>>, %arg5: memref<2x4x32xf32, #tpu.memory_space<vmem>>, %arg6: memref<8x4x128xf32, #tpu.memory_space<vmem>>) attributes {dimension_semantics = [], scalar_prefetch = 0 : i64, scratch_operands = 0 : i64, tpu.core_type = #tpu.core_type<tc>} {
    %c0 = arith.constant 0 : index
    %c0_0 = arith.constant 0 : index
    %c0_1 = arith.constant 0 : index
    %0 = vector.load %arg0[%c0, %c0_0, %c0_1] : memref<2x64x128xf32, #tpu.memory_space<vmem>>, vector<1x64x128xf32>
    %1 = vector.shape_cast %0 : vector<1x64x128xf32> to vector<64x128xf32>
    %c1 = arith.constant 1 : index
    %c0_2 = arith.constant 0 : index
    %c0_3 = arith.constant 0 : index
    %2 = vector.load %arg0[%c1, %c0_2, %c0_3] : memref<2x64x128xf32, #tpu.memory_space<vmem>>, vector<1x64x128xf32>
    %3 = vector.shape_cast %2 : vector<1x64x128xf32> to vector<64x128xf32>
    %c0_4 = arith.constant 0 : index
    %c0_5 = arith.constant 0 : index
    %4 = vector.load %arg1[%c0_4, %c0_5] : memref<2x128xf32, #tpu.memory_space<vmem>>, vector<1x128xf32>
    %c1_6 = arith.constant 1 : index
    %c0_7 = arith.constant 0 : index
    %5 = vector.load %arg1[%c1_6, %c0_7] : memref<2x128xf32, #tpu.memory_space<vmem>>, vector<1x128xf32>
    %c0_8 = arith.constant 0 : index
    %c0_9 = arith.constant 0 : index
    %6 = vector.load %arg2[%c0_8, %c0_9] : memref<32x128xf32, #tpu.memory_space<vmem>>, vector<32x128xf32>
    %c0_10 = arith.constant 0 : index
    %c0_11 = arith.constant 0 : index
    %7 = vector.load %arg3[%c0_10, %c0_11] : memref<1x128xf32, #tpu.memory_space<vmem>>, vector<1x128xf32>
    %8 = tpu.iota {dimensions = array<i32: 1>} : vector<4x32xi32>
    %c6_i32 = arith.constant 6 : i32
    %9 = vector.broadcast %c6_i32 : i32 to vector<4x32xi32>
    %10 = arith.cmpi slt, %8, %9 : vector<4x32xi32>
    %c7_i32 = arith.constant 7 : i32
    %11 = vector.broadcast %c7_i32 : i32 to vector<4x32xi32>
    %12 = arith.cmpi sge, %8, %11 : vector<4x32xi32>
    %c12_i32 = arith.constant 12 : i32
    %13 = vector.broadcast %c12_i32 : i32 to vector<4x32xi32>
    %14 = arith.cmpi slt, %8, %13 : vector<4x32xi32>
    %15 = arith.andi %12, %14 : vector<4x32xi1>
    %c0_i32 = arith.constant 0 : i32
    %16 = vector.broadcast %c0_i32 : i32 to vector<4x32xi32>
    %17 = arith.cmpi eq, %8, %16 : vector<4x32xi32>
    %c7_i32_12 = arith.constant 7 : i32
    %18 = vector.broadcast %c7_i32_12 : i32 to vector<4x32xi32>
    %19 = arith.cmpi eq, %8, %18 : vector<4x32xi32>
    %20 = arith.ori %17, %19 : vector<4x32xi1>
    %cst = arith.constant 1.000000e+00 : f32
    %cst_13 = arith.constant 0.000000e+00 : f32
    %21 = vector.broadcast %cst : f32 to vector<4x32xf32>
    %22 = vector.broadcast %cst_13 : f32 to vector<4x32xf32>
    %23 = arith.select %20, %21, %22 : vector<4x32xi1>, vector<4x32xf32>
    %c0_14 = arith.constant 0 : index
    %c0_15 = arith.constant 0 : index
    %c0_16 = arith.constant 0 : index
    %24 = vector.load %arg4[%c0_14, %c0_15, %c0_16] : memref<2x4x32xf32, #tpu.memory_space<vmem>>, vector<1x4x32xf32>
    %25 = vector.shape_cast %24 : vector<1x4x32xf32> to vector<4x32xf32>
    %c1_17 = arith.constant 1 : index
    %c0_18 = arith.constant 0 : index
    %c0_19 = arith.constant 0 : index
    %26 = vector.load %arg4[%c1_17, %c0_18, %c0_19] : memref<2x4x32xf32, #tpu.memory_space<vmem>>, vector<1x4x32xf32>
    %27 = vector.shape_cast %26 : vector<1x4x32xf32> to vector<4x32xf32>
    %c0_20 = arith.constant 0 : index
    %c0_21 = arith.constant 0 : index
    %c0_22 = arith.constant 0 : index
    %28 = vector.load %arg5[%c0_20, %c0_21, %c0_22] : memref<2x4x32xf32, #tpu.memory_space<vmem>>, vector<1x4x32xf32>
    %29 = vector.shape_cast %28 : vector<1x4x32xf32> to vector<4x32xf32>
    %c1_23 = arith.constant 1 : index
    %c0_24 = arith.constant 0 : index
    %c0_25 = arith.constant 0 : index
    %30 = vector.load %arg5[%c1_23, %c0_24, %c0_25] : memref<2x4x32xf32, #tpu.memory_space<vmem>>, vector<1x4x32xf32>
    %31 = vector.shape_cast %30 : vector<1x4x32xf32> to vector<4x32xf32>
    %c0_i32_26 = arith.constant 0 : i32
    %32 = tpu.concatenate %23, %25 in 1 : vector<4x32xf32>, vector<4x32xf32> -> vector<4x64xf32>
    %cst_27 = arith.constant dense<0.000000e+00> : vector<4x128xf32>
    %33 = tpu.matmul %32, %1, %cst_27 {dimension_numbers = #tpu.dot_dimension_numbers<[1], [0], [0], [1], [0, 0, 1, 1], [], []>} : vector<4x64xf32>, vector<64x128xf32>, vector<4x128xf32> -> vector<4x128xf32>
    %34 = vector.broadcast %4 : vector<1x128xf32> to vector<4x128xf32>
    %35 = arith.addf %33, %34 : vector<4x128xf32>
    %36 = arith.negf %35 : vector<4x128xf32>
    %37 = math.exp %36 : vector<4x128xf32>
    %cst_28 = arith.constant 1.000000e+00 : f32
    %38 = vector.broadcast %cst_28 : f32 to vector<4x128xf32>
    %39 = arith.addf %38, %37 : vector<4x128xf32>
    %40 = arith.divf %38, %39 : vector<4x128xf32>
    %41 = math.tanh %35 : vector<4x128xf32>
    %42 = vector.extract_strided_slice %40 {offsets = [0, 0], sizes = [4, 32], strides = [1, 1]} : vector<4x128xf32> to vector<4x32xf32>
    %43 = vector.extract_strided_slice %40 {offsets = [0, 32], sizes = [4, 32], strides = [1, 1]} : vector<4x128xf32> to vector<4x32xf32>
    %44 = vector.extract_strided_slice %41 {offsets = [0, 64], sizes = [4, 32], strides = [1, 1]} : vector<4x128xf32> to vector<4x32xf32>
    %45 = vector.extract_strided_slice %40 {offsets = [0, 96], sizes = [4, 32], strides = [1, 1]} : vector<4x128xf32> to vector<4x32xf32>
    %46 = arith.mulf %43, %29 : vector<4x32xf32>
    %47 = arith.mulf %42, %44 : vector<4x32xf32>
    %48 = arith.addf %46, %47 : vector<4x32xf32>
    %49 = math.tanh %48 : vector<4x32xf32>
    %50 = arith.mulf %45, %49 : vector<4x32xf32>
    %51 = tpu.concatenate %50, %27 in 1 : vector<4x32xf32>, vector<4x32xf32> -> vector<4x64xf32>
    %cst_29 = arith.constant dense<0.000000e+00> : vector<4x128xf32>
    %52 = tpu.matmul %51, %3, %cst_29 {dimension_numbers = #tpu.dot_dimension_numbers<[1], [0], [0], [1], [0, 0, 1, 1], [], []>} : vector<4x64xf32>, vector<64x128xf32>, vector<4x128xf32> -> vector<4x128xf32>
    %53 = vector.broadcast %5 : vector<1x128xf32> to vector<4x128xf32>
    %54 = arith.addf %52, %53 : vector<4x128xf32>
    %55 = arith.negf %54 : vector<4x128xf32>
    %56 = math.exp %55 : vector<4x128xf32>
    %cst_30 = arith.constant 1.000000e+00 : f32
    %57 = vector.broadcast %cst_30 : f32 to vector<4x128xf32>
    %58 = arith.addf %57, %56 : vector<4x128xf32>
    %59 = arith.divf %57, %58 : vector<4x128xf32>
    %60 = math.tanh %54 : vector<4x128xf32>
    %61 = vector.extract_strided_slice %59 {offsets = [0, 0], sizes = [4, 32], strides = [1, 1]} : vector<4x128xf32> to vector<4x32xf32>
    %62 = vector.extract_strided_slice %59 {offsets = [0, 32], sizes = [4, 32], strides = [1, 1]} : vector<4x128xf32> to vector<4x32xf32>
    %63 = vector.extract_strided_slice %60 {offsets = [0, 64], sizes = [4, 32], strides = [1, 1]} : vector<4x128xf32> to vector<4x32xf32>
    %64 = vector.extract_strided_slice %59 {offsets = [0, 96], sizes = [4, 32], strides = [1, 1]} : vector<4x128xf32> to vector<4x32xf32>
    %65 = arith.mulf %62, %31 : vector<4x32xf32>
    %66 = arith.mulf %61, %63 : vector<4x32xf32>
    %67 = arith.addf %65, %66 : vector<4x32xf32>
    %68 = math.tanh %67 : vector<4x32xf32>
    %69 = arith.mulf %64, %68 : vector<4x32xf32>
    %cst_31 = arith.constant dense<0.000000e+00> : vector<4x128xf32>
    %70 = tpu.matmul %69, %6, %cst_31 {dimension_numbers = #tpu.dot_dimension_numbers<[1], [0], [0], [1], [0, 0, 1, 1], [], []>} : vector<4x32xf32>, vector<32x128xf32>, vector<4x128xf32> -> vector<4x128xf32>
    %71 = vector.broadcast %7 : vector<1x128xf32> to vector<4x128xf32>
    %72 = arith.addf %70, %71 : vector<4x128xf32>
    %73 = arith.index_cast %c0_i32_26 : i32 to index
    %c0_32 = arith.constant 0 : index
    %c0_33 = arith.constant 0 : index
    %74 = vector.load %arg6[%73, %c0_32, %c0_33] : memref<8x4x128xf32, #tpu.memory_space<vmem>>, vector<1x4x128xf32>
    %75 = vector.shape_cast %74 : vector<1x4x128xf32> to vector<4x128xf32>
    %76 = vector.shape_cast %72 : vector<4x128xf32> to vector<1x4x128xf32>
    tpu.vector_store %arg6[%73, %c0_32, %c0_33], %76 {strides = array<i32>} : memref<8x4x128xf32, #tpu.memory_space<vmem>>, vector<1x4x128xf32>,
    %77 = vector.extract_strided_slice %72 {offsets = [0, 0], sizes = [4, 32], strides = [1, 1]} : vector<4x128xf32> to vector<4x32xf32>
    %cst_34 = arith.constant 0xFF800000 : f32
    %78 = vector.broadcast %cst_34 : f32 to vector<4x32xf32>
    %79 = arith.select %10, %77, %78 : vector<4x32xi1>, vector<4x32xf32>
    %cst_35 = arith.constant dense<0xFF800000> : vector<4xf32>
    %80 = vector.multi_reduction <maximumf>, %79, %cst_35 [1] : vector<4x32xf32> to vector<4xf32>
    %81 = vector.shape_cast %80 : vector<4xf32> to vector<4x1xf32>
    %82 = vector.broadcast %81 : vector<4x1xf32> to vector<4x32xf32>
    %83 = arith.cmpf oeq, %79, %82 : vector<4x32xf32>
    %84 = arith.andi %83, %10 : vector<4x32xi1>
    %c32_i32 = arith.constant 32 : i32
    %85 = vector.broadcast %c32_i32 : i32 to vector<4x32xi32>
    %86 = arith.select %84, %8, %85 : vector<4x32xi1>, vector<4x32xi32>
    %cst_36 = arith.constant dense<2147483647> : vector<4xi32>
    %87 = vector.multi_reduction <minsi>, %86, %cst_36 [1] : vector<4x32xi32> to vector<4xi32>
    %88 = vector.shape_cast %87 : vector<4xi32> to vector<4x1xi32>
    %cst_37 = arith.constant 0xFF800000 : f32
    %89 = vector.broadcast %cst_37 : f32 to vector<4x32xf32>
    %90 = arith.select %15, %77, %89 : vector<4x32xi1>, vector<4x32xf32>
    %cst_38 = arith.constant dense<0xFF800000> : vector<4xf32>
    %91 = vector.multi_reduction <maximumf>, %90, %cst_38 [1] : vector<4x32xf32> to vector<4xf32>
    %92 = vector.shape_cast %91 : vector<4xf32> to vector<4x1xf32>
    %93 = vector.broadcast %92 : vector<4x1xf32> to vector<4x32xf32>
    %94 = arith.cmpf oeq, %90, %93 : vector<4x32xf32>
    %95 = arith.andi %94, %15 : vector<4x32xi1>
    %c32_i32_39 = arith.constant 32 : i32
    %96 = vector.broadcast %c32_i32_39 : i32 to vector<4x32xi32>
    %97 = arith.select %95, %8, %96 : vector<4x32xi1>, vector<4x32xi32>
    %cst_40 = arith.constant dense<2147483647> : vector<4xi32>
    %98 = vector.multi_reduction <minsi>, %97, %cst_40 [1] : vector<4x32xi32> to vector<4xi32>
    %99 = vector.shape_cast %98 : vector<4xi32> to vector<4x1xi32>
    %100 = vector.extract_strided_slice %77 {offsets = [0, 12], sizes = [4, 1], strides = [1, 1]} : vector<4x32xf32> to vector<4x1xf32>
    %101 = arith.negf %100 : vector<4x1xf32>
    %102 = math.exp %101 : vector<4x1xf32>
    %cst_41 = arith.constant 1.000000e+00 : f32
    %103 = vector.broadcast %cst_41 : f32 to vector<4x1xf32>
    %104 = arith.addf %103, %102 : vector<4x1xf32>
    %105 = arith.divf %103, %104 : vector<4x1xf32>
    %106 = vector.broadcast %88 : vector<4x1xi32> to vector<4x32xi32>
    %107 = arith.cmpi eq, %8, %106 : vector<4x32xi32>
    %108 = vector.broadcast %99 : vector<4x1xi32> to vector<4x32xi32>
    %109 = arith.cmpi eq, %8, %108 : vector<4x32xi32>
    %110 = arith.ori %107, %109 : vector<4x32xi1>
    %c6_i32_42 = arith.constant 6 : i32
    %111 = vector.broadcast %c6_i32_42 : i32 to vector<4x32xi32>
    %112 = arith.cmpi eq, %8, %111 : vector<4x32xi32>
    %113 = arith.ori %110, %112 : vector<4x32xi1>
    %cst_43 = arith.constant 1.000000e+00 : f32
    %cst_44 = arith.constant 0.000000e+00 : f32
    %114 = vector.broadcast %cst_43 : f32 to vector<4x32xf32>
    %115 = vector.broadcast %cst_44 : f32 to vector<4x32xf32>
    %116 = arith.select %113, %114, %115 : vector<4x32xi1>, vector<4x32xf32>
    %c12_i32_45 = arith.constant 12 : i32
    %117 = vector.broadcast %c12_i32_45 : i32 to vector<4x32xi32>
    %118 = arith.cmpi eq, %8, %117 : vector<4x32xi32>
    %119 = vector.shape_cast %105 : vector<4x1xf32> to vector<4x1xf32>
    %120 = vector.broadcast %119 : vector<4x1xf32> to vector<4x32xf32>
    %121 = arith.select %118, %120, %116 : vector<4x32xi1>, vector<4x32xf32>
    %c1_i32 = arith.constant 1 : i32
    %122 = tpu.concatenate %121, %50 in 1 : vector<4x32xf32>, vector<4x32xf32> -> vector<4x64xf32>
    %cst_46 = arith.constant dense<0.000000e+00> : vector<4x128xf32>
    %123 = tpu.matmul %122, %1, %cst_46 {dimension_numbers = #tpu.dot_dimension_numbers<[1], [0], [0], [1], [0, 0, 1, 1], [], []>} : vector<4x64xf32>, vector<64x128xf32>, vector<4x128xf32> -> vector<4x128xf32>
    %124 = vector.broadcast %4 : vector<1x128xf32> to vector<4x128xf32>
    %125 = arith.addf %123, %124 : vector<4x128xf32>
    %126 = arith.negf %125 : vector<4x128xf32>
    %127 = math.exp %126 : vector<4x128xf32>
    %cst_47 = arith.constant 1.000000e+00 : f32
    %128 = vector.broadcast %cst_47 : f32 to vector<4x128xf32>
    %129 = arith.addf %128, %127 : vector<4x128xf32>
    %130 = arith.divf %128, %129 : vector<4x128xf32>
    %131 = math.tanh %125 : vector<4x128xf32>
    %132 = vector.extract_strided_slice %130 {offsets = [0, 0], sizes = [4, 32], strides = [1, 1]} : vector<4x128xf32> to vector<4x32xf32>
    %133 = vector.extract_strided_slice %130 {offsets = [0, 32], sizes = [4, 32], strides = [1, 1]} : vector<4x128xf32> to vector<4x32xf32>
    %134 = vector.extract_strided_slice %131 {offsets = [0, 64], sizes = [4, 32], strides = [1, 1]} : vector<4x128xf32> to vector<4x32xf32>
    %135 = vector.extract_strided_slice %130 {offsets = [0, 96], sizes = [4, 32], strides = [1, 1]} : vector<4x128xf32> to vector<4x32xf32>
    %136 = arith.mulf %133, %48 : vector<4x32xf32>
    %137 = arith.mulf %132, %134 : vector<4x32xf32>
    %138 = arith.addf %136, %137 : vector<4x32xf32>
    %139 = math.tanh %138 : vector<4x32xf32>
    %140 = arith.mulf %135, %139 : vector<4x32xf32>
    %141 = tpu.concatenate %140, %69 in 1 : vector<4x32xf32>, vector<4x32xf32> -> vector<4x64xf32>
    %cst_48 = arith.constant dense<0.000000e+00> : vector<4x128xf32>
    %142 = tpu.matmul %141, %3, %cst_48 {dimension_numbers = #tpu.dot_dimension_numbers<[1], [0], [0], [1], [0, 0, 1, 1], [], []>} : vector<4x64xf32>, vector<64x128xf32>, vector<4x128xf32> -> vector<4x128xf32>
    %143 = vector.broadcast %5 : vector<1x128xf32> to vector<4x128xf32>
    %144 = arith.addf %142, %143 : vector<4x128xf32>
    %145 = arith.negf %144 : vector<4x128xf32>
    %146 = math.exp %145 : vector<4x128xf32>
    %cst_49 = arith.constant 1.000000e+00 : f32
    %147 = vector.broadcast %cst_49 : f32 to vector<4x128xf32>
    %148 = arith.addf %147, %146 : vector<4x128xf32>
    %149 = arith.divf %147, %148 : vector<4x128xf32>
    %150 = math.tanh %144 : vector<4x128xf32>
    %151 = vector.extract_strided_slice %149 {offsets = [0, 0], sizes = [4, 32], strides = [1, 1]} : vector<4x128xf32> to vector<4x32xf32>
    %152 = vector.extract_strided_slice %149 {offsets = [0, 32], sizes = [4, 32], strides = [1, 1]} : vector<4x128xf32> to vector<4x32xf32>
    %153 = vector.extract_strided_slice %150 {offsets = [0, 64], sizes = [4, 32], strides = [1, 1]} : vector<4x128xf32> to vector<4x32xf32>
    %154 = vector.extract_strided_slice %149 {offsets = [0, 96], sizes = [4, 32], strides = [1, 1]} : vector<4x128xf32> to vector<4x32xf32>
    %155 = arith.mulf %152, %67 : vector<4x32xf32>
    %156 = arith.mulf %151, %153 : vector<4x32xf32>
    %157 = arith.addf %155, %156 : vector<4x32xf32>
    %158 = math.tanh %157 : vector<4x32xf32>
    %159 = arith.mulf %154, %158 : vector<4x32xf32>
    %cst_50 = arith.constant dense<0.000000e+00> : vector<4x128xf32>
    %160 = tpu.matmul %159, %6, %cst_50 {dimension_numbers = #tpu.dot_dimension_numbers<[1], [0], [0], [1], [0, 0, 1, 1], [], []>} : vector<4x32xf32>, vector<32x128xf32>, vector<4x128xf32> -> vector<4x128xf32>
    %161 = vector.broadcast %7 : vector<1x128xf32> to vector<4x128xf32>
    %162 = arith.addf %160, %161 : vector<4x128xf32>
    %163 = arith.index_cast %c1_i32 : i32 to index
    %c0_51 = arith.constant 0 : index
    %c0_52 = arith.constant 0 : index
    %164 = vector.load %arg6[%163, %c0_51, %c0_52] : memref<8x4x128xf32, #tpu.memory_space<vmem>>, vector<1x4x128xf32>
    %165 = vector.shape_cast %164 : vector<1x4x128xf32> to vector<4x128xf32>
    %166 = vector.shape_cast %162 : vector<4x128xf32> to vector<1x4x128xf32>
    tpu.vector_store %arg6[%163, %c0_51, %c0_52], %166 {strides = array<i32>} : memref<8x4x128xf32, #tpu.memory_space<vmem>>, vector<1x4x128xf32>,
    %167 = vector.extract_strided_slice %162 {offsets = [0, 0], sizes = [4, 32], strides = [1, 1]} : vector<4x128xf32> to vector<4x32xf32>
    %cst_53 = arith.constant 0xFF800000 : f32
    %168 = vector.broadcast %cst_53 : f32 to vector<4x32xf32>
    %169 = arith.select %10, %167, %168 : vector<4x32xi1>, vector<4x32xf32>
    %cst_54 = arith.constant dense<0xFF800000> : vector<4xf32>
    %170 = vector.multi_reduction <maximumf>, %169, %cst_54 [1] : vector<4x32xf32> to vector<4xf32>
    %171 = vector.shape_cast %170 : vector<4xf32> to vector<4x1xf32>
    %172 = vector.broadcast %171 : vector<4x1xf32> to vector<4x32xf32>
    %173 = arith.cmpf oeq, %169, %172 : vector<4x32xf32>
    %174 = arith.andi %173, %10 : vector<4x32xi1>
    %c32_i32_55 = arith.constant 32 : i32
    %175 = vector.broadcast %c32_i32_55 : i32 to vector<4x32xi32>
    %176 = arith.select %174, %8, %175 : vector<4x32xi1>, vector<4x32xi32>
    %cst_56 = arith.constant dense<2147483647> : vector<4xi32>
    %177 = vector.multi_reduction <minsi>, %176, %cst_56 [1] : vector<4x32xi32> to vector<4xi32>
    %178 = vector.shape_cast %177 : vector<4xi32> to vector<4x1xi32>
    %cst_57 = arith.constant 0xFF800000 : f32
    %179 = vector.broadcast %cst_57 : f32 to vector<4x32xf32>
    %180 = arith.select %15, %167, %179 : vector<4x32xi1>, vector<4x32xf32>
    %cst_58 = arith.constant dense<0xFF800000> : vector<4xf32>
    %181 = vector.multi_reduction <maximumf>, %180, %cst_58 [1] : vector<4x32xf32> to vector<4xf32>
    %182 = vector.shape_cast %181 : vector<4xf32> to vector<4x1xf32>
    %183 = vector.broadcast %182 : vector<4x1xf32> to vector<4x32xf32>
    %184 = arith.cmpf oeq, %180, %183 : vector<4x32xf32>
    %185 = arith.andi %184, %15 : vector<4x32xi1>
    %c32_i32_59 = arith.constant 32 : i32
    %186 = vector.broadcast %c32_i32_59 : i32 to vector<4x32xi32>
    %187 = arith.select %185, %8, %186 : vector<4x32xi1>, vector<4x32xi32>
    %cst_60 = arith.constant dense<2147483647> : vector<4xi32>
    %188 = vector.multi_reduction <minsi>, %187, %cst_60 [1] : vector<4x32xi32> to vector<4xi32>
    %189 = vector.shape_cast %188 : vector<4xi32> to vector<4x1xi32>
    %190 = vector.extract_strided_slice %167 {offsets = [0, 12], sizes = [4, 1], strides = [1, 1]} : vector<4x32xf32> to vector<4x1xf32>
    %191 = arith.negf %190 : vector<4x1xf32>
    %192 = math.exp %191 : vector<4x1xf32>
    %cst_61 = arith.constant 1.000000e+00 : f32
    %193 = vector.broadcast %cst_61 : f32 to vector<4x1xf32>
    %194 = arith.addf %193, %192 : vector<4x1xf32>
    %195 = arith.divf %193, %194 : vector<4x1xf32>
    %196 = vector.broadcast %178 : vector<4x1xi32> to vector<4x32xi32>
    %197 = arith.cmpi eq, %8, %196 : vector<4x32xi32>
    %198 = vector.broadcast %189 : vector<4x1xi32> to vector<4x32xi32>
    %199 = arith.cmpi eq, %8, %198 : vector<4x32xi32>
    %200 = arith.ori %197, %199 : vector<4x32xi1>
    %c6_i32_62 = arith.constant 6 : i32
    %201 = vector.broadcast %c6_i32_62 : i32 to vector<4x32xi32>
    %202 = arith.cmpi eq, %8, %201 : vector<4x32xi32>
    %203 = arith.ori %200, %202 : vector<4x32xi1>
    %cst_63 = arith.constant 1.000000e+00 : f32
    %cst_64 = arith.constant 0.000000e+00 : f32
    %204 = vector.broadcast %cst_63 : f32 to vector<4x32xf32>
    %205 = vector.broadcast %cst_64 : f32 to vector<4x32xf32>
    %206 = arith.select %203, %204, %205 : vector<4x32xi1>, vector<4x32xf32>
    %c12_i32_65 = arith.constant 12 : i32
    %207 = vector.broadcast %c12_i32_65 : i32 to vector<4x32xi32>
    %208 = arith.cmpi eq, %8, %207 : vector<4x32xi32>
    %209 = vector.shape_cast %195 : vector<4x1xf32> to vector<4x1xf32>
    %210 = vector.broadcast %209 : vector<4x1xf32> to vector<4x32xf32>
    %211 = arith.select %208, %210, %206 : vector<4x32xi1>, vector<4x32xf32>
    %c2_i32 = arith.constant 2 : i32
    %212 = tpu.concatenate %211, %140 in 1 : vector<4x32xf32>, vector<4x32xf32> -> vector<4x64xf32>
    %cst_66 = arith.constant dense<0.000000e+00> : vector<4x128xf32>
    %213 = tpu.matmul %212, %1, %cst_66 {dimension_numbers = #tpu.dot_dimension_numbers<[1], [0], [0], [1], [0, 0, 1, 1], [], []>} : vector<4x64xf32>, vector<64x128xf32>, vector<4x128xf32> -> vector<4x128xf32>
    %214 = vector.broadcast %4 : vector<1x128xf32> to vector<4x128xf32>
    %215 = arith.addf %213, %214 : vector<4x128xf32>
    %216 = arith.negf %215 : vector<4x128xf32>
    %217 = math.exp %216 : vector<4x128xf32>
    %cst_67 = arith.constant 1.000000e+00 : f32
    %218 = vector.broadcast %cst_67 : f32 to vector<4x128xf32>
    %219 = arith.addf %218, %217 : vector<4x128xf32>
    %220 = arith.divf %218, %219 : vector<4x128xf32>
    %221 = math.tanh %215 : vector<4x128xf32>
    %222 = vector.extract_strided_slice %220 {offsets = [0, 0], sizes = [4, 32], strides = [1, 1]} : vector<4x128xf32> to vector<4x32xf32>
    %223 = vector.extract_strided_slice %220 {offsets = [0, 32], sizes = [4, 32], strides = [1, 1]} : vector<4x128xf32> to vector<4x32xf32>
    %224 = vector.extract_strided_slice %221 {offsets = [0, 64], sizes = [4, 32], strides = [1, 1]} : vector<4x128xf32> to vector<4x32xf32>
    %225 = vector.extract_strided_slice %220 {offsets = [0, 96], sizes = [4, 32], strides = [1, 1]} : vector<4x128xf32> to vector<4x32xf32>
    %226 = arith.mulf %223, %138 : vector<4x32xf32>
    %227 = arith.mulf %222, %224 : vector<4x32xf32>
    %228 = arith.addf %226, %227 : vector<4x32xf32>
    %229 = math.tanh %228 : vector<4x32xf32>
    %230 = arith.mulf %225, %229 : vector<4x32xf32>
    %231 = tpu.concatenate %230, %159 in 1 : vector<4x32xf32>, vector<4x32xf32> -> vector<4x64xf32>
    %cst_68 = arith.constant dense<0.000000e+00> : vector<4x128xf32>
    %232 = tpu.matmul %231, %3, %cst_68 {dimension_numbers = #tpu.dot_dimension_numbers<[1], [0], [0], [1], [0, 0, 1, 1], [], []>} : vector<4x64xf32>, vector<64x128xf32>, vector<4x128xf32> -> vector<4x128xf32>
    %233 = vector.broadcast %5 : vector<1x128xf32> to vector<4x128xf32>
    %234 = arith.addf %232, %233 : vector<4x128xf32>
    %235 = arith.negf %234 : vector<4x128xf32>
    %236 = math.exp %235 : vector<4x128xf32>
    %cst_69 = arith.constant 1.000000e+00 : f32
    %237 = vector.broadcast %cst_69 : f32 to vector<4x128xf32>
    %238 = arith.addf %237, %236 : vector<4x128xf32>
    %239 = arith.divf %237, %238 : vector<4x128xf32>
    %240 = math.tanh %234 : vector<4x128xf32>
    %241 = vector.extract_strided_slice %239 {offsets = [0, 0], sizes = [4, 32], strides = [1, 1]} : vector<4x128xf32> to vector<4x32xf32>
    %242 = vector.extract_strided_slice %239 {offsets = [0, 32], sizes = [4, 32], strides = [1, 1]} : vector<4x128xf32> to vector<4x32xf32>
    %243 = vector.extract_strided_slice %240 {offsets = [0, 64], sizes = [4, 32], strides = [1, 1]} : vector<4x128xf32> to vector<4x32xf32>
    %244 = vector.extract_strided_slice %239 {offsets = [0, 96], sizes = [4, 32], strides = [1, 1]} : vector<4x128xf32> to vector<4x32xf32>
    %245 = arith.mulf %242, %157 : vector<4x32xf32>
    %246 = arith.mulf %241, %243 : vector<4x32xf32>
    %247 = arith.addf %245, %246 : vector<4x32xf32>
    %248 = math.tanh %247 : vector<4x32xf32>
    %249 = arith.mulf %244, %248 : vector<4x32xf32>
    %cst_70 = arith.constant dense<0.000000e+00> : vector<4x128xf32>
    %250 = tpu.matmul %249, %6, %cst_70 {dimension_numbers = #tpu.dot_dimension_numbers<[1], [0], [0], [1], [0, 0, 1, 1], [], []>} : vector<4x32xf32>, vector<32x128xf32>, vector<4x128xf32> -> vector<4x128xf32>
    %251 = vector.broadcast %7 : vector<1x128xf32> to vector<4x128xf32>
    %252 = arith.addf %250, %251 : vector<4x128xf32>
    %253 = arith.index_cast %c2_i32 : i32 to index
    %c0_71 = arith.constant 0 : index
    %c0_72 = arith.constant 0 : index
    %254 = vector.load %arg6[%253, %c0_71, %c0_72] : memref<8x4x128xf32, #tpu.memory_space<vmem>>, vector<1x4x128xf32>
    %255 = vector.shape_cast %254 : vector<1x4x128xf32> to vector<4x128xf32>
    %256 = vector.shape_cast %252 : vector<4x128xf32> to vector<1x4x128xf32>
    tpu.vector_store %arg6[%253, %c0_71, %c0_72], %256 {strides = array<i32>} : memref<8x4x128xf32, #tpu.memory_space<vmem>>, vector<1x4x128xf32>,
    %257 = vector.extract_strided_slice %252 {offsets = [0, 0], sizes = [4, 32], strides = [1, 1]} : vector<4x128xf32> to vector<4x32xf32>
    %cst_73 = arith.constant 0xFF800000 : f32
    %258 = vector.broadcast %cst_73 : f32 to vector<4x32xf32>
    %259 = arith.select %10, %257, %258 : vector<4x32xi1>, vector<4x32xf32>
    %cst_74 = arith.constant dense<0xFF800000> : vector<4xf32>
    %260 = vector.multi_reduction <maximumf>, %259, %cst_74 [1] : vector<4x32xf32> to vector<4xf32>
    %261 = vector.shape_cast %260 : vector<4xf32> to vector<4x1xf32>
    %262 = vector.broadcast %261 : vector<4x1xf32> to vector<4x32xf32>
    %263 = arith.cmpf oeq, %259, %262 : vector<4x32xf32>
    %264 = arith.andi %263, %10 : vector<4x32xi1>
    %c32_i32_75 = arith.constant 32 : i32
    %265 = vector.broadcast %c32_i32_75 : i32 to vector<4x32xi32>
    %266 = arith.select %264, %8, %265 : vector<4x32xi1>, vector<4x32xi32>
    %cst_76 = arith.constant dense<2147483647> : vector<4xi32>
    %267 = vector.multi_reduction <minsi>, %266, %cst_76 [1] : vector<4x32xi32> to vector<4xi32>
    %268 = vector.shape_cast %267 : vector<4xi32> to vector<4x1xi32>
    %cst_77 = arith.constant 0xFF800000 : f32
    %269 = vector.broadcast %cst_77 : f32 to vector<4x32xf32>
    %270 = arith.select %15, %257, %269 : vector<4x32xi1>, vector<4x32xf32>
    %cst_78 = arith.constant dense<0xFF800000> : vector<4xf32>
    %271 = vector.multi_reduction <maximumf>, %270, %cst_78 [1] : vector<4x32xf32> to vector<4xf32>
    %272 = vector.shape_cast %271 : vector<4xf32> to vector<4x1xf32>
    %273 = vector.broadcast %272 : vector<4x1xf32> to vector<4x32xf32>
    %274 = arith.cmpf oeq, %270, %273 : vector<4x32xf32>
    %275 = arith.andi %274, %15 : vector<4x32xi1>
    %c32_i32_79 = arith.constant 32 : i32
    %276 = vector.broadcast %c32_i32_79 : i32 to vector<4x32xi32>
    %277 = arith.select %275, %8, %276 : vector<4x32xi1>, vector<4x32xi32>
    %cst_80 = arith.constant dense<2147483647> : vector<4xi32>
    %278 = vector.multi_reduction <minsi>, %277, %cst_80 [1] : vector<4x32xi32> to vector<4xi32>
    %279 = vector.shape_cast %278 : vector<4xi32> to vector<4x1xi32>
    %280 = vector.extract_strided_slice %257 {offsets = [0, 12], sizes = [4, 1], strides = [1, 1]} : vector<4x32xf32> to vector<4x1xf32>
    %281 = arith.negf %280 : vector<4x1xf32>
    %282 = math.exp %281 : vector<4x1xf32>
    %cst_81 = arith.constant 1.000000e+00 : f32
    %283 = vector.broadcast %cst_81 : f32 to vector<4x1xf32>
    %284 = arith.addf %283, %282 : vector<4x1xf32>
    %285 = arith.divf %283, %284 : vector<4x1xf32>
    %286 = vector.broadcast %268 : vector<4x1xi32> to vector<4x32xi32>
    %287 = arith.cmpi eq, %8, %286 : vector<4x32xi32>
    %288 = vector.broadcast %279 : vector<4x1xi32> to vector<4x32xi32>
    %289 = arith.cmpi eq, %8, %288 : vector<4x32xi32>
    %290 = arith.ori %287, %289 : vector<4x32xi1>
    %c6_i32_82 = arith.constant 6 : i32
    %291 = vector.broadcast %c6_i32_82 : i32 to vector<4x32xi32>
    %292 = arith.cmpi eq, %8, %291 : vector<4x32xi32>
    %293 = arith.ori %290, %292 : vector<4x32xi1>
    %cst_83 = arith.constant 1.000000e+00 : f32
    %cst_84 = arith.constant 0.000000e+00 : f32
    %294 = vector.broadcast %cst_83 : f32 to vector<4x32xf32>
    %295 = vector.broadcast %cst_84 : f32 to vector<4x32xf32>
    %296 = arith.select %293, %294, %295 : vector<4x32xi1>, vector<4x32xf32>
    %c12_i32_85 = arith.constant 12 : i32
    %297 = vector.broadcast %c12_i32_85 : i32 to vector<4x32xi32>
    %298 = arith.cmpi eq, %8, %297 : vector<4x32xi32>
    %299 = vector.shape_cast %285 : vector<4x1xf32> to vector<4x1xf32>
    %300 = vector.broadcast %299 : vector<4x1xf32> to vector<4x32xf32>
    %301 = arith.select %298, %300, %296 : vector<4x32xi1>, vector<4x32xf32>
    %c3_i32 = arith.constant 3 : i32
    %302 = tpu.concatenate %301, %230 in 1 : vector<4x32xf32>, vector<4x32xf32> -> vector<4x64xf32>
    %cst_86 = arith.constant dense<0.000000e+00> : vector<4x128xf32>
    %303 = tpu.matmul %302, %1, %cst_86 {dimension_numbers = #tpu.dot_dimension_numbers<[1], [0], [0], [1], [0, 0, 1, 1], [], []>} : vector<4x64xf32>, vector<64x128xf32>, vector<4x128xf32> -> vector<4x128xf32>
    %304 = vector.broadcast %4 : vector<1x128xf32> to vector<4x128xf32>
    %305 = arith.addf %303, %304 : vector<4x128xf32>
    %306 = arith.negf %305 : vector<4x128xf32>
    %307 = math.exp %306 : vector<4x128xf32>
    %cst_87 = arith.constant 1.000000e+00 : f32
    %308 = vector.broadcast %cst_87 : f32 to vector<4x128xf32>
    %309 = arith.addf %308, %307 : vector<4x128xf32>
    %310 = arith.divf %308, %309 : vector<4x128xf32>
    %311 = math.tanh %305 : vector<4x128xf32>
    %312 = vector.extract_strided_slice %310 {offsets = [0, 0], sizes = [4, 32], strides = [1, 1]} : vector<4x128xf32> to vector<4x32xf32>
    %313 = vector.extract_strided_slice %310 {offsets = [0, 32], sizes = [4, 32], strides = [1, 1]} : vector<4x128xf32> to vector<4x32xf32>
    %314 = vector.extract_strided_slice %311 {offsets = [0, 64], sizes = [4, 32], strides = [1, 1]} : vector<4x128xf32> to vector<4x32xf32>
    %315 = vector.extract_strided_slice %310 {offsets = [0, 96], sizes = [4, 32], strides = [1, 1]} : vector<4x128xf32> to vector<4x32xf32>
    %316 = arith.mulf %313, %228 : vector<4x32xf32>
    %317 = arith.mulf %312, %314 : vector<4x32xf32>
    %318 = arith.addf %316, %317 : vector<4x32xf32>
    %319 = math.tanh %318 : vector<4x32xf32>
    %320 = arith.mulf %315, %319 : vector<4x32xf32>
    %321 = tpu.concatenate %320, %249 in 1 : vector<4x32xf32>, vector<4x32xf32> -> vector<4x64xf32>
    %cst_88 = arith.constant dense<0.000000e+00> : vector<4x128xf32>
    %322 = tpu.matmul %321, %3, %cst_88 {dimension_numbers = #tpu.dot_dimension_numbers<[1], [0], [0], [1], [0, 0, 1, 1], [], []>} : vector<4x64xf32>, vector<64x128xf32>, vector<4x128xf32> -> vector<4x128xf32>
    %323 = vector.broadcast %5 : vector<1x128xf32> to vector<4x128xf32>
    %324 = arith.addf %322, %323 : vector<4x128xf32>
    %325 = arith.negf %324 : vector<4x128xf32>
    %326 = math.exp %325 : vector<4x128xf32>
    %cst_89 = arith.constant 1.000000e+00 : f32
    %327 = vector.broadcast %cst_89 : f32 to vector<4x128xf32>
    %328 = arith.addf %327, %326 : vector<4x128xf32>
    %329 = arith.divf %327, %328 : vector<4x128xf32>
    %330 = math.tanh %324 : vector<4x128xf32>
    %331 = vector.extract_strided_slice %329 {offsets = [0, 0], sizes = [4, 32], strides = [1, 1]} : vector<4x128xf32> to vector<4x32xf32>
    %332 = vector.extract_strided_slice %329 {offsets = [0, 32], sizes = [4, 32], strides = [1, 1]} : vector<4x128xf32> to vector<4x32xf32>
    %333 = vector.extract_strided_slice %330 {offsets = [0, 64], sizes = [4, 32], strides = [1, 1]} : vector<4x128xf32> to vector<4x32xf32>
    %334 = vector.extract_strided_slice %329 {offsets = [0, 96], sizes = [4, 32], strides = [1, 1]} : vector<4x128xf32> to vector<4x32xf32>
    %335 = arith.mulf %332, %247 : vector<4x32xf32>
    %336 = arith.mulf %331, %333 : vector<4x32xf32>
    %337 = arith.addf %335, %336 : vector<4x32xf32>
    %338 = math.tanh %337 : vector<4x32xf32>
    %339 = arith.mulf %334, %338 : vector<4x32xf32>
    %cst_90 = arith.constant dense<0.000000e+00> : vector<4x128xf32>
    %340 = tpu.matmul %339, %6, %cst_90 {dimension_numbers = #tpu.dot_dimension_numbers<[1], [0], [0], [1], [0, 0, 1, 1], [], []>} : vector<4x32xf32>, vector<32x128xf32>, vector<4x128xf32> -> vector<4x128xf32>
    %341 = vector.broadcast %7 : vector<1x128xf32> to vector<4x128xf32>
    %342 = arith.addf %340, %341 : vector<4x128xf32>
    %343 = arith.index_cast %c3_i32 : i32 to index
    %c0_91 = arith.constant 0 : index
    %c0_92 = arith.constant 0 : index
    %344 = vector.load %arg6[%343, %c0_91, %c0_92] : memref<8x4x128xf32, #tpu.memory_space<vmem>>, vector<1x4x128xf32>
    %345 = vector.shape_cast %344 : vector<1x4x128xf32> to vector<4x128xf32>
    %346 = vector.shape_cast %342 : vector<4x128xf32> to vector<1x4x128xf32>
    tpu.vector_store %arg6[%343, %c0_91, %c0_92], %346 {strides = array<i32>} : memref<8x4x128xf32, #tpu.memory_space<vmem>>, vector<1x4x128xf32>,
    %347 = vector.extract_strided_slice %342 {offsets = [0, 0], sizes = [4, 32], strides = [1, 1]} : vector<4x128xf32> to vector<4x32xf32>
    %cst_93 = arith.constant 0xFF800000 : f32
    %348 = vector.broadcast %cst_93 : f32 to vector<4x32xf32>
    %349 = arith.select %10, %347, %348 : vector<4x32xi1>, vector<4x32xf32>
    %cst_94 = arith.constant dense<0xFF800000> : vector<4xf32>
    %350 = vector.multi_reduction <maximumf>, %349, %cst_94 [1] : vector<4x32xf32> to vector<4xf32>
    %351 = vector.shape_cast %350 : vector<4xf32> to vector<4x1xf32>
    %352 = vector.broadcast %351 : vector<4x1xf32> to vector<4x32xf32>
    %353 = arith.cmpf oeq, %349, %352 : vector<4x32xf32>
    %354 = arith.andi %353, %10 : vector<4x32xi1>
    %c32_i32_95 = arith.constant 32 : i32
    %355 = vector.broadcast %c32_i32_95 : i32 to vector<4x32xi32>
    %356 = arith.select %354, %8, %355 : vector<4x32xi1>, vector<4x32xi32>
    %cst_96 = arith.constant dense<2147483647> : vector<4xi32>
    %357 = vector.multi_reduction <minsi>, %356, %cst_96 [1] : vector<4x32xi32> to vector<4xi32>
    %358 = vector.shape_cast %357 : vector<4xi32> to vector<4x1xi32>
    %cst_97 = arith.constant 0xFF800000 : f32
    %359 = vector.broadcast %cst_97 : f32 to vector<4x32xf32>
    %360 = arith.select %15, %347, %359 : vector<4x32xi1>, vector<4x32xf32>
    %cst_98 = arith.constant dense<0xFF800000> : vector<4xf32>
    %361 = vector.multi_reduction <maximumf>, %360, %cst_98 [1] : vector<4x32xf32> to vector<4xf32>
    %362 = vector.shape_cast %361 : vector<4xf32> to vector<4x1xf32>
    %363 = vector.broadcast %362 : vector<4x1xf32> to vector<4x32xf32>
    %364 = arith.cmpf oeq, %360, %363 : vector<4x32xf32>
    %365 = arith.andi %364, %15 : vector<4x32xi1>
    %c32_i32_99 = arith.constant 32 : i32
    %366 = vector.broadcast %c32_i32_99 : i32 to vector<4x32xi32>
    %367 = arith.select %365, %8, %366 : vector<4x32xi1>, vector<4x32xi32>
    %cst_100 = arith.constant dense<2147483647> : vector<4xi32>
    %368 = vector.multi_reduction <minsi>, %367, %cst_100 [1] : vector<4x32xi32> to vector<4xi32>
    %369 = vector.shape_cast %368 : vector<4xi32> to vector<4x1xi32>
    %370 = vector.extract_strided_slice %347 {offsets = [0, 12], sizes = [4, 1], strides = [1, 1]} : vector<4x32xf32> to vector<4x1xf32>
    %371 = arith.negf %370 : vector<4x1xf32>
    %372 = math.exp %371 : vector<4x1xf32>
    %cst_101 = arith.constant 1.000000e+00 : f32
    %373 = vector.broadcast %cst_101 : f32 to vector<4x1xf32>
    %374 = arith.addf %373, %372 : vector<4x1xf32>
    %375 = arith.divf %373, %374 : vector<4x1xf32>
    %376 = vector.broadcast %358 : vector<4x1xi32> to vector<4x32xi32>
    %377 = arith.cmpi eq, %8, %376 : vector<4x32xi32>
    %378 = vector.broadcast %369 : vector<4x1xi32> to vector<4x32xi32>
    %379 = arith.cmpi eq, %8, %378 : vector<4x32xi32>
    %380 = arith.ori %377, %379 : vector<4x32xi1>
    %c6_i32_102 = arith.constant 6 : i32
    %381 = vector.broadcast %c6_i32_102 : i32 to vector<4x32xi32>
    %382 = arith.cmpi eq, %8, %381 : vector<4x32xi32>
    %383 = arith.ori %380, %382 : vector<4x32xi1>
    %cst_103 = arith.constant 1.000000e+00 : f32
    %cst_104 = arith.constant 0.000000e+00 : f32
    %384 = vector.broadcast %cst_103 : f32 to vector<4x32xf32>
    %385 = vector.broadcast %cst_104 : f32 to vector<4x32xf32>
    %386 = arith.select %383, %384, %385 : vector<4x32xi1>, vector<4x32xf32>
    %c12_i32_105 = arith.constant 12 : i32
    %387 = vector.broadcast %c12_i32_105 : i32 to vector<4x32xi32>
    %388 = arith.cmpi eq, %8, %387 : vector<4x32xi32>
    %389 = vector.shape_cast %375 : vector<4x1xf32> to vector<4x1xf32>
    %390 = vector.broadcast %389 : vector<4x1xf32> to vector<4x32xf32>
    %391 = arith.select %388, %390, %386 : vector<4x32xi1>, vector<4x32xf32>
    %c4_i32 = arith.constant 4 : i32
    %392 = tpu.concatenate %391, %320 in 1 : vector<4x32xf32>, vector<4x32xf32> -> vector<4x64xf32>
    %cst_106 = arith.constant dense<0.000000e+00> : vector<4x128xf32>
    %393 = tpu.matmul %392, %1, %cst_106 {dimension_numbers = #tpu.dot_dimension_numbers<[1], [0], [0], [1], [0, 0, 1, 1], [], []>} : vector<4x64xf32>, vector<64x128xf32>, vector<4x128xf32> -> vector<4x128xf32>
    %394 = vector.broadcast %4 : vector<1x128xf32> to vector<4x128xf32>
    %395 = arith.addf %393, %394 : vector<4x128xf32>
    %396 = arith.negf %395 : vector<4x128xf32>
    %397 = math.exp %396 : vector<4x128xf32>
    %cst_107 = arith.constant 1.000000e+00 : f32
    %398 = vector.broadcast %cst_107 : f32 to vector<4x128xf32>
    %399 = arith.addf %398, %397 : vector<4x128xf32>
    %400 = arith.divf %398, %399 : vector<4x128xf32>
    %401 = math.tanh %395 : vector<4x128xf32>
    %402 = vector.extract_strided_slice %400 {offsets = [0, 0], sizes = [4, 32], strides = [1, 1]} : vector<4x128xf32> to vector<4x32xf32>
    %403 = vector.extract_strided_slice %400 {offsets = [0, 32], sizes = [4, 32], strides = [1, 1]} : vector<4x128xf32> to vector<4x32xf32>
    %404 = vector.extract_strided_slice %401 {offsets = [0, 64], sizes = [4, 32], strides = [1, 1]} : vector<4x128xf32> to vector<4x32xf32>
    %405 = vector.extract_strided_slice %400 {offsets = [0, 96], sizes = [4, 32], strides = [1, 1]} : vector<4x128xf32> to vector<4x32xf32>
    %406 = arith.mulf %403, %318 : vector<4x32xf32>
    %407 = arith.mulf %402, %404 : vector<4x32xf32>
    %408 = arith.addf %406, %407 : vector<4x32xf32>
    %409 = math.tanh %408 : vector<4x32xf32>
    %410 = arith.mulf %405, %409 : vector<4x32xf32>
    %411 = tpu.concatenate %410, %339 in 1 : vector<4x32xf32>, vector<4x32xf32> -> vector<4x64xf32>
    %cst_108 = arith.constant dense<0.000000e+00> : vector<4x128xf32>
    %412 = tpu.matmul %411, %3, %cst_108 {dimension_numbers = #tpu.dot_dimension_numbers<[1], [0], [0], [1], [0, 0, 1, 1], [], []>} : vector<4x64xf32>, vector<64x128xf32>, vector<4x128xf32> -> vector<4x128xf32>
    %413 = vector.broadcast %5 : vector<1x128xf32> to vector<4x128xf32>
    %414 = arith.addf %412, %413 : vector<4x128xf32>
    %415 = arith.negf %414 : vector<4x128xf32>
    %416 = math.exp %415 : vector<4x128xf32>
    %cst_109 = arith.constant 1.000000e+00 : f32
    %417 = vector.broadcast %cst_109 : f32 to vector<4x128xf32>
    %418 = arith.addf %417, %416 : vector<4x128xf32>
    %419 = arith.divf %417, %418 : vector<4x128xf32>
    %420 = math.tanh %414 : vector<4x128xf32>
    %421 = vector.extract_strided_slice %419 {offsets = [0, 0], sizes = [4, 32], strides = [1, 1]} : vector<4x128xf32> to vector<4x32xf32>
    %422 = vector.extract_strided_slice %419 {offsets = [0, 32], sizes = [4, 32], strides = [1, 1]} : vector<4x128xf32> to vector<4x32xf32>
    %423 = vector.extract_strided_slice %420 {offsets = [0, 64], sizes = [4, 32], strides = [1, 1]} : vector<4x128xf32> to vector<4x32xf32>
    %424 = vector.extract_strided_slice %419 {offsets = [0, 96], sizes = [4, 32], strides = [1, 1]} : vector<4x128xf32> to vector<4x32xf32>
    %425 = arith.mulf %422, %337 : vector<4x32xf32>
    %426 = arith.mulf %421, %423 : vector<4x32xf32>
    %427 = arith.addf %425, %426 : vector<4x32xf32>
    %428 = math.tanh %427 : vector<4x32xf32>
    %429 = arith.mulf %424, %428 : vector<4x32xf32>
    %cst_110 = arith.constant dense<0.000000e+00> : vector<4x128xf32>
    %430 = tpu.matmul %429, %6, %cst_110 {dimension_numbers = #tpu.dot_dimension_numbers<[1], [0], [0], [1], [0, 0, 1, 1], [], []>} : vector<4x32xf32>, vector<32x128xf32>, vector<4x128xf32> -> vector<4x128xf32>
    %431 = vector.broadcast %7 : vector<1x128xf32> to vector<4x128xf32>
    %432 = arith.addf %430, %431 : vector<4x128xf32>
    %433 = arith.index_cast %c4_i32 : i32 to index
    %c0_111 = arith.constant 0 : index
    %c0_112 = arith.constant 0 : index
    %434 = vector.load %arg6[%433, %c0_111, %c0_112] : memref<8x4x128xf32, #tpu.memory_space<vmem>>, vector<1x4x128xf32>
    %435 = vector.shape_cast %434 : vector<1x4x128xf32> to vector<4x128xf32>
    %436 = vector.shape_cast %432 : vector<4x128xf32> to vector<1x4x128xf32>
    tpu.vector_store %arg6[%433, %c0_111, %c0_112], %436 {strides = array<i32>} : memref<8x4x128xf32, #tpu.memory_space<vmem>>, vector<1x4x128xf32>,
    %437 = vector.extract_strided_slice %432 {offsets = [0, 0], sizes = [4, 32], strides = [1, 1]} : vector<4x128xf32> to vector<4x32xf32>
    %cst_113 = arith.constant 0xFF800000 : f32
    %438 = vector.broadcast %cst_113 : f32 to vector<4x32xf32>
    %439 = arith.select %10, %437, %438 : vector<4x32xi1>, vector<4x32xf32>
    %cst_114 = arith.constant dense<0xFF800000> : vector<4xf32>
    %440 = vector.multi_reduction <maximumf>, %439, %cst_114 [1] : vector<4x32xf32> to vector<4xf32>
    %441 = vector.shape_cast %440 : vector<4xf32> to vector<4x1xf32>
    %442 = vector.broadcast %441 : vector<4x1xf32> to vector<4x32xf32>
    %443 = arith.cmpf oeq, %439, %442 : vector<4x32xf32>
    %444 = arith.andi %443, %10 : vector<4x32xi1>
    %c32_i32_115 = arith.constant 32 : i32
    %445 = vector.broadcast %c32_i32_115 : i32 to vector<4x32xi32>
    %446 = arith.select %444, %8, %445 : vector<4x32xi1>, vector<4x32xi32>
    %cst_116 = arith.constant dense<2147483647> : vector<4xi32>
    %447 = vector.multi_reduction <minsi>, %446, %cst_116 [1] : vector<4x32xi32> to vector<4xi32>
    %448 = vector.shape_cast %447 : vector<4xi32> to vector<4x1xi32>
    %cst_117 = arith.constant 0xFF800000 : f32
    %449 = vector.broadcast %cst_117 : f32 to vector<4x32xf32>
    %450 = arith.select %15, %437, %449 : vector<4x32xi1>, vector<4x32xf32>
    %cst_118 = arith.constant dense<0xFF800000> : vector<4xf32>
    %451 = vector.multi_reduction <maximumf>, %450, %cst_118 [1] : vector<4x32xf32> to vector<4xf32>
    %452 = vector.shape_cast %451 : vector<4xf32> to vector<4x1xf32>
    %453 = vector.broadcast %452 : vector<4x1xf32> to vector<4x32xf32>
    %454 = arith.cmpf oeq, %450, %453 : vector<4x32xf32>
    %455 = arith.andi %454, %15 : vector<4x32xi1>
    %c32_i32_119 = arith.constant 32 : i32
    %456 = vector.broadcast %c32_i32_119 : i32 to vector<4x32xi32>
    %457 = arith.select %455, %8, %456 : vector<4x32xi1>, vector<4x32xi32>
    %cst_120 = arith.constant dense<2147483647> : vector<4xi32>
    %458 = vector.multi_reduction <minsi>, %457, %cst_120 [1] : vector<4x32xi32> to vector<4xi32>
    %459 = vector.shape_cast %458 : vector<4xi32> to vector<4x1xi32>
    %460 = vector.extract_strided_slice %437 {offsets = [0, 12], sizes = [4, 1], strides = [1, 1]} : vector<4x32xf32> to vector<4x1xf32>
    %461 = arith.negf %460 : vector<4x1xf32>
    %462 = math.exp %461 : vector<4x1xf32>
    %cst_121 = arith.constant 1.000000e+00 : f32
    %463 = vector.broadcast %cst_121 : f32 to vector<4x1xf32>
    %464 = arith.addf %463, %462 : vector<4x1xf32>
    %465 = arith.divf %463, %464 : vector<4x1xf32>
    %466 = vector.broadcast %448 : vector<4x1xi32> to vector<4x32xi32>
    %467 = arith.cmpi eq, %8, %466 : vector<4x32xi32>
    %468 = vector.broadcast %459 : vector<4x1xi32> to vector<4x32xi32>
    %469 = arith.cmpi eq, %8, %468 : vector<4x32xi32>
    %470 = arith.ori %467, %469 : vector<4x32xi1>
    %c6_i32_122 = arith.constant 6 : i32
    %471 = vector.broadcast %c6_i32_122 : i32 to vector<4x32xi32>
    %472 = arith.cmpi eq, %8, %471 : vector<4x32xi32>
    %473 = arith.ori %470, %472 : vector<4x32xi1>
    %cst_123 = arith.constant 1.000000e+00 : f32
    %cst_124 = arith.constant 0.000000e+00 : f32
    %474 = vector.broadcast %cst_123 : f32 to vector<4x32xf32>
    %475 = vector.broadcast %cst_124 : f32 to vector<4x32xf32>
    %476 = arith.select %473, %474, %475 : vector<4x32xi1>, vector<4x32xf32>
    %c12_i32_125 = arith.constant 12 : i32
    %477 = vector.broadcast %c12_i32_125 : i32 to vector<4x32xi32>
    %478 = arith.cmpi eq, %8, %477 : vector<4x32xi32>
    %479 = vector.shape_cast %465 : vector<4x1xf32> to vector<4x1xf32>
    %480 = vector.broadcast %479 : vector<4x1xf32> to vector<4x32xf32>
    %481 = arith.select %478, %480, %476 : vector<4x32xi1>, vector<4x32xf32>
    %c5_i32 = arith.constant 5 : i32
    %482 = tpu.concatenate %481, %410 in 1 : vector<4x32xf32>, vector<4x32xf32> -> vector<4x64xf32>
    %cst_126 = arith.constant dense<0.000000e+00> : vector<4x128xf32>
    %483 = tpu.matmul %482, %1, %cst_126 {dimension_numbers = #tpu.dot_dimension_numbers<[1], [0], [0], [1], [0, 0, 1, 1], [], []>} : vector<4x64xf32>, vector<64x128xf32>, vector<4x128xf32> -> vector<4x128xf32>
    %484 = vector.broadcast %4 : vector<1x128xf32> to vector<4x128xf32>
    %485 = arith.addf %483, %484 : vector<4x128xf32>
    %486 = arith.negf %485 : vector<4x128xf32>
    %487 = math.exp %486 : vector<4x128xf32>
    %cst_127 = arith.constant 1.000000e+00 : f32
    %488 = vector.broadcast %cst_127 : f32 to vector<4x128xf32>
    %489 = arith.addf %488, %487 : vector<4x128xf32>
    %490 = arith.divf %488, %489 : vector<4x128xf32>
    %491 = math.tanh %485 : vector<4x128xf32>
    %492 = vector.extract_strided_slice %490 {offsets = [0, 0], sizes = [4, 32], strides = [1, 1]} : vector<4x128xf32> to vector<4x32xf32>
    %493 = vector.extract_strided_slice %490 {offsets = [0, 32], sizes = [4, 32], strides = [1, 1]} : vector<4x128xf32> to vector<4x32xf32>
    %494 = vector.extract_strided_slice %491 {offsets = [0, 64], sizes = [4, 32], strides = [1, 1]} : vector<4x128xf32> to vector<4x32xf32>
    %495 = vector.extract_strided_slice %490 {offsets = [0, 96], sizes = [4, 32], strides = [1, 1]} : vector<4x128xf32> to vector<4x32xf32>
    %496 = arith.mulf %493, %408 : vector<4x32xf32>
    %497 = arith.mulf %492, %494 : vector<4x32xf32>
    %498 = arith.addf %496, %497 : vector<4x32xf32>
    %499 = math.tanh %498 : vector<4x32xf32>
    %500 = arith.mulf %495, %499 : vector<4x32xf32>
    %501 = tpu.concatenate %500, %429 in 1 : vector<4x32xf32>, vector<4x32xf32> -> vector<4x64xf32>
    %cst_128 = arith.constant dense<0.000000e+00> : vector<4x128xf32>
    %502 = tpu.matmul %501, %3, %cst_128 {dimension_numbers = #tpu.dot_dimension_numbers<[1], [0], [0], [1], [0, 0, 1, 1], [], []>} : vector<4x64xf32>, vector<64x128xf32>, vector<4x128xf32> -> vector<4x128xf32>
    %503 = vector.broadcast %5 : vector<1x128xf32> to vector<4x128xf32>
    %504 = arith.addf %502, %503 : vector<4x128xf32>
    %505 = arith.negf %504 : vector<4x128xf32>
    %506 = math.exp %505 : vector<4x128xf32>
    %cst_129 = arith.constant 1.000000e+00 : f32
    %507 = vector.broadcast %cst_129 : f32 to vector<4x128xf32>
    %508 = arith.addf %507, %506 : vector<4x128xf32>
    %509 = arith.divf %507, %508 : vector<4x128xf32>
    %510 = math.tanh %504 : vector<4x128xf32>
    %511 = vector.extract_strided_slice %509 {offsets = [0, 0], sizes = [4, 32], strides = [1, 1]} : vector<4x128xf32> to vector<4x32xf32>
    %512 = vector.extract_strided_slice %509 {offsets = [0, 32], sizes = [4, 32], strides = [1, 1]} : vector<4x128xf32> to vector<4x32xf32>
    %513 = vector.extract_strided_slice %510 {offsets = [0, 64], sizes = [4, 32], strides = [1, 1]} : vector<4x128xf32> to vector<4x32xf32>
    %514 = vector.extract_strided_slice %509 {offsets = [0, 96], sizes = [4, 32], strides = [1, 1]} : vector<4x128xf32> to vector<4x32xf32>
    %515 = arith.mulf %512, %427 : vector<4x32xf32>
    %516 = arith.mulf %511, %513 : vector<4x32xf32>
    %517 = arith.addf %515, %516 : vector<4x32xf32>
    %518 = math.tanh %517 : vector<4x32xf32>
    %519 = arith.mulf %514, %518 : vector<4x32xf32>
    %cst_130 = arith.constant dense<0.000000e+00> : vector<4x128xf32>
    %520 = tpu.matmul %519, %6, %cst_130 {dimension_numbers = #tpu.dot_dimension_numbers<[1], [0], [0], [1], [0, 0, 1, 1], [], []>} : vector<4x32xf32>, vector<32x128xf32>, vector<4x128xf32> -> vector<4x128xf32>
    %521 = vector.broadcast %7 : vector<1x128xf32> to vector<4x128xf32>
    %522 = arith.addf %520, %521 : vector<4x128xf32>
    %523 = arith.index_cast %c5_i32 : i32 to index
    %c0_131 = arith.constant 0 : index
    %c0_132 = arith.constant 0 : index
    %524 = vector.load %arg6[%523, %c0_131, %c0_132] : memref<8x4x128xf32, #tpu.memory_space<vmem>>, vector<1x4x128xf32>
    %525 = vector.shape_cast %524 : vector<1x4x128xf32> to vector<4x128xf32>
    %526 = vector.shape_cast %522 : vector<4x128xf32> to vector<1x4x128xf32>
    tpu.vector_store %arg6[%523, %c0_131, %c0_132], %526 {strides = array<i32>} : memref<8x4x128xf32, #tpu.memory_space<vmem>>, vector<1x4x128xf32>,
    %527 = vector.extract_strided_slice %522 {offsets = [0, 0], sizes = [4, 32], strides = [1, 1]} : vector<4x128xf32> to vector<4x32xf32>
    %cst_133 = arith.constant 0xFF800000 : f32
    %528 = vector.broadcast %cst_133 : f32 to vector<4x32xf32>
    %529 = arith.select %10, %527, %528 : vector<4x32xi1>, vector<4x32xf32>
    %cst_134 = arith.constant dense<0xFF800000> : vector<4xf32>
    %530 = vector.multi_reduction <maximumf>, %529, %cst_134 [1] : vector<4x32xf32> to vector<4xf32>
    %531 = vector.shape_cast %530 : vector<4xf32> to vector<4x1xf32>
    %532 = vector.broadcast %531 : vector<4x1xf32> to vector<4x32xf32>
    %533 = arith.cmpf oeq, %529, %532 : vector<4x32xf32>
    %534 = arith.andi %533, %10 : vector<4x32xi1>
    %c32_i32_135 = arith.constant 32 : i32
    %535 = vector.broadcast %c32_i32_135 : i32 to vector<4x32xi32>
    %536 = arith.select %534, %8, %535 : vector<4x32xi1>, vector<4x32xi32>
    %cst_136 = arith.constant dense<2147483647> : vector<4xi32>
    %537 = vector.multi_reduction <minsi>, %536, %cst_136 [1] : vector<4x32xi32> to vector<4xi32>
    %538 = vector.shape_cast %537 : vector<4xi32> to vector<4x1xi32>
    %cst_137 = arith.constant 0xFF800000 : f32
    %539 = vector.broadcast %cst_137 : f32 to vector<4x32xf32>
    %540 = arith.select %15, %527, %539 : vector<4x32xi1>, vector<4x32xf32>
    %cst_138 = arith.constant dense<0xFF800000> : vector<4xf32>
    %541 = vector.multi_reduction <maximumf>, %540, %cst_138 [1] : vector<4x32xf32> to vector<4xf32>
    %542 = vector.shape_cast %541 : vector<4xf32> to vector<4x1xf32>
    %543 = vector.broadcast %542 : vector<4x1xf32> to vector<4x32xf32>
    %544 = arith.cmpf oeq, %540, %543 : vector<4x32xf32>
    %545 = arith.andi %544, %15 : vector<4x32xi1>
    %c32_i32_139 = arith.constant 32 : i32
    %546 = vector.broadcast %c32_i32_139 : i32 to vector<4x32xi32>
    %547 = arith.select %545, %8, %546 : vector<4x32xi1>, vector<4x32xi32>
    %cst_140 = arith.constant dense<2147483647> : vector<4xi32>
    %548 = vector.multi_reduction <minsi>, %547, %cst_140 [1] : vector<4x32xi32> to vector<4xi32>
    %549 = vector.shape_cast %548 : vector<4xi32> to vector<4x1xi32>
    %550 = vector.extract_strided_slice %527 {offsets = [0, 12], sizes = [4, 1], strides = [1, 1]} : vector<4x32xf32> to vector<4x1xf32>
    %551 = arith.negf %550 : vector<4x1xf32>
    %552 = math.exp %551 : vector<4x1xf32>
    %cst_141 = arith.constant 1.000000e+00 : f32
    %553 = vector.broadcast %cst_141 : f32 to vector<4x1xf32>
    %554 = arith.addf %553, %552 : vector<4x1xf32>
    %555 = arith.divf %553, %554 : vector<4x1xf32>
    %556 = vector.broadcast %538 : vector<4x1xi32> to vector<4x32xi32>
    %557 = arith.cmpi eq, %8, %556 : vector<4x32xi32>
    %558 = vector.broadcast %549 : vector<4x1xi32> to vector<4x32xi32>
    %559 = arith.cmpi eq, %8, %558 : vector<4x32xi32>
    %560 = arith.ori %557, %559 : vector<4x32xi1>
    %c6_i32_142 = arith.constant 6 : i32
    %561 = vector.broadcast %c6_i32_142 : i32 to vector<4x32xi32>
    %562 = arith.cmpi eq, %8, %561 : vector<4x32xi32>
    %563 = arith.ori %560, %562 : vector<4x32xi1>
    %cst_143 = arith.constant 1.000000e+00 : f32
    %cst_144 = arith.constant 0.000000e+00 : f32
    %564 = vector.broadcast %cst_143 : f32 to vector<4x32xf32>
    %565 = vector.broadcast %cst_144 : f32 to vector<4x32xf32>
    %566 = arith.select %563, %564, %565 : vector<4x32xi1>, vector<4x32xf32>
    %c12_i32_145 = arith.constant 12 : i32
    %567 = vector.broadcast %c12_i32_145 : i32 to vector<4x32xi32>
    %568 = arith.cmpi eq, %8, %567 : vector<4x32xi32>
    %569 = vector.shape_cast %555 : vector<4x1xf32> to vector<4x1xf32>
    %570 = vector.broadcast %569 : vector<4x1xf32> to vector<4x32xf32>
    %571 = arith.select %568, %570, %566 : vector<4x32xi1>, vector<4x32xf32>
    %c6_i32_146 = arith.constant 6 : i32
    %572 = tpu.concatenate %571, %500 in 1 : vector<4x32xf32>, vector<4x32xf32> -> vector<4x64xf32>
    %cst_147 = arith.constant dense<0.000000e+00> : vector<4x128xf32>
    %573 = tpu.matmul %572, %1, %cst_147 {dimension_numbers = #tpu.dot_dimension_numbers<[1], [0], [0], [1], [0, 0, 1, 1], [], []>} : vector<4x64xf32>, vector<64x128xf32>, vector<4x128xf32> -> vector<4x128xf32>
    %574 = vector.broadcast %4 : vector<1x128xf32> to vector<4x128xf32>
    %575 = arith.addf %573, %574 : vector<4x128xf32>
    %576 = arith.negf %575 : vector<4x128xf32>
    %577 = math.exp %576 : vector<4x128xf32>
    %cst_148 = arith.constant 1.000000e+00 : f32
    %578 = vector.broadcast %cst_148 : f32 to vector<4x128xf32>
    %579 = arith.addf %578, %577 : vector<4x128xf32>
    %580 = arith.divf %578, %579 : vector<4x128xf32>
    %581 = math.tanh %575 : vector<4x128xf32>
    %582 = vector.extract_strided_slice %580 {offsets = [0, 0], sizes = [4, 32], strides = [1, 1]} : vector<4x128xf32> to vector<4x32xf32>
    %583 = vector.extract_strided_slice %580 {offsets = [0, 32], sizes = [4, 32], strides = [1, 1]} : vector<4x128xf32> to vector<4x32xf32>
    %584 = vector.extract_strided_slice %581 {offsets = [0, 64], sizes = [4, 32], strides = [1, 1]} : vector<4x128xf32> to vector<4x32xf32>
    %585 = vector.extract_strided_slice %580 {offsets = [0, 96], sizes = [4, 32], strides = [1, 1]} : vector<4x128xf32> to vector<4x32xf32>
    %586 = arith.mulf %583, %498 : vector<4x32xf32>
    %587 = arith.mulf %582, %584 : vector<4x32xf32>
    %588 = arith.addf %586, %587 : vector<4x32xf32>
    %589 = math.tanh %588 : vector<4x32xf32>
    %590 = arith.mulf %585, %589 : vector<4x32xf32>
    %591 = tpu.concatenate %590, %519 in 1 : vector<4x32xf32>, vector<4x32xf32> -> vector<4x64xf32>
    %cst_149 = arith.constant dense<0.000000e+00> : vector<4x128xf32>
    %592 = tpu.matmul %591, %3, %cst_149 {dimension_numbers = #tpu.dot_dimension_numbers<[1], [0], [0], [1], [0, 0, 1, 1], [], []>} : vector<4x64xf32>, vector<64x128xf32>, vector<4x128xf32> -> vector<4x128xf32>
    %593 = vector.broadcast %5 : vector<1x128xf32> to vector<4x128xf32>
    %594 = arith.addf %592, %593 : vector<4x128xf32>
    %595 = arith.negf %594 : vector<4x128xf32>
    %596 = math.exp %595 : vector<4x128xf32>
    %cst_150 = arith.constant 1.000000e+00 : f32
    %597 = vector.broadcast %cst_150 : f32 to vector<4x128xf32>
    %598 = arith.addf %597, %596 : vector<4x128xf32>
    %599 = arith.divf %597, %598 : vector<4x128xf32>
    %600 = math.tanh %594 : vector<4x128xf32>
    %601 = vector.extract_strided_slice %599 {offsets = [0, 0], sizes = [4, 32], strides = [1, 1]} : vector<4x128xf32> to vector<4x32xf32>
    %602 = vector.extract_strided_slice %599 {offsets = [0, 32], sizes = [4, 32], strides = [1, 1]} : vector<4x128xf32> to vector<4x32xf32>
    %603 = vector.extract_strided_slice %600 {offsets = [0, 64], sizes = [4, 32], strides = [1, 1]} : vector<4x128xf32> to vector<4x32xf32>
    %604 = vector.extract_strided_slice %599 {offsets = [0, 96], sizes = [4, 32], strides = [1, 1]} : vector<4x128xf32> to vector<4x32xf32>
    %605 = arith.mulf %602, %517 : vector<4x32xf32>
    %606 = arith.mulf %601, %603 : vector<4x32xf32>
    %607 = arith.addf %605, %606 : vector<4x32xf32>
    %608 = math.tanh %607 : vector<4x32xf32>
    %609 = arith.mulf %604, %608 : vector<4x32xf32>
    %cst_151 = arith.constant dense<0.000000e+00> : vector<4x128xf32>
    %610 = tpu.matmul %609, %6, %cst_151 {dimension_numbers = #tpu.dot_dimension_numbers<[1], [0], [0], [1], [0, 0, 1, 1], [], []>} : vector<4x32xf32>, vector<32x128xf32>, vector<4x128xf32> -> vector<4x128xf32>
    %611 = vector.broadcast %7 : vector<1x128xf32> to vector<4x128xf32>
    %612 = arith.addf %610, %611 : vector<4x128xf32>
    %613 = arith.index_cast %c6_i32_146 : i32 to index
    %c0_152 = arith.constant 0 : index
    %c0_153 = arith.constant 0 : index
    %614 = vector.load %arg6[%613, %c0_152, %c0_153] : memref<8x4x128xf32, #tpu.memory_space<vmem>>, vector<1x4x128xf32>
    %615 = vector.shape_cast %614 : vector<1x4x128xf32> to vector<4x128xf32>
    %616 = vector.shape_cast %612 : vector<4x128xf32> to vector<1x4x128xf32>
    tpu.vector_store %arg6[%613, %c0_152, %c0_153], %616 {strides = array<i32>} : memref<8x4x128xf32, #tpu.memory_space<vmem>>, vector<1x4x128xf32>,
    %617 = vector.extract_strided_slice %612 {offsets = [0, 0], sizes = [4, 32], strides = [1, 1]} : vector<4x128xf32> to vector<4x32xf32>
    %cst_154 = arith.constant 0xFF800000 : f32
    %618 = vector.broadcast %cst_154 : f32 to vector<4x32xf32>
    %619 = arith.select %10, %617, %618 : vector<4x32xi1>, vector<4x32xf32>
    %cst_155 = arith.constant dense<0xFF800000> : vector<4xf32>
    %620 = vector.multi_reduction <maximumf>, %619, %cst_155 [1] : vector<4x32xf32> to vector<4xf32>
    %621 = vector.shape_cast %620 : vector<4xf32> to vector<4x1xf32>
    %622 = vector.broadcast %621 : vector<4x1xf32> to vector<4x32xf32>
    %623 = arith.cmpf oeq, %619, %622 : vector<4x32xf32>
    %624 = arith.andi %623, %10 : vector<4x32xi1>
    %c32_i32_156 = arith.constant 32 : i32
    %625 = vector.broadcast %c32_i32_156 : i32 to vector<4x32xi32>
    %626 = arith.select %624, %8, %625 : vector<4x32xi1>, vector<4x32xi32>
    %cst_157 = arith.constant dense<2147483647> : vector<4xi32>
    %627 = vector.multi_reduction <minsi>, %626, %cst_157 [1] : vector<4x32xi32> to vector<4xi32>
    %628 = vector.shape_cast %627 : vector<4xi32> to vector<4x1xi32>
    %cst_158 = arith.constant 0xFF800000 : f32
    %629 = vector.broadcast %cst_158 : f32 to vector<4x32xf32>
    %630 = arith.select %15, %617, %629 : vector<4x32xi1>, vector<4x32xf32>
    %cst_159 = arith.constant dense<0xFF800000> : vector<4xf32>
    %631 = vector.multi_reduction <maximumf>, %630, %cst_159 [1] : vector<4x32xf32> to vector<4xf32>
    %632 = vector.shape_cast %631 : vector<4xf32> to vector<4x1xf32>
    %633 = vector.broadcast %632 : vector<4x1xf32> to vector<4x32xf32>
    %634 = arith.cmpf oeq, %630, %633 : vector<4x32xf32>
    %635 = arith.andi %634, %15 : vector<4x32xi1>
    %c32_i32_160 = arith.constant 32 : i32
    %636 = vector.broadcast %c32_i32_160 : i32 to vector<4x32xi32>
    %637 = arith.select %635, %8, %636 : vector<4x32xi1>, vector<4x32xi32>
    %cst_161 = arith.constant dense<2147483647> : vector<4xi32>
    %638 = vector.multi_reduction <minsi>, %637, %cst_161 [1] : vector<4x32xi32> to vector<4xi32>
    %639 = vector.shape_cast %638 : vector<4xi32> to vector<4x1xi32>
    %640 = vector.extract_strided_slice %617 {offsets = [0, 12], sizes = [4, 1], strides = [1, 1]} : vector<4x32xf32> to vector<4x1xf32>
    %641 = arith.negf %640 : vector<4x1xf32>
    %642 = math.exp %641 : vector<4x1xf32>
    %cst_162 = arith.constant 1.000000e+00 : f32
    %643 = vector.broadcast %cst_162 : f32 to vector<4x1xf32>
    %644 = arith.addf %643, %642 : vector<4x1xf32>
    %645 = arith.divf %643, %644 : vector<4x1xf32>
    %646 = vector.broadcast %628 : vector<4x1xi32> to vector<4x32xi32>
    %647 = arith.cmpi eq, %8, %646 : vector<4x32xi32>
    %648 = vector.broadcast %639 : vector<4x1xi32> to vector<4x32xi32>
    %649 = arith.cmpi eq, %8, %648 : vector<4x32xi32>
    %650 = arith.ori %647, %649 : vector<4x32xi1>
    %c6_i32_163 = arith.constant 6 : i32
    %651 = vector.broadcast %c6_i32_163 : i32 to vector<4x32xi32>
    %652 = arith.cmpi eq, %8, %651 : vector<4x32xi32>
    %653 = arith.ori %650, %652 : vector<4x32xi1>
    %cst_164 = arith.constant 1.000000e+00 : f32
    %cst_165 = arith.constant 0.000000e+00 : f32
    %654 = vector.broadcast %cst_164 : f32 to vector<4x32xf32>
    %655 = vector.broadcast %cst_165 : f32 to vector<4x32xf32>
    %656 = arith.select %653, %654, %655 : vector<4x32xi1>, vector<4x32xf32>
    %c12_i32_166 = arith.constant 12 : i32
    %657 = vector.broadcast %c12_i32_166 : i32 to vector<4x32xi32>
    %658 = arith.cmpi eq, %8, %657 : vector<4x32xi32>
    %659 = vector.shape_cast %645 : vector<4x1xf32> to vector<4x1xf32>
    %660 = vector.broadcast %659 : vector<4x1xf32> to vector<4x32xf32>
    %661 = arith.select %658, %660, %656 : vector<4x32xi1>, vector<4x32xf32>
    %c7_i32_167 = arith.constant 7 : i32
    %662 = tpu.concatenate %661, %590 in 1 : vector<4x32xf32>, vector<4x32xf32> -> vector<4x64xf32>
    %cst_168 = arith.constant dense<0.000000e+00> : vector<4x128xf32>
    %663 = tpu.matmul %662, %1, %cst_168 {dimension_numbers = #tpu.dot_dimension_numbers<[1], [0], [0], [1], [0, 0, 1, 1], [], []>} : vector<4x64xf32>, vector<64x128xf32>, vector<4x128xf32> -> vector<4x128xf32>
    %664 = vector.broadcast %4 : vector<1x128xf32> to vector<4x128xf32>
    %665 = arith.addf %663, %664 : vector<4x128xf32>
    %666 = arith.negf %665 : vector<4x128xf32>
    %667 = math.exp %666 : vector<4x128xf32>
    %cst_169 = arith.constant 1.000000e+00 : f32
    %668 = vector.broadcast %cst_169 : f32 to vector<4x128xf32>
    %669 = arith.addf %668, %667 : vector<4x128xf32>
    %670 = arith.divf %668, %669 : vector<4x128xf32>
    %671 = math.tanh %665 : vector<4x128xf32>
    %672 = vector.extract_strided_slice %670 {offsets = [0, 0], sizes = [4, 32], strides = [1, 1]} : vector<4x128xf32> to vector<4x32xf32>
    %673 = vector.extract_strided_slice %670 {offsets = [0, 32], sizes = [4, 32], strides = [1, 1]} : vector<4x128xf32> to vector<4x32xf32>
    %674 = vector.extract_strided_slice %671 {offsets = [0, 64], sizes = [4, 32], strides = [1, 1]} : vector<4x128xf32> to vector<4x32xf32>
    %675 = vector.extract_strided_slice %670 {offsets = [0, 96], sizes = [4, 32], strides = [1, 1]} : vector<4x128xf32> to vector<4x32xf32>
    %676 = arith.mulf %673, %588 : vector<4x32xf32>
    %677 = arith.mulf %672, %674 : vector<4x32xf32>
    %678 = arith.addf %676, %677 : vector<4x32xf32>
    %679 = math.tanh %678 : vector<4x32xf32>
    %680 = arith.mulf %675, %679 : vector<4x32xf32>
    %681 = tpu.concatenate %680, %609 in 1 : vector<4x32xf32>, vector<4x32xf32> -> vector<4x64xf32>
    %cst_170 = arith.constant dense<0.000000e+00> : vector<4x128xf32>
    %682 = tpu.matmul %681, %3, %cst_170 {dimension_numbers = #tpu.dot_dimension_numbers<[1], [0], [0], [1], [0, 0, 1, 1], [], []>} : vector<4x64xf32>, vector<64x128xf32>, vector<4x128xf32> -> vector<4x128xf32>
    %683 = vector.broadcast %5 : vector<1x128xf32> to vector<4x128xf32>
    %684 = arith.addf %682, %683 : vector<4x128xf32>
    %685 = arith.negf %684 : vector<4x128xf32>
    %686 = math.exp %685 : vector<4x128xf32>
    %cst_171 = arith.constant 1.000000e+00 : f32
    %687 = vector.broadcast %cst_171 : f32 to vector<4x128xf32>
    %688 = arith.addf %687, %686 : vector<4x128xf32>
    %689 = arith.divf %687, %688 : vector<4x128xf32>
    %690 = math.tanh %684 : vector<4x128xf32>
    %691 = vector.extract_strided_slice %689 {offsets = [0, 0], sizes = [4, 32], strides = [1, 1]} : vector<4x128xf32> to vector<4x32xf32>
    %692 = vector.extract_strided_slice %689 {offsets = [0, 32], sizes = [4, 32], strides = [1, 1]} : vector<4x128xf32> to vector<4x32xf32>
    %693 = vector.extract_strided_slice %690 {offsets = [0, 64], sizes = [4, 32], strides = [1, 1]} : vector<4x128xf32> to vector<4x32xf32>
    %694 = vector.extract_strided_slice %689 {offsets = [0, 96], sizes = [4, 32], strides = [1, 1]} : vector<4x128xf32> to vector<4x32xf32>
    %695 = arith.mulf %692, %607 : vector<4x32xf32>
    %696 = arith.mulf %691, %693 : vector<4x32xf32>
    %697 = arith.addf %695, %696 : vector<4x32xf32>
    %698 = math.tanh %697 : vector<4x32xf32>
    %699 = arith.mulf %694, %698 : vector<4x32xf32>
    %cst_172 = arith.constant dense<0.000000e+00> : vector<4x128xf32>
    %700 = tpu.matmul %699, %6, %cst_172 {dimension_numbers = #tpu.dot_dimension_numbers<[1], [0], [0], [1], [0, 0, 1, 1], [], []>} : vector<4x32xf32>, vector<32x128xf32>, vector<4x128xf32> -> vector<4x128xf32>
    %701 = vector.broadcast %7 : vector<1x128xf32> to vector<4x128xf32>
    %702 = arith.addf %700, %701 : vector<4x128xf32>
    %703 = arith.index_cast %c7_i32_167 : i32 to index
    %c0_173 = arith.constant 0 : index
    %c0_174 = arith.constant 0 : index
    %704 = vector.load %arg6[%703, %c0_173, %c0_174] : memref<8x4x128xf32, #tpu.memory_space<vmem>>, vector<1x4x128xf32>
    %705 = vector.shape_cast %704 : vector<1x4x128xf32> to vector<4x128xf32>
    %706 = vector.shape_cast %702 : vector<4x128xf32> to vector<1x4x128xf32>
    tpu.vector_store %arg6[%703, %c0_173, %c0_174], %706 {strides = array<i32>} : memref<8x4x128xf32, #tpu.memory_space<vmem>>, vector<1x4x128xf32>,
    %707 = vector.extract_strided_slice %702 {offsets = [0, 0], sizes = [4, 32], strides = [1, 1]} : vector<4x128xf32> to vector<4x32xf32>
    %cst_175 = arith.constant 0xFF800000 : f32
    %708 = vector.broadcast %cst_175 : f32 to vector<4x32xf32>
    %709 = arith.select %10, %707, %708 : vector<4x32xi1>, vector<4x32xf32>
    %cst_176 = arith.constant dense<0xFF800000> : vector<4xf32>
    %710 = vector.multi_reduction <maximumf>, %709, %cst_176 [1] : vector<4x32xf32> to vector<4xf32>
    %711 = vector.shape_cast %710 : vector<4xf32> to vector<4x1xf32>
    %712 = vector.broadcast %711 : vector<4x1xf32> to vector<4x32xf32>
    %713 = arith.cmpf oeq, %709, %712 : vector<4x32xf32>
    %714 = arith.andi %713, %10 : vector<4x32xi1>
    %c32_i32_177 = arith.constant 32 : i32
    %715 = vector.broadcast %c32_i32_177 : i32 to vector<4x32xi32>
    %716 = arith.select %714, %8, %715 : vector<4x32xi1>, vector<4x32xi32>
    %cst_178 = arith.constant dense<2147483647> : vector<4xi32>
    %717 = vector.multi_reduction <minsi>, %716, %cst_178 [1] : vector<4x32xi32> to vector<4xi32>
    %718 = vector.shape_cast %717 : vector<4xi32> to vector<4x1xi32>
    %cst_179 = arith.constant 0xFF800000 : f32
    %719 = vector.broadcast %cst_179 : f32 to vector<4x32xf32>
    %720 = arith.select %15, %707, %719 : vector<4x32xi1>, vector<4x32xf32>
    %cst_180 = arith.constant dense<0xFF800000> : vector<4xf32>
    %721 = vector.multi_reduction <maximumf>, %720, %cst_180 [1] : vector<4x32xf32> to vector<4xf32>
    %722 = vector.shape_cast %721 : vector<4xf32> to vector<4x1xf32>
    %723 = vector.broadcast %722 : vector<4x1xf32> to vector<4x32xf32>
    %724 = arith.cmpf oeq, %720, %723 : vector<4x32xf32>
    %725 = arith.andi %724, %15 : vector<4x32xi1>
    %c32_i32_181 = arith.constant 32 : i32
    %726 = vector.broadcast %c32_i32_181 : i32 to vector<4x32xi32>
    %727 = arith.select %725, %8, %726 : vector<4x32xi1>, vector<4x32xi32>
    %cst_182 = arith.constant dense<2147483647> : vector<4xi32>
    %728 = vector.multi_reduction <minsi>, %727, %cst_182 [1] : vector<4x32xi32> to vector<4xi32>
    %729 = vector.shape_cast %728 : vector<4xi32> to vector<4x1xi32>
    %730 = vector.extract_strided_slice %707 {offsets = [0, 12], sizes = [4, 1], strides = [1, 1]} : vector<4x32xf32> to vector<4x1xf32>
    %731 = arith.negf %730 : vector<4x1xf32>
    %732 = math.exp %731 : vector<4x1xf32>
    %cst_183 = arith.constant 1.000000e+00 : f32
    %733 = vector.broadcast %cst_183 : f32 to vector<4x1xf32>
    %734 = arith.addf %733, %732 : vector<4x1xf32>
    %735 = arith.divf %733, %734 : vector<4x1xf32>
    %736 = vector.broadcast %718 : vector<4x1xi32> to vector<4x32xi32>
    %737 = arith.cmpi eq, %8, %736 : vector<4x32xi32>
    %738 = vector.broadcast %729 : vector<4x1xi32> to vector<4x32xi32>
    %739 = arith.cmpi eq, %8, %738 : vector<4x32xi32>
    %740 = arith.ori %737, %739 : vector<4x32xi1>
    %c6_i32_184 = arith.constant 6 : i32
    %741 = vector.broadcast %c6_i32_184 : i32 to vector<4x32xi32>
    %742 = arith.cmpi eq, %8, %741 : vector<4x32xi32>
    %743 = arith.ori %740, %742 : vector<4x32xi1>
    %cst_185 = arith.constant 1.000000e+00 : f32
    %cst_186 = arith.constant 0.000000e+00 : f32
    %744 = vector.broadcast %cst_185 : f32 to vector<4x32xf32>
    %745 = vector.broadcast %cst_186 : f32 to vector<4x32xf32>
    %746 = arith.select %743, %744, %745 : vector<4x32xi1>, vector<4x32xf32>
    %c12_i32_187 = arith.constant 12 : i32
    %747 = vector.broadcast %c12_i32_187 : i32 to vector<4x32xi32>
    %748 = arith.cmpi eq, %8, %747 : vector<4x32xi32>
    %749 = vector.shape_cast %735 : vector<4x1xf32> to vector<4x1xf32>
    %750 = vector.broadcast %749 : vector<4x1xf32> to vector<4x32xf32>
    %751 = arith.select %748, %750, %746 : vector<4x32xi1>, vector<4x32xf32>
    %c8_i32 = arith.constant 8 : i32
    %c0_188 = arith.constant 0 : index
    %c0_189 = arith.constant 0 : index
    %c0_190 = arith.constant 0 : index
    %752 = vector.load %arg6[%c0_188, %c0_189, %c0_190] : memref<8x4x128xf32, #tpu.memory_space<vmem>>, vector<8x4x128xf32>
    %753 = tpu.iota {dimensions = array<i32: 2>} : vector<8x4x128xi32>
    %c6_i32_191 = arith.constant 6 : i32
    %754 = vector.broadcast %c6_i32_191 : i32 to vector<8x4x128xi32>
    %755 = arith.cmpi slt, %753, %754 : vector<8x4x128xi32>
    %c7_i32_192 = arith.constant 7 : i32
    %756 = vector.broadcast %c7_i32_192 : i32 to vector<8x4x128xi32>
    %757 = arith.cmpi sge, %753, %756 : vector<8x4x128xi32>
    %c12_i32_193 = arith.constant 12 : i32
    %758 = vector.broadcast %c12_i32_193 : i32 to vector<8x4x128xi32>
    %759 = arith.cmpi slt, %753, %758 : vector<8x4x128xi32>
    %760 = arith.andi %757, %759 : vector<8x4x128xi1>
    %c6_i32_194 = arith.constant 6 : i32
    %761 = vector.broadcast %c6_i32_194 : i32 to vector<8x4x128xi32>
    %762 = arith.cmpi eq, %753, %761 : vector<8x4x128xi32>
    %c12_i32_195 = arith.constant 12 : i32
    %763 = vector.broadcast %c12_i32_195 : i32 to vector<8x4x128xi32>
    %764 = arith.cmpi eq, %753, %763 : vector<8x4x128xi32>
    %cst_196 = arith.constant 0xFF800000 : f32
    %765 = vector.broadcast %cst_196 : f32 to vector<8x4x128xf32>
    %766 = arith.select %755, %752, %765 : vector<8x4x128xi1>, vector<8x4x128xf32>
    %cst_197 = arith.constant dense<0xFF800000> : vector<8x4xf32>
    %767 = vector.multi_reduction <maximumf>, %766, %cst_197 [2] : vector<8x4x128xf32> to vector<8x4xf32>
    %768 = vector.shape_cast %767 : vector<8x4xf32> to vector<8x4x1xf32>
    %769 = vector.broadcast %768 : vector<8x4x1xf32> to vector<8x4x128xf32>
    %770 = arith.subf %766, %769 : vector<8x4x128xf32>
    %771 = math.exp %770 : vector<8x4x128xf32>
    %cst_198 = arith.constant dense<0.000000e+00> : vector<8x4xf32>
    %772 = vector.multi_reduction <add>, %771, %cst_198 [2] : vector<8x4x128xf32> to vector<8x4xf32>
    %773 = vector.shape_cast %772 : vector<8x4xf32> to vector<8x4x1xf32>
    %774 = math.log %773 : vector<8x4x1xf32>
    %cst_199 = arith.constant 0xFF800000 : f32
    %775 = vector.broadcast %cst_199 : f32 to vector<8x4x128xf32>
    %776 = arith.select %760, %752, %775 : vector<8x4x128xi1>, vector<8x4x128xf32>
    %cst_200 = arith.constant dense<0xFF800000> : vector<8x4xf32>
    %777 = vector.multi_reduction <maximumf>, %776, %cst_200 [2] : vector<8x4x128xf32> to vector<8x4xf32>
    %778 = vector.shape_cast %777 : vector<8x4xf32> to vector<8x4x1xf32>
    %779 = vector.broadcast %778 : vector<8x4x1xf32> to vector<8x4x128xf32>
    %780 = arith.subf %776, %779 : vector<8x4x128xf32>
    %781 = math.exp %780 : vector<8x4x128xf32>
    %cst_201 = arith.constant dense<0.000000e+00> : vector<8x4xf32>
    %782 = vector.multi_reduction <add>, %781, %cst_201 [2] : vector<8x4x128xf32> to vector<8x4xf32>
    %783 = vector.shape_cast %782 : vector<8x4xf32> to vector<8x4x1xf32>
    %784 = math.log %783 : vector<8x4x1xf32>
    %cst_202 = arith.constant dense<0xFF800000> : vector<4x128xf32>
    %785 = vector.multi_reduction <maximumf>, %752, %cst_202 [0] : vector<8x4x128xf32> to vector<4x128xf32>
    %786 = vector.shape_cast %785 : vector<4x128xf32> to vector<1x4x128xf32>
    %787 = vector.broadcast %786 : vector<1x4x128xf32> to vector<8x4x128xf32>
    %788 = arith.subf %752, %787 : vector<8x4x128xf32>
    %789 = math.exp %788 : vector<8x4x128xf32>
    %cst_203 = arith.constant dense<0.000000e+00> : vector<4x128xf32>
    %790 = vector.multi_reduction <add>, %789, %cst_203 [0] : vector<8x4x128xf32> to vector<4x128xf32>
    %791 = vector.shape_cast %790 : vector<4x128xf32> to vector<1x4x128xf32>
    %792 = vector.broadcast %791 : vector<1x4x128xf32> to vector<8x4x128xf32>
    %793 = arith.divf %789, %792 : vector<8x4x128xf32>
    %794 = vector.broadcast %768 : vector<8x4x1xf32> to vector<8x4x128xf32>
    %795 = arith.subf %752, %794 : vector<8x4x128xf32>
    %796 = vector.broadcast %774 : vector<8x4x1xf32> to vector<8x4x128xf32>
    %797 = arith.subf %795, %796 : vector<8x4x128xf32>
    %798 = vector.broadcast %778 : vector<8x4x1xf32> to vector<8x4x128xf32>
    %799 = arith.subf %752, %798 : vector<8x4x128xf32>
    %800 = vector.broadcast %784 : vector<8x4x1xf32> to vector<8x4x128xf32>
    %801 = arith.subf %799, %800 : vector<8x4x128xf32>
    %802 = arith.negf %752 : vector<8x4x128xf32>
    %803 = math.exp %802 : vector<8x4x128xf32>
    %cst_204 = arith.constant 1.000000e+00 : f32
    %804 = vector.broadcast %cst_204 : f32 to vector<8x4x128xf32>
    %805 = arith.addf %804, %803 : vector<8x4x128xf32>
    %806 = arith.divf %804, %805 : vector<8x4x128xf32>
    %cst_205 = arith.constant 0.000000e+00 : f32
    %807 = vector.broadcast %cst_205 : f32 to vector<8x4x128xf32>
    %808 = arith.select %764, %806, %807 : vector<8x4x128xi1>, vector<8x4x128xf32>
    %809 = arith.select %762, %793, %808 : vector<8x4x128xi1>, vector<8x4x128xf32>
    %810 = arith.select %760, %801, %809 : vector<8x4x128xi1>, vector<8x4x128xf32>
    %811 = arith.select %755, %797, %810 : vector<8x4x128xi1>, vector<8x4x128xf32>
    %c0_206 = arith.constant 0 : index
    %c0_207 = arith.constant 0 : index
    %c0_208 = arith.constant 0 : index
    %812 = vector.load %arg6[%c0_206, %c0_207, %c0_208] : memref<8x4x128xf32, #tpu.memory_space<vmem>>, vector<8x4x128xf32>
    tpu.vector_store %arg6[%c0_206, %c0_207, %c0_208], %811 {strides = array<i32>} : memref<8x4x128xf32, #tpu.memory_space<vmem>>, vector<8x4x128xf32>,
    return
  }
}

</mosaic_0001>

<llo_original>
// kernel: tpu_custom_call.1
$region0: #{tpu_custom_call.1}
  #allocation0 [shape = 'u32[]', space=smem, size = 0x4, offset = 0x4, fixed_abs, tag = 'smem constant byte address 0x4 - core index']
  #allocation1 [shape = 'u32[72,128]{1,0:T(1,128)}', space=vmem, size = 0x9000, scoped, tag = 'internal scratch']
  %s0 = inlined_call_operand.hbm [shape: f32[2,64,128], index: 0, kind: input, shape index: {}]
  %s1 = inlined_call_operand.hbm [shape: f32[2,128], index: 1, kind: input, shape index: {}]
  %s2 = inlined_call_operand.hbm [shape: f32[32,128], index: 2, kind: input, shape index: {}]
  %s3 = inlined_call_operand.vmem [shape: f32[1,128], index: 3, kind: input, shape index: {}]
  %s4 = inlined_call_operand.hbm [shape: f32[2,4,32], index: 4, kind: input, shape index: {}]
  %s5 = inlined_call_operand.hbm [shape: f32[2,4,32], index: 5, kind: input, shape index: {}]
  %s6 = inlined_call_operand.hbm [shape: f32[8,4,128], index: 6, kind: output, shape index: {}]
  %s7 = sld [smem:[#allocation0]]
  $region54: #{tpu_custom_call.1} parent=0
    _
  %s9 = ssub.s32 1, %s7
  %s10 = scalar_select 0, %s9, %s7
  $region1: #{tpu_custom_call.1} parent=0
    #allocation2 [shape = 'u8[65536]{0}', space=vmem, size = 0x10000, scoped, tag = 'input window, operand 0, single buffered']
    #allocation3 [shape = 's32[1]{0}', space=sflag, size = 0x4, scoped, tag = 'scoped memory for tpu_custom_call.1']
    #allocation4 [shape = 's32[1]{0}', space=sflag, size = 0x4, scoped, tag = 'scoped memory for tpu_custom_call.1']
    #allocation5 [shape = 'u8[1024]{0}', space=vmem, size = 0x400, scoped, tag = 'input window, operand 1, single buffered']
    #allocation6 [shape = 's32[1]{0}', space=sflag, size = 0x4, scoped, tag = 'scoped memory for tpu_custom_call.1']
    #allocation7 [shape = 'u8[16384]{0}', space=vmem, size = 0x4000, scoped, tag = 'input window, operand 2, single buffered']
    #allocation8 [shape = 'u8[4096]{0}', space=vmem, size = 0x1000, scoped, tag = 'input window, operand 4, single buffered']
    #allocation9 [shape = 's32[1]{0}', space=sflag, size = 0x4, scoped, tag = 'scoped memory for tpu_custom_call.1']
    #allocation10 [shape = 'u8[4096]{0}', space=vmem, size = 0x1000, scoped, tag = 'input window, operand 5, single buffered']
    #allocation11 [shape = 'u8[16384]{0}', space=vmem, size = 0x4000, scoped, tag = 'output window, operand 0, single buffered']
    %11 = vsyncpa [#allocation3], 0
    %12 = vsyncpa [#allocation6], 0
    %13 = vsyncpa [#allocation9], 0
    %14 = vsyncpa [#allocation4], 0
    // Predicated region
    $region2: #{tpu_custom_call.1} parent=1 // pred_check
      _
    $region3: #{tpu_custom_call.1} parent=1 // pred_check_branch
      %16 = sbr.rel (0) target = $region5
    $region4: #{tpu_custom_call.1} parent=1 // pred_region
      %18 = vsyncadd [#allocation3], 0
      %s19 = sshll.u32 %s0, 4
      %s20 = int_to_ptr.hbm [resolvable:$true] %s19
      %s21 = sshll.u32 [#allocation2], 4
      %s22 = int_to_ptr.vmem [resolvable:$true] %s21
      %27 = dma.hbm_to_vmem [thread:$0]  %s20, 2048, %s22, [#allocation3], 128, 128, 8
    $region5: #{tpu_custom_call.1} parent=1 // pred_fallthru
      _
    // Predicated region
    $region6: #{tpu_custom_call.1} parent=1 // pred_check
      _
    $region7: #{tpu_custom_call.1} parent=1 // pred_check_branch
      %29 = sbr.rel (0) target = $region9
    $region8: #{tpu_custom_call.1} parent=1 // pred_region
      %31 = vsyncadd [#allocation6], 0
      %s33 = sshll.u32 %s1, 4
      %s34 = int_to_ptr.hbm [resolvable:$true] %s33
      %s35 = sshll.u32 [#allocation5], 4
      %s36 = int_to_ptr.vmem [resolvable:$true] %s35
      %38 = dma.hbm_to_vmem [thread:$0]  %s34, 32, %s36, [#allocation6]
    $region9: #{tpu_custom_call.1} parent=1 // pred_fallthru
      _
    // Predicated region
    $region10: #{tpu_custom_call.1} parent=1 // pred_check
      _
    $region11: #{tpu_custom_call.1} parent=1 // pred_check_branch
      %40 = sbr.rel (0) target = $region13
    $region12: #{tpu_custom_call.1} parent=1 // pred_region
      %42 = vsyncadd [#allocation6], 0
      %s43 = sshll.u32 %s2, 4
      %s44 = int_to_ptr.hbm [resolvable:$true] %s43
      %s45 = sshll.u32 [#allocation7], 4
      %s46 = int_to_ptr.vmem [resolvable:$true] %s45
      %51 = dma.hbm_to_vmem [thread:$0]  %s44, 512, %s46, [#allocation6], 128, 128, 8
    $region13: #{tpu_custom_call.1} parent=1 // pred_fallthru
      _
    // Predicated region
    $region14: #{tpu_custom_call.1} parent=1 // pred_check
      _
    $region15: #{tpu_custom_call.1} parent=1 // pred_check_branch
      %53 = sbr.rel (0) target = $region17
    $region16: #{tpu_custom_call.1} parent=1 // pred_region
      _
    $region17: #{tpu_custom_call.1} parent=1 // pred_fallthru
      _
    // Predicated region
    $region18: #{tpu_custom_call.1} parent=1 // pred_check
      _
    $region19: #{tpu_custom_call.1} parent=1 // pred_check_branch
      %55 = sbr.rel (0) target = $region21
    $region20: #{tpu_custom_call.1} parent=1 // pred_region
      %57 = vsyncadd [#allocation9], 0
      %s58 = sshll.u32 %s4, 4
      %s59 = int_to_ptr.hbm [resolvable:$true] %s58
      %s60 = sshll.u32 [#allocation8], 4
      %s61 = int_to_ptr.vmem [resolvable:$true] %s60
      %66 = dma.hbm_to_vmem [thread:$0]  %s59, 128, %s61, [#allocation9], 64, 64, 4
    $region21: #{tpu_custom_call.1} parent=1 // pred_fallthru
      _
    // Predicated region
    $region22: #{tpu_custom_call.1} parent=1 // pred_check
      _
    $region23: #{tpu_custom_call.1} parent=1 // pred_check_branch
      %68 = sbr.rel (0) target = $region25
    $region24: #{tpu_custom_call.1} parent=1 // pred_region
      %70 = vsyncadd [#allocation9], 0
      %s71 = sshll.u32 %s5, 4
      %s72 = int_to_ptr.hbm [resolvable:$true] %s71
      %s73 = sshll.u32 [#allocation10], 4
      %s74 = int_to_ptr.vmem [resolvable:$true] %s73
      %79 = dma.hbm_to_vmem [thread:$0]  %s72, 128, %s74, [#allocation9], 64, 64, 4
    $region25: #{tpu_custom_call.1} parent=1 // pred_fallthru
      _
    // Predicated region
    $region26: #{tpu_custom_call.1} parent=1 // pred_check
      _
    $region27: #{tpu_custom_call.1} parent=1 // pred_check_branch
      %81 = sbr.rel (0) target = $region29
    $region28: #{tpu_custom_call.1} parent=1 // pred_region
      %83 = dma.done [#allocation3], 2048
    $region29: #{tpu_custom_call.1} parent=1 // pred_fallthru
      _
    // Predicated region
    $region30: #{tpu_custom_call.1} parent=1 // pred_check
      _
    $region31: #{tpu_custom_call.1} parent=1 // pred_check_branch
      %85 = sbr.rel (0) target = $region33
    $region32: #{tpu_custom_call.1} parent=1 // pred_region
      %87 = dma.done [#allocation6], 32
    $region33: #{tpu_custom_call.1} parent=1 // pred_fallthru
      _
    // Predicated region
    $region34: #{tpu_custom_call.1} parent=1 // pred_check
      _
    $region35: #{tpu_custom_call.1} parent=1 // pred_check_branch
      %89 = sbr.rel (0) target = $region37
    $region36: #{tpu_custom_call.1} parent=1 // pred_region
      %91 = dma.done [#allocation6], 512
    $region37: #{tpu_custom_call.1} parent=1 // pred_fallthru
      _
    // Predicated region
    $region38: #{tpu_custom_call.1} parent=1 // pred_check
      _
    $region39: #{tpu_custom_call.1} parent=1 // pred_check_branch
      %93 = sbr.rel (0) target = $region41
    $region40: #{tpu_custom_call.1} parent=1 // pred_region
      %95 = dma.done [#allocation9], 128
    $region41: #{tpu_custom_call.1} parent=1 // pred_fallthru
      _
    // Predicated region
    $region42: #{tpu_custom_call.1} parent=1 // pred_check
      _
    $region43: #{tpu_custom_call.1} parent=1 // pred_check_branch
      %97 = sbr.rel (0) target = $region45
    $region44: #{tpu_custom_call.1} parent=1 // pred_region
      %99 = dma.done [#allocation9], 128
    $region45: #{tpu_custom_call.1} parent=1 // pred_fallthru
      _
    %v100 = vld [vmem:[#allocation2] sm:$0xff]
    %v101 = vld [vmem:[#allocation2 + $0x8] sm:$0xff]
    %v102 = vld [vmem:[#allocation2 + $0x10] sm:$0xff]
    %v103 = vld [vmem:[#allocation2 + $0x18] sm:$0xff]
    %v104 = vld [vmem:[#allocation2 + $0x20] sm:$0xff]
    %v105 = vld [vmem:[#allocation2 + $0x28] sm:$0xff]
    %v106 = vld [vmem:[#allocation2 + $0x30] sm:$0xff]
    %v107 = vld [vmem:[#allocation2 + $0x38] sm:$0xff]
    %s108 = scalar_lea.vmem [#allocation2], 64
    %v109 = vld [vmem:[%s108] sm:$0xff]
    %v110 = vld [vmem:[%s108 + $0x8] sm:$0xff]
    %v111 = vld [vmem:[%s108 + $0x10] sm:$0xff]
    %v112 = vld [vmem:[%s108 + $0x18] sm:$0xff]
    %v113 = vld [vmem:[%s108 + $0x20] sm:$0xff]
    %v114 = vld [vmem:[%s108 + $0x28] sm:$0xff]
    %v115 = vld [vmem:[%s108 + $0x30] sm:$0xff]
    %v116 = vld [vmem:[%s108 + $0x38] sm:$0xff]
    %v117 = vld [vmem:[#allocation5] sm:$0x1]
    %v118 = vld [vmem:[#allocation5 + $0x1] sm:$0x1]
    %v119 = vld [vmem:[#allocation7] sm:$0xff]
    %v120 = vld [vmem:[#allocation7 + $0x8] sm:$0xff]
    %v121 = vld [vmem:[#allocation7 + $0x10] sm:$0xff]
    %v122 = vld [vmem:[#allocation7 + $0x18] sm:$0xff]
    %v123 = vld [vmem:[%s3] sm:$0x1]
    %v124 = vlaneseq
    %v125 = vand.u32 %v124, 127
    %vm126 = vcmp.lt.s32.totalorder %v125, 6
    %vm127 = vcmp.ge.s32.totalorder %v125, 7
    %vm128 = vcmp.lt.s32.totalorder %v125, 12
    %vm129 = vmand %vm127, %vm128
    %vm130 = vcmp.eq.s32.totalorder %v125, 0
    %vm131 = vcmp.eq.s32.totalorder %v125, 7
    %vm132 = vmor %vm130, %vm131
    %v133 = vsel %vm132, 1.0, 0.0
    %v134 = vld [vmem:[#allocation8] sm:$0xf]
    %s135 = scalar_lea.vmem [#allocation8], 4
    %v136 = vld [vmem:[%s135] sm:$0xf]
    %v137 = vld [vmem:[#allocation10] sm:$0xf]
    %s138 = scalar_lea.vmem [#allocation10], 4
    %v139 = vld [vmem:[%s138] sm:$0xf]
    %141 = vrot.lane.b32.xlu0 %v134, 32
    %v142 = vpop.permute.xlu0 %141
    %vm144 = vcmask 261120
    %v145 = vsel %vm144, %v133, %v142
    %v146 = vperm.slane %v117, 0
    %vm147 = vcmask 523264
    %v149 = vsel %vm147, %v145, 0
    %151 = vmatpush.msra.mxu0 0.0
    %152 = vmatpush.msra.mxu0 0.0
    %153 = vmatpush.msra.mxu0 0.0
    %154 = vmatpush.msra.mxu0 0.0
    %155 = vmatpush.msra.mxu0 0.0
    %156 = vmatpush.msra.mxu0 0.0
    %157 = vmatpush.msra.mxu0 0.0
    %158 = vmatpush.msra.mxu0 0.0
    %159 = vmatpush.msra.mxu0 %v107
    %160 = vmatpush.msra.mxu0 %v106
    %161 = vmatpush.msra.mxu0 %v105
    %162 = vmatpush.msra.mxu0 %v104
    %163 = vmatpush.msra.mxu0 %v103
    %164 = vmatpush.msra.mxu0 %v102
    %165 = vmatpush.msra.mxu0 %v101
    %166 = vmatpush.msra.mxu0 %v100
    %167 = vmatmul.f32.gmra.mxu0 %v149
    %v168 = vpop.f32.mrf.mxu0
    %v169 = vadd.f32 %v146, %v168
    %170 = vdwg.mxu0
    %v171 = vxor.u32 %v169, 2147483648
    %v172 = vmul.f32 %v171, 1.442695
    %v173 = vpow.pop %v172
    %v174 = vadd.f32 %v173, 1.0
    %v175 = vrcp.pop %v174
    %v176 = vmul.f32 %v174, %v175
    %v177 = vsub.f32 1.0, %v176
    %v178 = vmul.f32 %v175, %v177
    %v179 = vadd.f32 %v175, %v178
    %vm180 = vweird.f32 %v174
    %vm181 = vweird.f32 %v175
    %vm182 = vmor %vm180, %vm181
    %v183 = vsel %vm182, %v175, %v179
    %v184 = vand.u32 2147483647, %v174
    %vm185 = vcmp.eq.f32.partialorder %v184, 8.507059e+37
    %v186 = vand.u32 %v174, 2147483648
    %v187 = vor.u32 1.1754944e-38, %v186
    %v188 = vsel %vm185, %v187, %v183
    %v189 = vmul.f32 1.0, %v188
    %v190 = vtanh.pop %v169
    %192 = vrot.lane.b32.xlu0 %v137, 32
    %v193 = vpop.permute.xlu0 %192
    %v195 = vmul.f32 %v189, %v193
    %197 = vrot.lane.b32.xlu0 %v190, 64
    %v198 = vpop.permute.xlu0 %197
    %v200 = vmul.f32 %v189, %v198
    %202 = vrot.lane.b32.xlu0 %v200, 32
    %v203 = vpop.permute.xlu0 %202
    %v205 = vadd.f32 %v195, %v203
    %v206 = vtanh.pop %v205
    %208 = vrot.lane.b32.xlu0 %v206, 64
    %v209 = vpop.permute.xlu0 %208
    %v211 = vmul.f32 %v189, %v209
    %213 = vrot.lane.b32.xlu0 %v211, 32
    %v214 = vpop.permute.xlu0 %213
    %217 = vrot.lane.b32.xlu0 %v136, 32
    %v218 = vpop.permute.xlu0 %217
    %v220 = vsel %vm144, %v214, %v218
    %v221 = vperm.slane %v118, 0
    %v223 = vsel %vm147, %v220, 0
    %225 = vmatpush.msra.mxu0 0.0
    %226 = vmatpush.msra.mxu0 0.0
    %227 = vmatpush.msra.mxu0 0.0
    %228 = vmatpush.msra.mxu0 0.0
    %229 = vmatpush.msra.mxu0 0.0
    %230 = vmatpush.msra.mxu0 0.0
    %231 = vmatpush.msra.mxu0 0.0
    %232 = vmatpush.msra.mxu0 0.0
    %233 = vmatpush.msra.mxu0 %v116
    %234 = vmatpush.msra.mxu0 %v115
    %235 = vmatpush.msra.mxu0 %v114
    %236 = vmatpush.msra.mxu0 %v113
    %237 = vmatpush.msra.mxu0 %v112
    %238 = vmatpush.msra.mxu0 %v111
    %239 = vmatpush.msra.mxu0 %v110
    %240 = vmatpush.msra.mxu0 %v109
    %241 = vmatmul.f32.gmra.mxu0 %v223
    %v242 = vpop.f32.mrf.mxu0
    %v243 = vadd.f32 %v221, %v242
    %244 = vdwg.mxu0
    %v245 = vxor.u32 %v243, 2147483648
    %v246 = vmul.f32 %v245, 1.442695
    %v247 = vpow.pop %v246
    %v248 = vadd.f32 %v247, 1.0
    %v249 = vrcp.pop %v248
    %v250 = vmul.f32 %v248, %v249
    %v251 = vsub.f32 1.0, %v250
    %v252 = vmul.f32 %v249, %v251
    %v253 = vadd.f32 %v249, %v252
    %vm254 = vweird.f32 %v248
    %vm255 = vweird.f32 %v249
    %vm256 = vmor %vm254, %vm255
    %v257 = vsel %vm256, %v249, %v253
    %v258 = vand.u32 2147483647, %v248
    %vm259 = vcmp.eq.f32.partialorder %v258, 8.507059e+37
    %v260 = vand.u32 %v248, 2147483648
    %v261 = vor.u32 1.1754944e-38, %v260
    %v262 = vsel %vm259, %v261, %v257
    %v263 = vmul.f32 1.0, %v262
    %v264 = vtanh.pop %v243
    %266 = vrot.lane.b32.xlu0 %v139, 32
    %v267 = vpop.permute.xlu0 %266
    %v269 = vmul.f32 %v263, %v267
    %271 = vrot.lane.b32.xlu0 %v264, 64
    %v272 = vpop.permute.xlu0 %271
    %v274 = vmul.f32 %v263, %v272
    %276 = vrot.lane.b32.xlu0 %v274, 32
    %v277 = vpop.permute.xlu0 %276
    %v279 = vadd.f32 %v269, %v277
    %v280 = vtanh.pop %v279
    %282 = vrot.lane.b32.xlu0 %v280, 64
    %v283 = vpop.permute.xlu0 %282
    %v285 = vmul.f32 %v263, %v283
    %v287 = vperm.slane %v123, 0
    %290 = vrot.lane.b32.xlu0 %v285, 32
    %v291 = vpop.permute.xlu0 %290
    %v292 = vsel %vm144, %v291, 0
    %294 = vmatpush.msra.mxu0 0.0
    %295 = vmatpush.msra.mxu0 0.0
    %296 = vmatpush.msra.mxu0 0.0
    %297 = vmatpush.msra.mxu0 0.0
    %298 = vmatpush.msra.mxu0 0.0
    %299 = vmatpush.msra.mxu0 0.0
    %300 = vmatpush.msra.mxu0 0.0
    %301 = vmatpush.msra.mxu0 0.0
    %302 = vmatpush.msra.mxu0 0.0
    %303 = vmatpush.msra.mxu0 0.0
    %304 = vmatpush.msra.mxu0 0.0
    %305 = vmatpush.msra.mxu0 0.0
    %306 = vmatpush.msra.mxu0 %v122
    %307 = vmatpush.msra.mxu0 %v121
    %308 = vmatpush.msra.mxu0 %v120
    %309 = vmatpush.msra.mxu0 %v119
    %310 = vmatmul.f32.gmra.mxu0 %v292
    %v311 = vpop.f32.mrf.mxu0
    %v312 = vadd.f32 %v287, %v311
    %313 = vdwg.mxu0
    %314 = vst [vmem:[#allocation11] sm:$0xf] %v312
    %v315 = vsel %vm126, %v312, -inf
    %vm316 = vcmask 257024
    %v317 = vsel %vm316, %v315, -inf
    %318 = vmax.xlane.f32.xlu0 %v317
    %v319 = vpop.xlane.xlu0 %318
    %vm320 = vcmp.eq.f32.partialorder %v315, %v319
    %vm321 = vmand %vm320, %vm126
    %v322 = vsel %vm321, %v125, 32
    %v323 = vsel %vm316, %v322, 2147483647
    %v324 = vand.u32 %v323, 65535
    %v325 = vshra.s32 %v323, 16
    %v326 = vcvt.s32.f32 %v324
    %v327 = vcvt.s32.f32 %v325
    %328 = vmin.xlane.f32.xlu0 %v327
    %v329 = vpop.xlane.xlu0 %328
    %vm330 = vcmp.eq.f32.partialorder %v327, %v329
    %v331 = vsel %vm330, %v326, inf
    %332 = vmin.xlane.f32.xlu0 %v331
    %v333 = vpop.xlane.xlu0 %332
    %v334 = vcvt.f32.s32 %v333
    %v335 = vcvt.f32.s32 %v329
    %v336 = vshll.u32 %v335, 16
    %v337 = vadd.s32 %v336, %v334
    %v338 = vsel %vm129, %v312, -inf
    %v339 = vsel %vm316, %v338, -inf
    %340 = vmax.xlane.f32.xlu0 %v339
    %v341 = vpop.xlane.xlu0 %340
    %vm342 = vcmp.eq.f32.partialorder %v338, %v341
    %vm343 = vmand %vm342, %vm129
    %v344 = vsel %vm343, %v125, 32
    %v345 = vsel %vm316, %v344, 2147483647
    %v346 = vand.u32 %v345, 65535
    %v347 = vshra.s32 %v345, 16
    %v348 = vcvt.s32.f32 %v346
    %v349 = vcvt.s32.f32 %v347
    %350 = vmin.xlane.f32.xlu0 %v349
    %v351 = vpop.xlane.xlu0 %350
    %vm352 = vcmp.eq.f32.partialorder %v349, %v351
    %v353 = vsel %vm352, %v348, inf
    %354 = vmin.xlane.f32.xlu0 %v353
    %v355 = vpop.xlane.xlu0 %354
    %v356 = vcvt.f32.s32 %v355
    %v357 = vcvt.f32.s32 %v351
    %v358 = vshll.u32 %v357, 16
    %v359 = vadd.s32 %v358, %v356
    %v360 = vxor.u32 %v312, 2147483648
    %v361 = vmul.f32 %v360, 1.442695
    %v362 = vpow.pop %v361
    %v363 = vadd.f32 %v362, 1.0
    %v364 = vrcp.pop %v363
    %v365 = vmul.f32 %v363, %v364
    %v366 = vsub.f32 1.0, %v365
    %v367 = vmul.f32 %v364, %v366
    %v368 = vadd.f32 %v364, %v367
    %vm369 = vweird.f32 %v363
    %vm370 = vweird.f32 %v364
    %vm371 = vmor %vm369, %vm370
    %v372 = vsel %vm371, %v364, %v368
    %v373 = vand.u32 2147483647, %v363
    %vm374 = vcmp.eq.f32.partialorder %v373, 8.507059e+37
    %v375 = vand.u32 %v363, 2147483648
    %v376 = vor.u32 1.1754944e-38, %v375
    %v377 = vsel %vm374, %v376, %v372
    %v378 = vmul.f32 1.0, %v377
    %vm379 = vcmp.eq.s32.totalorder %v125, %v337
    %vm380 = vcmp.eq.s32.totalorder %v125, %v359
    %vm381 = vmor %vm379, %vm380
    %vm382 = vcmp.eq.s32.totalorder %v125, 6
    %vm383 = vmor %vm381, %vm382
    %v384 = vsel %vm383, 1.0, 0.0
    %vm385 = vcmp.eq.s32.totalorder %v125, 12
    %387 = vset.pattern.permute.xlu0 12
    %388 = vperm.xlu0 %387, %v378
    %v389 = vpop.permute.xlu0 %388
    %v391 = vsel %vm385, %v389, %v384
    %392 = vrot.lane.b32.xlu0 %v211, 64
    %v393 = vpop.permute.xlu0 %392
    %v395 = vsel %vm144, %v391, %v393
    %v397 = vsel %vm147, %v395, 0
    %399 = vmatpush.msra.mxu0 0.0
    %400 = vmatpush.msra.mxu0 0.0
    %401 = vmatpush.msra.mxu0 0.0
    %402 = vmatpush.msra.mxu0 0.0
    %403 = vmatpush.msra.mxu0 0.0
    %404 = vmatpush.msra.mxu0 0.0
    %405 = vmatpush.msra.mxu0 0.0
    %406 = vmatpush.msra.mxu0 0.0
    %407 = vmatpush.msra.mxu0 %v107
    %408 = vmatpush.msra.mxu0 %v106
    %409 = vmatpush.msra.mxu0 %v105
    %410 = vmatpush.msra.mxu0 %v104
    %411 = vmatpush.msra.mxu0 %v103
    %412 = vmatpush.msra.mxu0 %v102
    %413 = vmatpush.msra.mxu0 %v101
    %414 = vmatpush.msra.mxu0 %v100
    %415 = vmatmul.f32.gmra.mxu0 %v397
    %v416 = vpop.f32.mrf.mxu0
    %v417 = vadd.f32 %v146, %v416
    %418 = vdwg.mxu0
    %v419 = vxor.u32 %v417, 2147483648
    %v420 = vmul.f32 %v419, 1.442695
    %v421 = vpow.pop %v420
    %v422 = vadd.f32 %v421, 1.0
    %v423 = vrcp.pop %v422
    %v424 = vmul.f32 %v422, %v423
    %v425 = vsub.f32 1.0, %v424
    %v426 = vmul.f32 %v423, %v425
    %v427 = vadd.f32 %v423, %v426
    %vm428 = vweird.f32 %v422
    %vm429 = vweird.f32 %v423
    %vm430 = vmor %vm428, %vm429
    %v431 = vsel %vm430, %v423, %v427
    %v432 = vand.u32 2147483647, %v422
    %vm433 = vcmp.eq.f32.partialorder %v432, 8.507059e+37
    %v434 = vand.u32 %v422, 2147483648
    %v435 = vor.u32 1.1754944e-38, %v434
    %v436 = vsel %vm433, %v435, %v431
    %v437 = vmul.f32 1.0, %v436
    %v438 = vtanh.pop %v417
    %v439 = vmul.f32 %v437, %v205
    %441 = vrot.lane.b32.xlu0 %v438, 64
    %v442 = vpop.permute.xlu0 %441
    %v444 = vmul.f32 %v437, %v442
    %446 = vrot.lane.b32.xlu0 %v444, 32
    %v447 = vpop.permute.xlu0 %446
    %v449 = vadd.f32 %v439, %v447
    %v450 = vtanh.pop %v449
    %452 = vrot.lane.b32.xlu0 %v450, 64
    %v453 = vpop.permute.xlu0 %452
    %v455 = vmul.f32 %v437, %v453
    %457 = vrot.lane.b32.xlu0 %v455, 32
    %v458 = vpop.permute.xlu0 %457
    %460 = vrot.lane.b32.xlu0 %v285, 64
    %v461 = vpop.permute.xlu0 %460
    %v463 = vsel %vm144, %v458, %v461
    %v465 = vsel %vm147, %v463, 0
    %467 = vmatpush.msra.mxu0 0.0
    %468 = vmatpush.msra.mxu0 0.0
    %469 = vmatpush.msra.mxu0 0.0
    %470 = vmatpush.msra.mxu0 0.0
    %471 = vmatpush.msra.mxu0 0.0
    %472 = vmatpush.msra.mxu0 0.0
    %473 = vmatpush.msra.mxu0 0.0
    %474 = vmatpush.msra.mxu0 0.0
    %475 = vmatpush.msra.mxu0 %v116
    %476 = vmatpush.msra.mxu0 %v115
    %477 = vmatpush.msra.mxu0 %v114
    %478 = vmatpush.msra.mxu0 %v113
    %479 = vmatpush.msra.mxu0 %v112
    %480 = vmatpush.msra.mxu0 %v111
    %481 = vmatpush.msra.mxu0 %v110
    %482 = vmatpush.msra.mxu0 %v109
    %483 = vmatmul.f32.gmra.mxu0 %v465
    %v484 = vpop.f32.mrf.mxu0
    %v485 = vadd.f32 %v221, %v484
    %486 = vdwg.mxu0
    %v487 = vxor.u32 %v485, 2147483648
    %v488 = vmul.f32 %v487, 1.442695
    %v489 = vpow.pop %v488
    %v490 = vadd.f32 %v489, 1.0
    %v491 = vrcp.pop %v490
    %v492 = vmul.f32 %v490, %v491
    %v493 = vsub.f32 1.0, %v492
    %v494 = vmul.f32 %v491, %v493
    %v495 = vadd.f32 %v491, %v494
    %vm496 = vweird.f32 %v490
    %vm497 = vweird.f32 %v491
    %vm498 = vmor %vm496, %vm497
    %v499 = vsel %vm498, %v491, %v495
    %v500 = vand.u32 2147483647, %v490
    %vm501 = vcmp.eq.f32.partialorder %v500, 8.507059e+37
    %v502 = vand.u32 %v490, 2147483648
    %v503 = vor.u32 1.1754944e-38, %v502
    %v504 = vsel %vm501, %v503, %v499
    %v505 = vmul.f32 1.0, %v504
    %v506 = vtanh.pop %v485
    %v507 = vmul.f32 %v505, %v279
    %509 = vrot.lane.b32.xlu0 %v506, 64
    %v510 = vpop.permute.xlu0 %509
    %v512 = vmul.f32 %v505, %v510
    %514 = vrot.lane.b32.xlu0 %v512, 32
    %v515 = vpop.permute.xlu0 %514
    %v517 = vadd.f32 %v507, %v515
    %v518 = vtanh.pop %v517
    %520 = vrot.lane.b32.xlu0 %v518, 64
    %v521 = vpop.permute.xlu0 %520
    %v523 = vmul.f32 %v505, %v521
    %525 = vrot.lane.b32.xlu0 %v523, 32
    %v526 = vpop.permute.xlu0 %525
    %v527 = vsel %vm144, %v526, 0
    %529 = vmatpush.msra.mxu0 0.0
    %530 = vmatpush.msra.mxu0 0.0
    %531 = vmatpush.msra.mxu0 0.0
    %532 = vmatpush.msra.mxu0 0.0
    %533 = vmatpush.msra.mxu0 0.0
    %534 = vmatpush.msra.mxu0 0.0
    %535 = vmatpush.msra.mxu0 0.0
    %536 = vmatpush.msra.mxu0 0.0
    %537 = vmatpush.msra.mxu0 0.0
    %538 = vmatpush.msra.mxu0 0.0
    %539 = vmatpush.msra.mxu0 0.0
    %540 = vmatpush.msra.mxu0 0.0
    %541 = vmatpush.msra.mxu0 %v122
    %542 = vmatpush.msra.mxu0 %v121
    %543 = vmatpush.msra.mxu0 %v120
    %544 = vmatpush.msra.mxu0 %v119
    %545 = vmatmul.f32.gmra.mxu0 %v527
    %v546 = vpop.f32.mrf.mxu0
    %v547 = vadd.f32 %v287, %v546
    %548 = vdwg.mxu0
    %s549 = scalar_lea.vmem [#allocation11], 4
    %550 = vst [vmem:[%s549] sm:$0xf] %v547
    %v551 = vsel %vm126, %v547, -inf
    %v552 = vsel %vm316, %v551, -inf
    %553 = vmax.xlane.f32.xlu0 %v552
    %v554 = vpop.xlane.xlu0 %553
    %vm555 = vcmp.eq.f32.partialorder %v551, %v554
    %vm556 = vmand %vm555, %vm126
    %v557 = vsel %vm556, %v125, 32
    %v558 = vsel %vm316, %v557, 2147483647
    %v559 = vand.u32 %v558, 65535
    %v560 = vshra.s32 %v558, 16
    %v561 = vcvt.s32.f32 %v559
    %v562 = vcvt.s32.f32 %v560
    %563 = vmin.xlane.f32.xlu0 %v562
    %v564 = vpop.xlane.xlu0 %563
    %vm565 = vcmp.eq.f32.partialorder %v562, %v564
    %v566 = vsel %vm565, %v561, inf
    %567 = vmin.xlane.f32.xlu0 %v566
    %v568 = vpop.xlane.xlu0 %567
    %v569 = vcvt.f32.s32 %v568
    %v570 = vcvt.f32.s32 %v564
    %v571 = vshll.u32 %v570, 16
    %v572 = vadd.s32 %v571, %v569
    %v573 = vsel %vm129, %v547, -inf
    %v574 = vsel %vm316, %v573, -inf
    %575 = vmax.xlane.f32.xlu0 %v574
    %v576 = vpop.xlane.xlu0 %575
    %vm577 = vcmp.eq.f32.partialorder %v573, %v576
    %vm578 = vmand %vm577, %vm129
    %v579 = vsel %vm578, %v125, 32
    %v580 = vsel %vm316, %v579, 2147483647
    %v581 = vand.u32 %v580, 65535
    %v582 = vshra.s32 %v580, 16
    %v583 = vcvt.s32.f32 %v581
    %v584 = vcvt.s32.f32 %v582
    %585 = vmin.xlane.f32.xlu0 %v584
    %v586 = vpop.xlane.xlu0 %585
    %vm587 = vcmp.eq.f32.partialorder %v584, %v586
    %v588 = vsel %vm587, %v583, inf
    %589 = vmin.xlane.f32.xlu0 %v588
    %v590 = vpop.xlane.xlu0 %589
    %v591 = vcvt.f32.s32 %v590
    %v592 = vcvt.f32.s32 %v586
    %v593 = vshll.u32 %v592, 16
    %v594 = vadd.s32 %v593, %v591
    %v595 = vxor.u32 %v547, 2147483648
    %v596 = vmul.f32 %v595, 1.442695
    %v597 = vpow.pop %v596
    %v598 = vadd.f32 %v597, 1.0
    %v599 = vrcp.pop %v598
    %v600 = vmul.f32 %v598, %v599
    %v601 = vsub.f32 1.0, %v600
    %v602 = vmul.f32 %v599, %v601
    %v603 = vadd.f32 %v599, %v602
    %vm604 = vweird.f32 %v598
    %vm605 = vweird.f32 %v599
    %vm606 = vmor %vm604, %vm605
    %v607 = vsel %vm606, %v599, %v603
    %v608 = vand.u32 2147483647, %v598
    %vm609 = vcmp.eq.f32.partialorder %v608, 8.507059e+37
    %v610 = vand.u32 %v598, 2147483648
    %v611 = vor.u32 1.1754944e-38, %v610
    %v612 = vsel %vm609, %v611, %v607
    %v613 = vmul.f32 1.0, %v612
    %vm614 = vcmp.eq.s32.totalorder %v125, %v572
    %vm615 = vcmp.eq.s32.totalorder %v125, %v594
    %vm616 = vmor %vm614, %vm615
    %vm617 = vmor %vm616, %vm382
    %v618 = vsel %vm617, 1.0, 0.0
    %620 = vset.pattern.permute.xlu0 12
    %621 = vperm.xlu0 %620, %v613
    %v622 = vpop.permute.xlu0 %621
    %v624 = vsel %vm385, %v622, %v618
    %625 = vrot.lane.b32.xlu0 %v455, 64
    %v626 = vpop.permute.xlu0 %625
    %v628 = vsel %vm144, %v624, %v626
    %v630 = vsel %vm147, %v628, 0
    %632 = vmatpush.msra.mxu0 0.0
    %633 = vmatpush.msra.mxu0 0.0
    %634 = vmatpush.msra.mxu0 0.0
    %635 = vmatpush.msra.mxu0 0.0
    %636 = vmatpush.msra.mxu0 0.0
    %637 = vmatpush.msra.mxu0 0.0
    %638 = vmatpush.msra.mxu0 0.0
    %639 = vmatpush.msra.mxu0 0.0
    %640 = vmatpush.msra.mxu0 %v107
    %641 = vmatpush.msra.mxu0 %v106
    %642 = vmatpush.msra.mxu0 %v105
    %643 = vmatpush.msra.mxu0 %v104
    %644 = vmatpush.msra.mxu0 %v103
    %645 = vmatpush.msra.mxu0 %v102
    %646 = vmatpush.msra.mxu0 %v101
    %647 = vmatpush.msra.mxu0 %v100
    %648 = vmatmul.f32.gmra.mxu0 %v630
    %v649 = vpop.f32.mrf.mxu0
    %v650 = vadd.f32 %v146, %v649
    %651 = vdwg.mxu0
    %v652 = vxor.u32 %v650, 2147483648
    %v653 = vmul.f32 %v652, 1.442695
    %v654 = vpow.pop %v653
    %v655 = vadd.f32 %v654, 1.0
    %v656 = vrcp.pop %v655
    %v657 = vmul.f32 %v655, %v656
    %v658 = vsub.f32 1.0, %v657
    %v659 = vmul.f32 %v656, %v658
    %v660 = vadd.f32 %v656, %v659
    %vm661 = vweird.f32 %v655
    %vm662 = vweird.f32 %v656
    %vm663 = vmor %vm661, %vm662
    %v664 = vsel %vm663, %v656, %v660
    %v665 = vand.u32 2147483647, %v655
    %vm666 = vcmp.eq.f32.partialorder %v665, 8.507059e+37
    %v667 = vand.u32 %v655, 2147483648
    %v668 = vor.u32 1.1754944e-38, %v667
    %v669 = vsel %vm666, %v668, %v664
    %v670 = vmul.f32 1.0, %v669
    %v671 = vtanh.pop %v650
    %v672 = vmul.f32 %v670, %v449
    %674 = vrot.lane.b32.xlu0 %v671, 64
    %v675 = vpop.permute.xlu0 %674
    %v677 = vmul.f32 %v670, %v675
    %679 = vrot.lane.b32.xlu0 %v677, 32
    %v680 = vpop.permute.xlu0 %679
    %v682 = vadd.f32 %v672, %v680
    %v683 = vtanh.pop %v682
    %685 = vrot.lane.b32.xlu0 %v683, 64
    %v686 = vpop.permute.xlu0 %685
    %v688 = vmul.f32 %v670, %v686
    %690 = vrot.lane.b32.xlu0 %v688, 32
    %v691 = vpop.permute.xlu0 %690
    %693 = vrot.lane.b32.xlu0 %v523, 64
    %v694 = vpop.permute.xlu0 %693
    %v696 = vsel %vm144, %v691, %v694
    %v698 = vsel %vm147, %v696, 0
    %700 = vmatpush.msra.mxu0 0.0
    %701 = vmatpush.msra.mxu0 0.0
    %702 = vmatpush.msra.mxu0 0.0
    %703 = vmatpush.msra.mxu0 0.0
    %704 = vmatpush.msra.mxu0 0.0
    %705 = vmatpush.msra.mxu0 0.0
    %706 = vmatpush.msra.mxu0 0.0
    %707 = vmatpush.msra.mxu0 0.0
    %708 = vmatpush.msra.mxu0 %v116
    %709 = vmatpush.msra.mxu0 %v115
    %710 = vmatpush.msra.mxu0 %v114
    %711 = vmatpush.msra.mxu0 %v113
    %712 = vmatpush.msra.mxu0 %v112
    %713 = vmatpush.msra.mxu0 %v111
    %714 = vmatpush.msra.mxu0 %v110
    %715 = vmatpush.msra.mxu0 %v109
    %716 = vmatmul.f32.gmra.mxu0 %v698
    %v717 = vpop.f32.mrf.mxu0
    %v718 = vadd.f32 %v221, %v717
    %719 = vdwg.mxu0
    %v720 = vxor.u32 %v718, 2147483648
    %v721 = vmul.f32 %v720, 1.442695
    %v722 = vpow.pop %v721
    %v723 = vadd.f32 %v722, 1.0
    %v724 = vrcp.pop %v723
    %v725 = vmul.f32 %v723, %v724
    %v726 = vsub.f32 1.0, %v725
    %v727 = vmul.f32 %v724, %v726
    %v728 = vadd.f32 %v724, %v727
    %vm729 = vweird.f32 %v723
    %vm730 = vweird.f32 %v724
    %vm731 = vmor %vm729, %vm730
    %v732 = vsel %vm731, %v724, %v728
    %v733 = vand.u32 2147483647, %v723
    %vm734 = vcmp.eq.f32.partialorder %v733, 8.507059e+37
    %v735 = vand.u32 %v723, 2147483648
    %v736 = vor.u32 1.1754944e-38, %v735
    %v737 = vsel %vm734, %v736, %v732
    %v738 = vmul.f32 1.0, %v737
    %v739 = vtanh.pop %v718
    %v740 = vmul.f32 %v738, %v517
    %742 = vrot.lane.b32.xlu0 %v739, 64
    %v743 = vpop.permute.xlu0 %742
    %v745 = vmul.f32 %v738, %v743
    %747 = vrot.lane.b32.xlu0 %v745, 32
    %v748 = vpop.permute.xlu0 %747
    %v750 = vadd.f32 %v740, %v748
    %v751 = vtanh.pop %v750
    %753 = vrot.lane.b32.xlu0 %v751, 64
    %v754 = vpop.permute.xlu0 %753
    %v756 = vmul.f32 %v738, %v754
    %758 = vrot.lane.b32.xlu0 %v756, 32
    %v759 = vpop.permute.xlu0 %758
    %v760 = vsel %vm144, %v759, 0
    %762 = vmatpush.msra.mxu0 0.0
    %763 = vmatpush.msra.mxu0 0.0
    %764 = vmatpush.msra.mxu0 0.0
    %765 = vmatpush.msra.mxu0 0.0
    %766 = vmatpush.msra.mxu0 0.0
    %767 = vmatpush.msra.mxu0 0.0
    %768 = vmatpush.msra.mxu0 0.0
    %769 = vmatpush.msra.mxu0 0.0
    %770 = vmatpush.msra.mxu0 0.0
    %771 = vmatpush.msra.mxu0 0.0
    %772 = vmatpush.msra.mxu0 0.0
    %773 = vmatpush.msra.mxu0 0.0
    %774 = vmatpush.msra.mxu0 %v122
    %775 = vmatpush.msra.mxu0 %v121
    %776 = vmatpush.msra.mxu0 %v120
    %777 = vmatpush.msra.mxu0 %v119
    %778 = vmatmul.f32.gmra.mxu0 %v760
    %v779 = vpop.f32.mrf.mxu0
    %v780 = vadd.f32 %v287, %v779
    %781 = vdwg.mxu0
    %s782 = scalar_lea.vmem [#allocation11], 8
    %783 = vst [vmem:[%s782] sm:$0xf] %v780
    %v784 = vsel %vm126, %v780, -inf
    %v785 = vsel %vm316, %v784, -inf
    %786 = vmax.xlane.f32.xlu0 %v785
    %v787 = vpop.xlane.xlu0 %786
    %vm788 = vcmp.eq.f32.partialorder %v784, %v787
    %vm789 = vmand %vm788, %vm126
    %v790 = vsel %vm789, %v125, 32
    %v791 = vsel %vm316, %v790, 2147483647
    %v792 = vand.u32 %v791, 65535
    %v793 = vshra.s32 %v791, 16
    %v794 = vcvt.s32.f32 %v792
    %v795 = vcvt.s32.f32 %v793
    %796 = vmin.xlane.f32.xlu0 %v795
    %v797 = vpop.xlane.xlu0 %796
    %vm798 = vcmp.eq.f32.partialorder %v795, %v797
    %v799 = vsel %vm798, %v794, inf
    %800 = vmin.xlane.f32.xlu0 %v799
    %v801 = vpop.xlane.xlu0 %800
    %v802 = vcvt.f32.s32 %v801
    %v803 = vcvt.f32.s32 %v797
    %v804 = vshll.u32 %v803, 16
    %v805 = vadd.s32 %v804, %v802
    %v806 = vsel %vm129, %v780, -inf
    %v807 = vsel %vm316, %v806, -inf
    %808 = vmax.xlane.f32.xlu0 %v807
    %v809 = vpop.xlane.xlu0 %808
    %vm810 = vcmp.eq.f32.partialorder %v806, %v809
    %vm811 = vmand %vm810, %vm129
    %v812 = vsel %vm811, %v125, 32
    %v813 = vsel %vm316, %v812, 2147483647
    %v814 = vand.u32 %v813, 65535
    %v815 = vshra.s32 %v813, 16
    %v816 = vcvt.s32.f32 %v814
    %v817 = vcvt.s32.f32 %v815
    %818 = vmin.xlane.f32.xlu0 %v817
    %v819 = vpop.xlane.xlu0 %818
    %vm820 = vcmp.eq.f32.partialorder %v817, %v819
    %v821 = vsel %vm820, %v816, inf
    %822 = vmin.xlane.f32.xlu0 %v821
    %v823 = vpop.xlane.xlu0 %822
    %v824 = vcvt.f32.s32 %v823
    %v825 = vcvt.f32.s32 %v819
    %v826 = vshll.u32 %v825, 16
    %v827 = vadd.s32 %v826, %v824
    %v828 = vxor.u32 %v780, 2147483648
    %v829 = vmul.f32 %v828, 1.442695
    %v830 = vpow.pop %v829
    %v831 = vadd.f32 %v830, 1.0
    %v832 = vrcp.pop %v831
    %v833 = vmul.f32 %v831, %v832
    %v834 = vsub.f32 1.0, %v833
    %v835 = vmul.f32 %v832, %v834
    %v836 = vadd.f32 %v832, %v835
    %vm837 = vweird.f32 %v831
    %vm838 = vweird.f32 %v832
    %vm839 = vmor %vm837, %vm838
    %v840 = vsel %vm839, %v832, %v836
    %v841 = vand.u32 2147483647, %v831
    %vm842 = vcmp.eq.f32.partialorder %v841, 8.507059e+37
    %v843 = vand.u32 %v831, 2147483648
    %v844 = vor.u32 1.1754944e-38, %v843
    %v845 = vsel %vm842, %v844, %v840
    %v846 = vmul.f32 1.0, %v845
    %vm847 = vcmp.eq.s32.totalorder %v125, %v805
    %vm848 = vcmp.eq.s32.totalorder %v125, %v827
    %vm849 = vmor %vm847, %vm848
    %vm850 = vmor %vm849, %vm382
    %v851 = vsel %vm850, 1.0, 0.0
    %853 = vset.pattern.permute.xlu0 12
    %854 = vperm.xlu0 %853, %v846
    %v855 = vpop.permute.xlu0 %854
    %v857 = vsel %vm385, %v855, %v851
    %858 = vrot.lane.b32.xlu0 %v688, 64
    %v859 = vpop.permute.xlu0 %858
    %v861 = vsel %vm144, %v857, %v859
    %v863 = vsel %vm147, %v861, 0
    %865 = vmatpush.msra.mxu0 0.0
    %866 = vmatpush.msra.mxu0 0.0
    %867 = vmatpush.msra.mxu0 0.0
    %868 = vmatpush.msra.mxu0 0.0
    %869 = vmatpush.msra.mxu0 0.0
    %870 = vmatpush.msra.mxu0 0.0
    %871 = vmatpush.msra.mxu0 0.0
    %872 = vmatpush.msra.mxu0 0.0
    %873 = vmatpush.msra.mxu0 %v107
    %874 = vmatpush.msra.mxu0 %v106
    %875 = vmatpush.msra.mxu0 %v105
    %876 = vmatpush.msra.mxu0 %v104
    %877 = vmatpush.msra.mxu0 %v103
    %878 = vmatpush.msra.mxu0 %v102
    %879 = vmatpush.msra.mxu0 %v101
    %880 = vmatpush.msra.mxu0 %v100
    %881 = vmatmul.f32.gmra.mxu0 %v863
    %v882 = vpop.f32.mrf.mxu0
    %v883 = vadd.f32 %v146, %v882
    %884 = vdwg.mxu0
    %v885 = vxor.u32 %v883, 2147483648
    %v886 = vmul.f32 %v885, 1.442695
    %v887 = vpow.pop %v886
    %v888 = vadd.f32 %v887, 1.0
    %v889 = vrcp.pop %v888
    %v890 = vmul.f32 %v888, %v889
    %v891 = vsub.f32 1.0, %v890
    %v892 = vmul.f32 %v889, %v891
    %v893 = vadd.f32 %v889, %v892
    %vm894 = vweird.f32 %v888
    %vm895 = vweird.f32 %v889
    %vm896 = vmor %vm894, %vm895
    %v897 = vsel %vm896, %v889, %v893
    %v898 = vand.u32 2147483647, %v888
    %vm899 = vcmp.eq.f32.partialorder %v898, 8.507059e+37
    %v900 = vand.u32 %v888, 2147483648
    %v901 = vor.u32 1.1754944e-38, %v900
    %v902 = vsel %vm899, %v901, %v897
    %v903 = vmul.f32 1.0, %v902
    %v904 = vtanh.pop %v883
    %v905 = vmul.f32 %v903, %v682
    %907 = vrot.lane.b32.xlu0 %v904, 64
    %v908 = vpop.permute.xlu0 %907
    %v910 = vmul.f32 %v903, %v908
    %912 = vrot.lane.b32.xlu0 %v910, 32
    %v913 = vpop.permute.xlu0 %912
    %v915 = vadd.f32 %v905, %v913
    %v916 = vtanh.pop %v915
    %918 = vrot.lane.b32.xlu0 %v916, 64
    %v919 = vpop.permute.xlu0 %918
    %v921 = vmul.f32 %v903, %v919
    %923 = vrot.lane.b32.xlu0 %v921, 32
    %v924 = vpop.permute.xlu0 %923
    %926 = vrot.lane.b32.xlu0 %v756, 64
    %v927 = vpop.permute.xlu0 %926
    %v929 = vsel %vm144, %v924, %v927
    %v931 = vsel %vm147, %v929, 0
    %933 = vmatpush.msra.mxu0 0.0
    %934 = vmatpush.msra.mxu0 0.0
    %935 = vmatpush.msra.mxu0 0.0
    %936 = vmatpush.msra.mxu0 0.0
    %937 = vmatpush.msra.mxu0 0.0
    %938 = vmatpush.msra.mxu0 0.0
    %939 = vmatpush.msra.mxu0 0.0
    %940 = vmatpush.msra.mxu0 0.0
    %941 = vmatpush.msra.mxu0 %v116
    %942 = vmatpush.msra.mxu0 %v115
    %943 = vmatpush.msra.mxu0 %v114
    %944 = vmatpush.msra.mxu0 %v113
    %945 = vmatpush.msra.mxu0 %v112
    %946 = vmatpush.msra.mxu0 %v111
    %947 = vmatpush.msra.mxu0 %v110
    %948 = vmatpush.msra.mxu0 %v109
    %949 = vmatmul.f32.gmra.mxu0 %v931
    %v950 = vpop.f32.mrf.mxu0
    %v951 = vadd.f32 %v221, %v950
    %952 = vdwg.mxu0
    %v953 = vxor.u32 %v951, 2147483648
    %v954 = vmul.f32 %v953, 1.442695
    %v955 = vpow.pop %v954
    %v956 = vadd.f32 %v955, 1.0
    %v957 = vrcp.pop %v956
    %v958 = vmul.f32 %v956, %v957
    %v959 = vsub.f32 1.0, %v958
    %v960 = vmul.f32 %v957, %v959
    %v961 = vadd.f32 %v957, %v960
    %vm962 = vweird.f32 %v956
    %vm963 = vweird.f32 %v957
    %vm964 = vmor %vm962, %vm963
    %v965 = vsel %vm964, %v957, %v961
    %v966 = vand.u32 2147483647, %v956
    %vm967 = vcmp.eq.f32.partialorder %v966, 8.507059e+37
    %v968 = vand.u32 %v956, 2147483648
    %v969 = vor.u32 1.1754944e-38, %v968
    %v970 = vsel %vm967, %v969, %v965
    %v971 = vmul.f32 1.0, %v970
    %v972 = vtanh.pop %v951
    %v973 = vmul.f32 %v971, %v750
    %975 = vrot.lane.b32.xlu0 %v972, 64
    %v976 = vpop.permute.xlu0 %975
    %v978 = vmul.f32 %v971, %v976
    %980 = vrot.lane.b32.xlu0 %v978, 32
    %v981 = vpop.permute.xlu0 %980
    %v983 = vadd.f32 %v973, %v981
    %v984 = vtanh.pop %v983
    %986 = vrot.lane.b32.xlu0 %v984, 64
    %v987 = vpop.permute.xlu0 %986
    %v989 = vmul.f32 %v971, %v987
    %991 = vrot.lane.b32.xlu0 %v989, 32
    %v992 = vpop.permute.xlu0 %991
    %v993 = vsel %vm144, %v992, 0
    %995 = vmatpush.msra.mxu0 0.0
    %996 = vmatpush.msra.mxu0 0.0
    %997 = vmatpush.msra.mxu0 0.0
    %998 = vmatpush.msra.mxu0 0.0
    %999 = vmatpush.msra.mxu0 0.0
    %1000 = vmatpush.msra.mxu0 0.0
    %1001 = vmatpush.msra.mxu0 0.0
    %1002 = vmatpush.msra.mxu0 0.0
    %1003 = vmatpush.msra.mxu0 0.0
    %1004 = vmatpush.msra.mxu0 0.0
    %1005 = vmatpush.msra.mxu0 0.0
    %1006 = vmatpush.msra.mxu0 0.0
    %1007 = vmatpush.msra.mxu0 %v122
    %1008 = vmatpush.msra.mxu0 %v121
    %1009 = vmatpush.msra.mxu0 %v120
    %1010 = vmatpush.msra.mxu0 %v119
    %1011 = vmatmul.f32.gmra.mxu0 %v993
    %v1012 = vpop.f32.mrf.mxu0
    %v1013 = vadd.f32 %v287, %v1012
    %1014 = vdwg.mxu0
    %s1015 = scalar_lea.vmem [#allocation11], 12
    %1016 = vst [vmem:[%s1015] sm:$0xf] %v1013
    %v1017 = vsel %vm126, %v1013, -inf
    %v1018 = vsel %vm316, %v1017, -inf
    %1019 = vmax.xlane.f32.xlu0 %v1018
    %v1020 = vpop.xlane.xlu0 %1019
    %vm1021 = vcmp.eq.f32.partialorder %v1017, %v1020
    %vm1022 = vmand %vm1021, %vm126
    %v1023 = vsel %vm1022, %v125, 32
    %v1024 = vsel %vm316, %v1023, 2147483647
    %v1025 = vand.u32 %v1024, 65535
    %v1026 = vshra.s32 %v1024, 16
    %v1027 = vcvt.s32.f32 %v1025
    %v1028 = vcvt.s32.f32 %v1026
    %1029 = vmin.xlane.f32.xlu0 %v1028
    %v1030 = vpop.xlane.xlu0 %1029
    %vm1031 = vcmp.eq.f32.partialorder %v1028, %v1030
    %v1032 = vsel %vm1031, %v1027, inf
    %1033 = vmin.xlane.f32.xlu0 %v1032
    %v1034 = vpop.xlane.xlu0 %1033
    %v1035 = vcvt.f32.s32 %v1034
    %v1036 = vcvt.f32.s32 %v1030
    %v1037 = vshll.u32 %v1036, 16
    %v1038 = vadd.s32 %v1037, %v1035
    %v1039 = vsel %vm129, %v1013, -inf
    %v1040 = vsel %vm316, %v1039, -inf
    %1041 = vmax.xlane.f32.xlu0 %v1040
    %v1042 = vpop.xlane.xlu0 %1041
    %vm1043 = vcmp.eq.f32.partialorder %v1039, %v1042
    %vm1044 = vmand %vm1043, %vm129
    %v1045 = vsel %vm1044, %v125, 32
    %v1046 = vsel %vm316, %v1045, 2147483647
    %v1047 = vand.u32 %v1046, 65535
    %v1048 = vshra.s32 %v1046, 16
    %v1049 = vcvt.s32.f32 %v1047
    %v1050 = vcvt.s32.f32 %v1048
    %1051 = vmin.xlane.f32.xlu0 %v1050
    %v1052 = vpop.xlane.xlu0 %1051
    %vm1053 = vcmp.eq.f32.partialorder %v1050, %v1052
    %v1054 = vsel %vm1053, %v1049, inf
    %1055 = vmin.xlane.f32.xlu0 %v1054
    %v1056 = vpop.xlane.xlu0 %1055
    %v1057 = vcvt.f32.s32 %v1056
    %v1058 = vcvt.f32.s32 %v1052
    %v1059 = vshll.u32 %v1058, 16
    %v1060 = vadd.s32 %v1059, %v1057
    %v1061 = vxor.u32 %v1013, 2147483648
    %v1062 = vmul.f32 %v1061, 1.442695
    %v1063 = vpow.pop %v1062
    %v1064 = vadd.f32 %v1063, 1.0
    %v1065 = vrcp.pop %v1064
    %v1066 = vmul.f32 %v1064, %v1065
    %v1067 = vsub.f32 1.0, %v1066
    %v1068 = vmul.f32 %v1065, %v1067
    %v1069 = vadd.f32 %v1065, %v1068
    %vm1070 = vweird.f32 %v1064
    %vm1071 = vweird.f32 %v1065
    %vm1072 = vmor %vm1070, %vm1071
    %v1073 = vsel %vm1072, %v1065, %v1069
    %v1074 = vand.u32 2147483647, %v1064
    %vm1075 = vcmp.eq.f32.partialorder %v1074, 8.507059e+37
    %v1076 = vand.u32 %v1064, 2147483648
    %v1077 = vor.u32 1.1754944e-38, %v1076
    %v1078 = vsel %vm1075, %v1077, %v1073
    %v1079 = vmul.f32 1.0, %v1078
    %vm1080 = vcmp.eq.s32.totalorder %v125, %v1038
    %vm1081 = vcmp.eq.s32.totalorder %v125, %v1060
    %vm1082 = vmor %vm1080, %vm1081
    %vm1083 = vmor %vm1082, %vm382
    %v1084 = vsel %vm1083, 1.0, 0.0
    %1086 = vset.pattern.permute.xlu0 12
    %1087 = vperm.xlu0 %1086, %v1079
    %v1088 = vpop.permute.xlu0 %1087
    %v1090 = vsel %vm385, %v1088, %v1084
    %1091 = vrot.lane.b32.xlu0 %v921, 64
    %v1092 = vpop.permute.xlu0 %1091
    %v1094 = vsel %vm144, %v1090, %v1092
    %v1096 = vsel %vm147, %v1094, 0
    %1098 = vmatpush.msra.mxu0 0.0
    %1099 = vmatpush.msra.mxu0 0.0
    %1100 = vmatpush.msra.mxu0 0.0
    %1101 = vmatpush.msra.mxu0 0.0
    %1102 = vmatpush.msra.mxu0 0.0
    %1103 = vmatpush.msra.mxu0 0.0
    %1104 = vmatpush.msra.mxu0 0.0
    %1105 = vmatpush.msra.mxu0 0.0
    %1106 = vmatpush.msra.mxu0 %v107
    %1107 = vmatpush.msra.mxu0 %v106
    %1108 = vmatpush.msra.mxu0 %v105
    %1109 = vmatpush.msra.mxu0 %v104
    %1110 = vmatpush.msra.mxu0 %v103
    %1111 = vmatpush.msra.mxu0 %v102
    %1112 = vmatpush.msra.mxu0 %v101
    %1113 = vmatpush.msra.mxu0 %v100
    %1114 = vmatmul.f32.gmra.mxu0 %v1096
    %v1115 = vpop.f32.mrf.mxu0
    %v1116 = vadd.f32 %v146, %v1115
    %1117 = vdwg.mxu0
    %v1118 = vxor.u32 %v1116, 2147483648
    %v1119 = vmul.f32 %v1118, 1.442695
    %v1120 = vpow.pop %v1119
    %v1121 = vadd.f32 %v1120, 1.0
    %v1122 = vrcp.pop %v1121
    %v1123 = vmul.f32 %v1121, %v1122
    %v1124 = vsub.f32 1.0, %v1123
    %v1125 = vmul.f32 %v1122, %v1124
    %v1126 = vadd.f32 %v1122, %v1125
    %vm1127 = vweird.f32 %v1121
    %vm1128 = vweird.f32 %v1122
    %vm1129 = vmor %vm1127, %vm1128
    %v1130 = vsel %vm1129, %v1122, %v1126
    %v1131 = vand.u32 2147483647, %v1121
    %vm1132 = vcmp.eq.f32.partialorder %v1131, 8.507059e+37
    %v1133 = vand.u32 %v1121, 2147483648
    %v1134 = vor.u32 1.1754944e-38, %v1133
    %v1135 = vsel %vm1132, %v1134, %v1130
    %v1136 = vmul.f32 1.0, %v1135
    %v1137 = vtanh.pop %v1116
    %v1138 = vmul.f32 %v1136, %v915
    %1140 = vrot.lane.b32.xlu0 %v1137, 64
    %v1141 = vpop.permute.xlu0 %1140
    %v1143 = vmul.f32 %v1136, %v1141
    %1145 = vrot.lane.b32.xlu0 %v1143, 32
    %v1146 = vpop.permute.xlu0 %1145
    %v1148 = vadd.f32 %v1138, %v1146
    %v1149 = vtanh.pop %v1148
    %1151 = vrot.lane.b32.xlu0 %v1149, 64
    %v1152 = vpop.permute.xlu0 %1151
    %v1154 = vmul.f32 %v1136, %v1152
    %1156 = vrot.lane.b32.xlu0 %v1154, 32
    %v1157 = vpop.permute.xlu0 %1156
    %1159 = vrot.lane.b32.xlu0 %v989, 64
    %v1160 = vpop.permute.xlu0 %1159
    %v1162 = vsel %vm144, %v1157, %v1160
    %v1164 = vsel %vm147, %v1162, 0
    %1166 = vmatpush.msra.mxu0 0.0
    %1167 = vmatpush.msra.mxu0 0.0
    %1168 = vmatpush.msra.mxu0 0.0
    %1169 = vmatpush.msra.mxu0 0.0
    %1170 = vmatpush.msra.mxu0 0.0
    %1171 = vmatpush.msra.mxu0 0.0
    %1172 = vmatpush.msra.mxu0 0.0
    %1173 = vmatpush.msra.mxu0 0.0
    %1174 = vmatpush.msra.mxu0 %v116
    %1175 = vmatpush.msra.mxu0 %v115
    %1176 = vmatpush.msra.mxu0 %v114
    %1177 = vmatpush.msra.mxu0 %v113
    %1178 = vmatpush.msra.mxu0 %v112
    %1179 = vmatpush.msra.mxu0 %v111
    %1180 = vmatpush.msra.mxu0 %v110
    %1181 = vmatpush.msra.mxu0 %v109
    %1182 = vmatmul.f32.gmra.mxu0 %v1164
    %v1183 = vpop.f32.mrf.mxu0
    %v1184 = vadd.f32 %v221, %v1183
    %1185 = vdwg.mxu0
    %v1186 = vxor.u32 %v1184, 2147483648
    %v1187 = vmul.f32 %v1186, 1.442695
    %v1188 = vpow.pop %v1187
    %v1189 = vadd.f32 %v1188, 1.0
    %v1190 = vrcp.pop %v1189
    %v1191 = vmul.f32 %v1189, %v1190
    %v1192 = vsub.f32 1.0, %v1191
    %v1193 = vmul.f32 %v1190, %v1192
    %v1194 = vadd.f32 %v1190, %v1193
    %vm1195 = vweird.f32 %v1189
    %vm1196 = vweird.f32 %v1190
    %vm1197 = vmor %vm1195, %vm1196
    %v1198 = vsel %vm1197, %v1190, %v1194
    %v1199 = vand.u32 2147483647, %v1189
    %vm1200 = vcmp.eq.f32.partialorder %v1199, 8.507059e+37
    %v1201 = vand.u32 %v1189, 2147483648
    %v1202 = vor.u32 1.1754944e-38, %v1201
    %v1203 = vsel %vm1200, %v1202, %v1198
    %v1204 = vmul.f32 1.0, %v1203
    %v1205 = vtanh.pop %v1184
    %v1206 = vmul.f32 %v1204, %v983
    %1208 = vrot.lane.b32.xlu0 %v1205, 64
    %v1209 = vpop.permute.xlu0 %1208
    %v1211 = vmul.f32 %v1204, %v1209
    %1213 = vrot.lane.b32.xlu0 %v1211, 32
    %v1214 = vpop.permute.xlu0 %1213
    %v1216 = vadd.f32 %v1206, %v1214
    %v1217 = vtanh.pop %v1216
    %1219 = vrot.lane.b32.xlu0 %v1217, 64
    %v1220 = vpop.permute.xlu0 %1219
    %v1222 = vmul.f32 %v1204, %v1220
    %1224 = vrot.lane.b32.xlu0 %v1222, 32
    %v1225 = vpop.permute.xlu0 %1224
    %v1226 = vsel %vm144, %v1225, 0
    %1228 = vmatpush.msra.mxu0 0.0
    %1229 = vmatpush.msra.mxu0 0.0
    %1230 = vmatpush.msra.mxu0 0.0
    %1231 = vmatpush.msra.mxu0 0.0
    %1232 = vmatpush.msra.mxu0 0.0
    %1233 = vmatpush.msra.mxu0 0.0
    %1234 = vmatpush.msra.mxu0 0.0
    %1235 = vmatpush.msra.mxu0 0.0
    %1236 = vmatpush.msra.mxu0 0.0
    %1237 = vmatpush.msra.mxu0 0.0
    %1238 = vmatpush.msra.mxu0 0.0
    %1239 = vmatpush.msra.mxu0 0.0
    %1240 = vmatpush.msra.mxu0 %v122
    %1241 = vmatpush.msra.mxu0 %v121
    %1242 = vmatpush.msra.mxu0 %v120
    %1243 = vmatpush.msra.mxu0 %v119
    %1244 = vmatmul.f32.gmra.mxu0 %v1226
    %v1245 = vpop.f32.mrf.mxu0
    %v1246 = vadd.f32 %v287, %v1245
    %1247 = vdwg.mxu0
    %s1248 = scalar_lea.vmem [#allocation11], 16
    %1249 = vst [vmem:[%s1248] sm:$0xf] %v1246
    %v1250 = vsel %vm126, %v1246, -inf
    %v1251 = vsel %vm316, %v1250, -inf
    %1252 = vmax.xlane.f32.xlu0 %v1251
    %v1253 = vpop.xlane.xlu0 %1252
    %vm1254 = vcmp.eq.f32.partialorder %v1250, %v1253
    %vm1255 = vmand %vm1254, %vm126
    %v1256 = vsel %vm1255, %v125, 32
    %v1257 = vsel %vm316, %v1256, 2147483647
    %v1258 = vand.u32 %v1257, 65535
    %v1259 = vshra.s32 %v1257, 16
    %v1260 = vcvt.s32.f32 %v1258
    %v1261 = vcvt.s32.f32 %v1259
    %1262 = vmin.xlane.f32.xlu0 %v1261
    %v1263 = vpop.xlane.xlu0 %1262
    %vm1264 = vcmp.eq.f32.partialorder %v1261, %v1263
    %v1265 = vsel %vm1264, %v1260, inf
    %1266 = vmin.xlane.f32.xlu0 %v1265
    %v1267 = vpop.xlane.xlu0 %1266
    %v1268 = vcvt.f32.s32 %v1267
    %v1269 = vcvt.f32.s32 %v1263
    %v1270 = vshll.u32 %v1269, 16
    %v1271 = vadd.s32 %v1270, %v1268
    %v1272 = vsel %vm129, %v1246, -inf
    %v1273 = vsel %vm316, %v1272, -inf
    %1274 = vmax.xlane.f32.xlu0 %v1273
    %v1275 = vpop.xlane.xlu0 %1274
    %vm1276 = vcmp.eq.f32.partialorder %v1272, %v1275
    %vm1277 = vmand %vm1276, %vm129
    %v1278 = vsel %vm1277, %v125, 32
    %v1279 = vsel %vm316, %v1278, 2147483647
    %v1280 = vand.u32 %v1279, 65535
    %v1281 = vshra.s32 %v1279, 16
    %v1282 = vcvt.s32.f32 %v1280
    %v1283 = vcvt.s32.f32 %v1281
    %1284 = vmin.xlane.f32.xlu0 %v1283
    %v1285 = vpop.xlane.xlu0 %1284
    %vm1286 = vcmp.eq.f32.partialorder %v1283, %v1285
    %v1287 = vsel %vm1286, %v1282, inf
    %1288 = vmin.xlane.f32.xlu0 %v1287
    %v1289 = vpop.xlane.xlu0 %1288
    %v1290 = vcvt.f32.s32 %v1289
    %v1291 = vcvt.f32.s32 %v1285
    %v1292 = vshll.u32 %v1291, 16
    %v1293 = vadd.s32 %v1292, %v1290
    %v1294 = vxor.u32 %v1246, 2147483648
    %v1295 = vmul.f32 %v1294, 1.442695
    %v1296 = vpow.pop %v1295
    %v1297 = vadd.f32 %v1296, 1.0
    %v1298 = vrcp.pop %v1297
    %v1299 = vmul.f32 %v1297, %v1298
    %v1300 = vsub.f32 1.0, %v1299
    %v1301 = vmul.f32 %v1298, %v1300
    %v1302 = vadd.f32 %v1298, %v1301
    %vm1303 = vweird.f32 %v1297
    %vm1304 = vweird.f32 %v1298
    %vm1305 = vmor %vm1303, %vm1304
    %v1306 = vsel %vm1305, %v1298, %v1302
    %v1307 = vand.u32 2147483647, %v1297
    %vm1308 = vcmp.eq.f32.partialorder %v1307, 8.507059e+37
    %v1309 = vand.u32 %v1297, 2147483648
    %v1310 = vor.u32 1.1754944e-38, %v1309
    %v1311 = vsel %vm1308, %v1310, %v1306
    %v1312 = vmul.f32 1.0, %v1311
    %vm1313 = vcmp.eq.s32.totalorder %v125, %v1271
    %vm1314 = vcmp.eq.s32.totalorder %v125, %v1293
    %vm1315 = vmor %vm1313, %vm1314
    %vm1316 = vmor %vm1315, %vm382
    %v1317 = vsel %vm1316, 1.0, 0.0
    %1319 = vset.pattern.permute.xlu0 12
    %1320 = vperm.xlu0 %1319, %v1312
    %v1321 = vpop.permute.xlu0 %1320
    %v1323 = vsel %vm385, %v1321, %v1317
    %1324 = vrot.lane.b32.xlu0 %v1154, 64
    %v1325 = vpop.permute.xlu0 %1324
    %v1327 = vsel %vm144, %v1323, %v1325
    %v1329 = vsel %vm147, %v1327, 0
    %1331 = vmatpush.msra.mxu0 0.0
    %1332 = vmatpush.msra.mxu0 0.0
    %1333 = vmatpush.msra.mxu0 0.0
    %1334 = vmatpush.msra.mxu0 0.0
    %1335 = vmatpush.msra.mxu0 0.0
    %1336 = vmatpush.msra.mxu0 0.0
    %1337 = vmatpush.msra.mxu0 0.0
    %1338 = vmatpush.msra.mxu0 0.0
    %1339 = vmatpush.msra.mxu0 %v107
    %1340 = vmatpush.msra.mxu0 %v106
    %1341 = vmatpush.msra.mxu0 %v105
    %1342 = vmatpush.msra.mxu0 %v104
    %1343 = vmatpush.msra.mxu0 %v103
    %1344 = vmatpush.msra.mxu0 %v102
    %1345 = vmatpush.msra.mxu0 %v101
    %1346 = vmatpush.msra.mxu0 %v100
    %1347 = vmatmul.f32.gmra.mxu0 %v1329
    %v1348 = vpop.f32.mrf.mxu0
    %v1349 = vadd.f32 %v146, %v1348
    %1350 = vdwg.mxu0
    %v1351 = vxor.u32 %v1349, 2147483648
    %v1352 = vmul.f32 %v1351, 1.442695
    %v1353 = vpow.pop %v1352
    %v1354 = vadd.f32 %v1353, 1.0
    %v1355 = vrcp.pop %v1354
    %v1356 = vmul.f32 %v1354, %v1355
    %v1357 = vsub.f32 1.0, %v1356
    %v1358 = vmul.f32 %v1355, %v1357
    %v1359 = vadd.f32 %v1355, %v1358
    %vm1360 = vweird.f32 %v1354
    %vm1361 = vweird.f32 %v1355
    %vm1362 = vmor %vm1360, %vm1361
    %v1363 = vsel %vm1362, %v1355, %v1359
    %v1364 = vand.u32 2147483647, %v1354
    %vm1365 = vcmp.eq.f32.partialorder %v1364, 8.507059e+37
    %v1366 = vand.u32 %v1354, 2147483648
    %v1367 = vor.u32 1.1754944e-38, %v1366
    %v1368 = vsel %vm1365, %v1367, %v1363
    %v1369 = vmul.f32 1.0, %v1368
    %v1370 = vtanh.pop %v1349
    %v1371 = vmul.f32 %v1369, %v1148
    %1373 = vrot.lane.b32.xlu0 %v1370, 64
    %v1374 = vpop.permute.xlu0 %1373
    %v1376 = vmul.f32 %v1369, %v1374
    %1378 = vrot.lane.b32.xlu0 %v1376, 32
    %v1379 = vpop.permute.xlu0 %1378
    %v1381 = vadd.f32 %v1371, %v1379
    %v1382 = vtanh.pop %v1381
    %1384 = vrot.lane.b32.xlu0 %v1382, 64
    %v1385 = vpop.permute.xlu0 %1384
    %v1387 = vmul.f32 %v1369, %v1385
    %1389 = vrot.lane.b32.xlu0 %v1387, 32
    %v1390 = vpop.permute.xlu0 %1389
    %1392 = vrot.lane.b32.xlu0 %v1222, 64
    %v1393 = vpop.permute.xlu0 %1392
    %v1395 = vsel %vm144, %v1390, %v1393
    %v1397 = vsel %vm147, %v1395, 0
    %1399 = vmatpush.msra.mxu0 0.0
    %1400 = vmatpush.msra.mxu0 0.0
    %1401 = vmatpush.msra.mxu0 0.0
    %1402 = vmatpush.msra.mxu0 0.0
    %1403 = vmatpush.msra.mxu0 0.0
    %1404 = vmatpush.msra.mxu0 0.0
    %1405 = vmatpush.msra.mxu0 0.0
    %1406 = vmatpush.msra.mxu0 0.0
    %1407 = vmatpush.msra.mxu0 %v116
    %1408 = vmatpush.msra.mxu0 %v115
    %1409 = vmatpush.msra.mxu0 %v114
    %1410 = vmatpush.msra.mxu0 %v113
    %1411 = vmatpush.msra.mxu0 %v112
    %1412 = vmatpush.msra.mxu0 %v111
    %1413 = vmatpush.msra.mxu0 %v110
    %1414 = vmatpush.msra.mxu0 %v109
    %1415 = vmatmul.f32.gmra.mxu0 %v1397
    %v1416 = vpop.f32.mrf.mxu0
    %v1417 = vadd.f32 %v221, %v1416
    %1418 = vdwg.mxu0
    %v1419 = vxor.u32 %v1417, 2147483648
    %v1420 = vmul.f32 %v1419, 1.442695
    %v1421 = vpow.pop %v1420
    %v1422 = vadd.f32 %v1421, 1.0
    %v1423 = vrcp.pop %v1422
    %v1424 = vmul.f32 %v1422, %v1423
    %v1425 = vsub.f32 1.0, %v1424
    %v1426 = vmul.f32 %v1423, %v1425
    %v1427 = vadd.f32 %v1423, %v1426
    %vm1428 = vweird.f32 %v1422
    %vm1429 = vweird.f32 %v1423
    %vm1430 = vmor %vm1428, %vm1429
    %v1431 = vsel %vm1430, %v1423, %v1427
    %v1432 = vand.u32 2147483647, %v1422
    %vm1433 = vcmp.eq.f32.partialorder %v1432, 8.507059e+37
    %v1434 = vand.u32 %v1422, 2147483648
    %v1435 = vor.u32 1.1754944e-38, %v1434
    %v1436 = vsel %vm1433, %v1435, %v1431
    %v1437 = vmul.f32 1.0, %v1436
    %v1438 = vtanh.pop %v1417
    %v1439 = vmul.f32 %v1437, %v1216
    %1441 = vrot.lane.b32.xlu0 %v1438, 64
    %v1442 = vpop.permute.xlu0 %1441
    %v1444 = vmul.f32 %v1437, %v1442
    %1446 = vrot.lane.b32.xlu0 %v1444, 32
    %v1447 = vpop.permute.xlu0 %1446
    %v1449 = vadd.f32 %v1439, %v1447
    %v1450 = vtanh.pop %v1449
    %1452 = vrot.lane.b32.xlu0 %v1450, 64
    %v1453 = vpop.permute.xlu0 %1452
    %v1455 = vmul.f32 %v1437, %v1453
    %1457 = vrot.lane.b32.xlu0 %v1455, 32
    %v1458 = vpop.permute.xlu0 %1457
    %v1459 = vsel %vm144, %v1458, 0
    %1461 = vmatpush.msra.mxu0 0.0
    %1462 = vmatpush.msra.mxu0 0.0
    %1463 = vmatpush.msra.mxu0 0.0
    %1464 = vmatpush.msra.mxu0 0.0
    %1465 = vmatpush.msra.mxu0 0.0
    %1466 = vmatpush.msra.mxu0 0.0
    %1467 = vmatpush.msra.mxu0 0.0
    %1468 = vmatpush.msra.mxu0 0.0
    %1469 = vmatpush.msra.mxu0 0.0
    %1470 = vmatpush.msra.mxu0 0.0
    %1471 = vmatpush.msra.mxu0 0.0
    %1472 = vmatpush.msra.mxu0 0.0
    %1473 = vmatpush.msra.mxu0 %v122
    %1474 = vmatpush.msra.mxu0 %v121
    %1475 = vmatpush.msra.mxu0 %v120
    %1476 = vmatpush.msra.mxu0 %v119
    %1477 = vmatmul.f32.gmra.mxu0 %v1459
    %v1478 = vpop.f32.mrf.mxu0
    %v1479 = vadd.f32 %v287, %v1478
    %1480 = vdwg.mxu0
    %s1481 = scalar_lea.vmem [#allocation11], 20
    %1482 = vst [vmem:[%s1481] sm:$0xf] %v1479
    %v1483 = vsel %vm126, %v1479, -inf
    %v1484 = vsel %vm316, %v1483, -inf
    %1485 = vmax.xlane.f32.xlu0 %v1484
    %v1486 = vpop.xlane.xlu0 %1485
    %vm1487 = vcmp.eq.f32.partialorder %v1483, %v1486
    %vm1488 = vmand %vm1487, %vm126
    %v1489 = vsel %vm1488, %v125, 32
    %v1490 = vsel %vm316, %v1489, 2147483647
    %v1491 = vand.u32 %v1490, 65535
    %v1492 = vshra.s32 %v1490, 16
    %v1493 = vcvt.s32.f32 %v1491
    %v1494 = vcvt.s32.f32 %v1492
    %1495 = vmin.xlane.f32.xlu0 %v1494
    %v1496 = vpop.xlane.xlu0 %1495
    %vm1497 = vcmp.eq.f32.partialorder %v1494, %v1496
    %v1498 = vsel %vm1497, %v1493, inf
    %1499 = vmin.xlane.f32.xlu0 %v1498
    %v1500 = vpop.xlane.xlu0 %1499
    %v1501 = vcvt.f32.s32 %v1500
    %v1502 = vcvt.f32.s32 %v1496
    %v1503 = vshll.u32 %v1502, 16
    %v1504 = vadd.s32 %v1503, %v1501
    %v1505 = vsel %vm129, %v1479, -inf
    %v1506 = vsel %vm316, %v1505, -inf
    %1507 = vmax.xlane.f32.xlu0 %v1506
    %v1508 = vpop.xlane.xlu0 %1507
    %vm1509 = vcmp.eq.f32.partialorder %v1505, %v1508
    %vm1510 = vmand %vm1509, %vm129
    %v1511 = vsel %vm1510, %v125, 32
    %v1512 = vsel %vm316, %v1511, 2147483647
    %v1513 = vand.u32 %v1512, 65535
    %v1514 = vshra.s32 %v1512, 16
    %v1515 = vcvt.s32.f32 %v1513
    %v1516 = vcvt.s32.f32 %v1514
    %1517 = vmin.xlane.f32.xlu0 %v1516
    %v1518 = vpop.xlane.xlu0 %1517
    %vm1519 = vcmp.eq.f32.partialorder %v1516, %v1518
    %v1520 = vsel %vm1519, %v1515, inf
    %1521 = vmin.xlane.f32.xlu0 %v1520
    %v1522 = vpop.xlane.xlu0 %1521
    %v1523 = vcvt.f32.s32 %v1522
    %v1524 = vcvt.f32.s32 %v1518
    %v1525 = vshll.u32 %v1524, 16
    %v1526 = vadd.s32 %v1525, %v1523
    %v1527 = vxor.u32 %v1479, 2147483648
    %v1528 = vmul.f32 %v1527, 1.442695
    %v1529 = vpow.pop %v1528
    %v1530 = vadd.f32 %v1529, 1.0
    %v1531 = vrcp.pop %v1530
    %v1532 = vmul.f32 %v1530, %v1531
    %v1533 = vsub.f32 1.0, %v1532
    %v1534 = vmul.f32 %v1531, %v1533
    %v1535 = vadd.f32 %v1531, %v1534
    %vm1536 = vweird.f32 %v1530
    %vm1537 = vweird.f32 %v1531
    %vm1538 = vmor %vm1536, %vm1537
    %v1539 = vsel %vm1538, %v1531, %v1535
    %v1540 = vand.u32 2147483647, %v1530
    %vm1541 = vcmp.eq.f32.partialorder %v1540, 8.507059e+37
    %v1542 = vand.u32 %v1530, 2147483648
    %v1543 = vor.u32 1.1754944e-38, %v1542
    %v1544 = vsel %vm1541, %v1543, %v1539
    %v1545 = vmul.f32 1.0, %v1544
    %vm1546 = vcmp.eq.s32.totalorder %v125, %v1504
    %vm1547 = vcmp.eq.s32.totalorder %v125, %v1526
    %vm1548 = vmor %vm1546, %vm1547
    %vm1549 = vmor %vm1548, %vm382
    %v1550 = vsel %vm1549, 1.0, 0.0
    %1552 = vset.pattern.permute.xlu0 12
    %1553 = vperm.xlu0 %1552, %v1545
    %v1554 = vpop.permute.xlu0 %1553
    %v1556 = vsel %vm385, %v1554, %v1550
    %1557 = vrot.lane.b32.xlu0 %v1387, 64
    %v1558 = vpop.permute.xlu0 %1557
    %v1560 = vsel %vm144, %v1556, %v1558
    %v1562 = vsel %vm147, %v1560, 0
    %1564 = vmatpush.msra.mxu0 0.0
    %1565 = vmatpush.msra.mxu0 0.0
    %1566 = vmatpush.msra.mxu0 0.0
    %1567 = vmatpush.msra.mxu0 0.0
    %1568 = vmatpush.msra.mxu0 0.0
    %1569 = vmatpush.msra.mxu0 0.0
    %1570 = vmatpush.msra.mxu0 0.0
    %1571 = vmatpush.msra.mxu0 0.0
    %1572 = vmatpush.msra.mxu0 %v107
    %1573 = vmatpush.msra.mxu0 %v106
    %1574 = vmatpush.msra.mxu0 %v105
    %1575 = vmatpush.msra.mxu0 %v104
    %1576 = vmatpush.msra.mxu0 %v103
    %1577 = vmatpush.msra.mxu0 %v102
    %1578 = vmatpush.msra.mxu0 %v101
    %1579 = vmatpush.msra.mxu0 %v100
    %1580 = vmatmul.f32.gmra.mxu0 %v1562
    %v1581 = vpop.f32.mrf.mxu0
    %v1582 = vadd.f32 %v146, %v1581
    %1583 = vdwg.mxu0
    %v1584 = vxor.u32 %v1582, 2147483648
    %v1585 = vmul.f32 %v1584, 1.442695
    %v1586 = vpow.pop %v1585
    %v1587 = vadd.f32 %v1586, 1.0
    %v1588 = vrcp.pop %v1587
    %v1589 = vmul.f32 %v1587, %v1588
    %v1590 = vsub.f32 1.0, %v1589
    %v1591 = vmul.f32 %v1588, %v1590
    %v1592 = vadd.f32 %v1588, %v1591
    %vm1593 = vweird.f32 %v1587
    %vm1594 = vweird.f32 %v1588
    %vm1595 = vmor %vm1593, %vm1594
    %v1596 = vsel %vm1595, %v1588, %v1592
    %v1597 = vand.u32 2147483647, %v1587
    %vm1598 = vcmp.eq.f32.partialorder %v1597, 8.507059e+37
    %v1599 = vand.u32 %v1587, 2147483648
    %v1600 = vor.u32 1.1754944e-38, %v1599
    %v1601 = vsel %vm1598, %v1600, %v1596
    %v1602 = vmul.f32 1.0, %v1601
    %v1603 = vtanh.pop %v1582
    %v1604 = vmul.f32 %v1602, %v1381
    %1606 = vrot.lane.b32.xlu0 %v1603, 64
    %v1607 = vpop.permute.xlu0 %1606
    %v1609 = vmul.f32 %v1602, %v1607
    %1611 = vrot.lane.b32.xlu0 %v1609, 32
    %v1612 = vpop.permute.xlu0 %1611
    %v1614 = vadd.f32 %v1604, %v1612
    %v1615 = vtanh.pop %v1614
    %1617 = vrot.lane.b32.xlu0 %v1615, 64
    %v1618 = vpop.permute.xlu0 %1617
    %v1620 = vmul.f32 %v1602, %v1618
    %1622 = vrot.lane.b32.xlu0 %v1620, 32
    %v1623 = vpop.permute.xlu0 %1622
    %1625 = vrot.lane.b32.xlu0 %v1455, 64
    %v1626 = vpop.permute.xlu0 %1625
    %v1628 = vsel %vm144, %v1623, %v1626
    %v1630 = vsel %vm147, %v1628, 0
    %1632 = vmatpush.msra.mxu0 0.0
    %1633 = vmatpush.msra.mxu0 0.0
    %1634 = vmatpush.msra.mxu0 0.0
    %1635 = vmatpush.msra.mxu0 0.0
    %1636 = vmatpush.msra.mxu0 0.0
    %1637 = vmatpush.msra.mxu0 0.0
    %1638 = vmatpush.msra.mxu0 0.0
    %1639 = vmatpush.msra.mxu0 0.0
    %1640 = vmatpush.msra.mxu0 %v116
    %1641 = vmatpush.msra.mxu0 %v115
    %1642 = vmatpush.msra.mxu0 %v114
    %1643 = vmatpush.msra.mxu0 %v113
    %1644 = vmatpush.msra.mxu0 %v112
    %1645 = vmatpush.msra.mxu0 %v111
    %1646 = vmatpush.msra.mxu0 %v110
    %1647 = vmatpush.msra.mxu0 %v109
    %1648 = vmatmul.f32.gmra.mxu0 %v1630
    %v1649 = vpop.f32.mrf.mxu0
    %v1650 = vadd.f32 %v221, %v1649
    %1651 = vdwg.mxu0
    %v1652 = vxor.u32 %v1650, 2147483648
    %v1653 = vmul.f32 %v1652, 1.442695
    %v1654 = vpow.pop %v1653
    %v1655 = vadd.f32 %v1654, 1.0
    %v1656 = vrcp.pop %v1655
    %v1657 = vmul.f32 %v1655, %v1656
    %v1658 = vsub.f32 1.0, %v1657
    %v1659 = vmul.f32 %v1656, %v1658
    %v1660 = vadd.f32 %v1656, %v1659
    %vm1661 = vweird.f32 %v1655
    %vm1662 = vweird.f32 %v1656
    %vm1663 = vmor %vm1661, %vm1662
    %v1664 = vsel %vm1663, %v1656, %v1660
    %v1665 = vand.u32 2147483647, %v1655
    %vm1666 = vcmp.eq.f32.partialorder %v1665, 8.507059e+37
    %v1667 = vand.u32 %v1655, 2147483648
    %v1668 = vor.u32 1.1754944e-38, %v1667
    %v1669 = vsel %vm1666, %v1668, %v1664
    %v1670 = vmul.f32 1.0, %v1669
    %v1671 = vtanh.pop %v1650
    %v1672 = vmul.f32 %v1670, %v1449
    %1674 = vrot.lane.b32.xlu0 %v1671, 64
    %v1675 = vpop.permute.xlu0 %1674
    %v1677 = vmul.f32 %v1670, %v1675
    %1679 = vrot.lane.b32.xlu0 %v1677, 32
    %v1680 = vpop.permute.xlu0 %1679
    %v1682 = vadd.f32 %v1672, %v1680
    %v1683 = vtanh.pop %v1682
    %1685 = vrot.lane.b32.xlu0 %v1683, 64
    %v1686 = vpop.permute.xlu0 %1685
    %v1688 = vmul.f32 %v1670, %v1686
    %1690 = vrot.lane.b32.xlu0 %v1688, 32
    %v1691 = vpop.permute.xlu0 %1690
    %v1692 = vsel %vm144, %v1691, 0
    %1694 = vmatpush.msra.mxu0 0.0
    %1695 = vmatpush.msra.mxu0 0.0
    %1696 = vmatpush.msra.mxu0 0.0
    %1697 = vmatpush.msra.mxu0 0.0
    %1698 = vmatpush.msra.mxu0 0.0
    %1699 = vmatpush.msra.mxu0 0.0
    %1700 = vmatpush.msra.mxu0 0.0
    %1701 = vmatpush.msra.mxu0 0.0
    %1702 = vmatpush.msra.mxu0 0.0
    %1703 = vmatpush.msra.mxu0 0.0
    %1704 = vmatpush.msra.mxu0 0.0
    %1705 = vmatpush.msra.mxu0 0.0
    %1706 = vmatpush.msra.mxu0 %v122
    %1707 = vmatpush.msra.mxu0 %v121
    %1708 = vmatpush.msra.mxu0 %v120
    %1709 = vmatpush.msra.mxu0 %v119
    %1710 = vmatmul.f32.gmra.mxu0 %v1692
    %v1711 = vpop.f32.mrf.mxu0
    %v1712 = vadd.f32 %v287, %v1711
    %1713 = vdwg.mxu0
    %s1714 = scalar_lea.vmem [#allocation11], 24
    %1715 = vst [vmem:[%s1714] sm:$0xf] %v1712
    %v1716 = vsel %vm126, %v1712, -inf
    %v1717 = vsel %vm316, %v1716, -inf
    %1718 = vmax.xlane.f32.xlu0 %v1717
    %v1719 = vpop.xlane.xlu0 %1718
    %vm1720 = vcmp.eq.f32.partialorder %v1716, %v1719
    %vm1721 = vmand %vm1720, %vm126
    %v1722 = vsel %vm1721, %v125, 32
    %v1723 = vsel %vm316, %v1722, 2147483647
    %v1724 = vand.u32 %v1723, 65535
    %v1725 = vshra.s32 %v1723, 16
    %v1726 = vcvt.s32.f32 %v1724
    %v1727 = vcvt.s32.f32 %v1725
    %1728 = vmin.xlane.f32.xlu0 %v1727
    %v1729 = vpop.xlane.xlu0 %1728
    %vm1730 = vcmp.eq.f32.partialorder %v1727, %v1729
    %v1731 = vsel %vm1730, %v1726, inf
    %1732 = vmin.xlane.f32.xlu0 %v1731
    %v1733 = vpop.xlane.xlu0 %1732
    %v1734 = vcvt.f32.s32 %v1733
    %v1735 = vcvt.f32.s32 %v1729
    %v1736 = vshll.u32 %v1735, 16
    %v1737 = vadd.s32 %v1736, %v1734
    %v1738 = vsel %vm129, %v1712, -inf
    %v1739 = vsel %vm316, %v1738, -inf
    %1740 = vmax.xlane.f32.xlu0 %v1739
    %v1741 = vpop.xlane.xlu0 %1740
    %vm1742 = vcmp.eq.f32.partialorder %v1738, %v1741
    %vm1743 = vmand %vm1742, %vm129
    %v1744 = vsel %vm1743, %v125, 32
    %v1745 = vsel %vm316, %v1744, 2147483647
    %v1746 = vand.u32 %v1745, 65535
    %v1747 = vshra.s32 %v1745, 16
    %v1748 = vcvt.s32.f32 %v1746
    %v1749 = vcvt.s32.f32 %v1747
    %1750 = vmin.xlane.f32.xlu0 %v1749
    %v1751 = vpop.xlane.xlu0 %1750
    %vm1752 = vcmp.eq.f32.partialorder %v1749, %v1751
    %v1753 = vsel %vm1752, %v1748, inf
    %1754 = vmin.xlane.f32.xlu0 %v1753
    %v1755 = vpop.xlane.xlu0 %1754
    %v1756 = vcvt.f32.s32 %v1755
    %v1757 = vcvt.f32.s32 %v1751
    %v1758 = vshll.u32 %v1757, 16
    %v1759 = vadd.s32 %v1758, %v1756
    %v1760 = vxor.u32 %v1712, 2147483648
    %v1761 = vmul.f32 %v1760, 1.442695
    %v1762 = vpow.pop %v1761
    %v1763 = vadd.f32 %v1762, 1.0
    %v1764 = vrcp.pop %v1763
    %v1765 = vmul.f32 %v1763, %v1764
    %v1766 = vsub.f32 1.0, %v1765
    %v1767 = vmul.f32 %v1764, %v1766
    %v1768 = vadd.f32 %v1764, %v1767
    %vm1769 = vweird.f32 %v1763
    %vm1770 = vweird.f32 %v1764
    %vm1771 = vmor %vm1769, %vm1770
    %v1772 = vsel %vm1771, %v1764, %v1768
    %v1773 = vand.u32 2147483647, %v1763
    %vm1774 = vcmp.eq.f32.partialorder %v1773, 8.507059e+37
    %v1775 = vand.u32 %v1763, 2147483648
    %v1776 = vor.u32 1.1754944e-38, %v1775
    %v1777 = vsel %vm1774, %v1776, %v1772
    %v1778 = vmul.f32 1.0, %v1777
    %vm1779 = vcmp.eq.s32.totalorder %v125, %v1737
    %vm1780 = vcmp.eq.s32.totalorder %v125, %v1759
    %vm1781 = vmor %vm1779, %vm1780
    %vm1782 = vmor %vm1781, %vm382
    %v1783 = vsel %vm1782, 1.0, 0.0
    %1785 = vset.pattern.permute.xlu0 12
    %1786 = vperm.xlu0 %1785, %v1778
    %v1787 = vpop.permute.xlu0 %1786
    %v1789 = vsel %vm385, %v1787, %v1783
    %1790 = vrot.lane.b32.xlu0 %v1620, 64
    %v1791 = vpop.permute.xlu0 %1790
    %v1793 = vsel %vm144, %v1789, %v1791
    %v1795 = vsel %vm147, %v1793, 0
    %1797 = vmatpush.msra.mxu0 0.0
    %1798 = vmatpush.msra.mxu0 0.0
    %1799 = vmatpush.msra.mxu0 0.0
    %1800 = vmatpush.msra.mxu0 0.0
    %1801 = vmatpush.msra.mxu0 0.0
    %1802 = vmatpush.msra.mxu0 0.0
    %1803 = vmatpush.msra.mxu0 0.0
    %1804 = vmatpush.msra.mxu0 0.0
    %1805 = vmatpush.msra.mxu0 %v107
    %1806 = vmatpush.msra.mxu0 %v106
    %1807 = vmatpush.msra.mxu0 %v105
    %1808 = vmatpush.msra.mxu0 %v104
    %1809 = vmatpush.msra.mxu0 %v103
    %1810 = vmatpush.msra.mxu0 %v102
    %1811 = vmatpush.msra.mxu0 %v101
    %1812 = vmatpush.msra.mxu0 %v100
    %1813 = vmatmul.f32.gmra.mxu0 %v1795
    %v1814 = vpop.f32.mrf.mxu0
    %v1815 = vadd.f32 %v146, %v1814
    %1816 = vdwg.mxu0
    %v1817 = vxor.u32 %v1815, 2147483648
    %v1818 = vmul.f32 %v1817, 1.442695
    %v1819 = vpow.pop %v1818
    %v1820 = vadd.f32 %v1819, 1.0
    %v1821 = vrcp.pop %v1820
    %v1822 = vmul.f32 %v1820, %v1821
    %v1823 = vsub.f32 1.0, %v1822
    %v1824 = vmul.f32 %v1821, %v1823
    %v1825 = vadd.f32 %v1821, %v1824
    %vm1826 = vweird.f32 %v1820
    %vm1827 = vweird.f32 %v1821
    %vm1828 = vmor %vm1826, %vm1827
    %v1829 = vsel %vm1828, %v1821, %v1825
    %v1830 = vand.u32 2147483647, %v1820
    %vm1831 = vcmp.eq.f32.partialorder %v1830, 8.507059e+37
    %v1832 = vand.u32 %v1820, 2147483648
    %v1833 = vor.u32 1.1754944e-38, %v1832
    %v1834 = vsel %vm1831, %v1833, %v1829
    %v1835 = vmul.f32 1.0, %v1834
    %v1836 = vtanh.pop %v1815
    %v1837 = vmul.f32 %v1835, %v1614
    %1839 = vrot.lane.b32.xlu0 %v1836, 64
    %v1840 = vpop.permute.xlu0 %1839
    %v1842 = vmul.f32 %v1835, %v1840
    %1844 = vrot.lane.b32.xlu0 %v1842, 32
    %v1845 = vpop.permute.xlu0 %1844
    %v1847 = vadd.f32 %v1837, %v1845
    %v1848 = vtanh.pop %v1847
    %1850 = vrot.lane.b32.xlu0 %v1848, 64
    %v1851 = vpop.permute.xlu0 %1850
    %v1853 = vmul.f32 %v1835, %v1851
    %1855 = vrot.lane.b32.xlu0 %v1853, 32
    %v1856 = vpop.permute.xlu0 %1855
    %1858 = vrot.lane.b32.xlu0 %v1688, 64
    %v1859 = vpop.permute.xlu0 %1858
    %v1861 = vsel %vm144, %v1856, %v1859
    %v1863 = vsel %vm147, %v1861, 0
    %1865 = vmatpush.msra.mxu0 0.0
    %1866 = vmatpush.msra.mxu0 0.0
    %1867 = vmatpush.msra.mxu0 0.0
    %1868 = vmatpush.msra.mxu0 0.0
    %1869 = vmatpush.msra.mxu0 0.0
    %1870 = vmatpush.msra.mxu0 0.0
    %1871 = vmatpush.msra.mxu0 0.0
    %1872 = vmatpush.msra.mxu0 0.0
    %1873 = vmatpush.msra.mxu0 %v116
    %1874 = vmatpush.msra.mxu0 %v115
    %1875 = vmatpush.msra.mxu0 %v114
    %1876 = vmatpush.msra.mxu0 %v113
    %1877 = vmatpush.msra.mxu0 %v112
    %1878 = vmatpush.msra.mxu0 %v111
    %1879 = vmatpush.msra.mxu0 %v110
    %1880 = vmatpush.msra.mxu0 %v109
    %1881 = vmatmul.f32.gmra.mxu0 %v1863
    %v1882 = vpop.f32.mrf.mxu0
    %v1883 = vadd.f32 %v221, %v1882
    %1884 = vdwg.mxu0
    %v1885 = vxor.u32 %v1883, 2147483648
    %v1886 = vmul.f32 %v1885, 1.442695
    %v1887 = vpow.pop %v1886
    %v1888 = vadd.f32 %v1887, 1.0
    %v1889 = vrcp.pop %v1888
    %v1890 = vmul.f32 %v1888, %v1889
    %v1891 = vsub.f32 1.0, %v1890
    %v1892 = vmul.f32 %v1889, %v1891
    %v1893 = vadd.f32 %v1889, %v1892
    %vm1894 = vweird.f32 %v1888
    %vm1895 = vweird.f32 %v1889
    %vm1896 = vmor %vm1894, %vm1895
    %v1897 = vsel %vm1896, %v1889, %v1893
    %v1898 = vand.u32 2147483647, %v1888
    %vm1899 = vcmp.eq.f32.partialorder %v1898, 8.507059e+37
    %v1900 = vand.u32 %v1888, 2147483648
    %v1901 = vor.u32 1.1754944e-38, %v1900
    %v1902 = vsel %vm1899, %v1901, %v1897
    %v1903 = vmul.f32 1.0, %v1902
    %v1904 = vtanh.pop %v1883
    %v1905 = vmul.f32 %v1903, %v1682
    %1907 = vrot.lane.b32.xlu0 %v1904, 64
    %v1908 = vpop.permute.xlu0 %1907
    %v1910 = vmul.f32 %v1903, %v1908
    %1912 = vrot.lane.b32.xlu0 %v1910, 32
    %v1913 = vpop.permute.xlu0 %1912
    %v1915 = vadd.f32 %v1905, %v1913
    %v1916 = vtanh.pop %v1915
    %1918 = vrot.lane.b32.xlu0 %v1916, 64
    %v1919 = vpop.permute.xlu0 %1918
    %v1921 = vmul.f32 %v1903, %v1919
    %1923 = vrot.lane.b32.xlu0 %v1921, 32
    %v1924 = vpop.permute.xlu0 %1923
    %v1925 = vsel %vm144, %v1924, 0
    %1927 = vmatpush.msra.mxu0 0.0
    %1928 = vmatpush.msra.mxu0 0.0
    %1929 = vmatpush.msra.mxu0 0.0
    %1930 = vmatpush.msra.mxu0 0.0
    %1931 = vmatpush.msra.mxu0 0.0
    %1932 = vmatpush.msra.mxu0 0.0
    %1933 = vmatpush.msra.mxu0 0.0
    %1934 = vmatpush.msra.mxu0 0.0
    %1935 = vmatpush.msra.mxu0 0.0
    %1936 = vmatpush.msra.mxu0 0.0
    %1937 = vmatpush.msra.mxu0 0.0
    %1938 = vmatpush.msra.mxu0 0.0
    %1939 = vmatpush.msra.mxu0 %v122
    %1940 = vmatpush.msra.mxu0 %v121
    %1941 = vmatpush.msra.mxu0 %v120
    %1942 = vmatpush.msra.mxu0 %v119
    %1943 = vmatmul.f32.gmra.mxu0 %v1925
    %v1944 = vpop.f32.mrf.mxu0
    %v1945 = vadd.f32 %v287, %v1944
    %1946 = vdwg.mxu0
    %s1947 = scalar_lea.vmem [#allocation11], 28
    %1948 = vst [vmem:[%s1947] sm:$0xf] %v1945
    %v1949 = vld [vmem:[#allocation11] sm:$0xf]
    %v1950 = vld [vmem:[#allocation11 + $0x4] sm:$0xf]
    %v1951 = vld [vmem:[#allocation11 + $0x8] sm:$0xf]
    %v1952 = vld [vmem:[#allocation11 + $0xc] sm:$0xf]
    %v1953 = vld [vmem:[#allocation11 + $0x10] sm:$0xf]
    %v1954 = vld [vmem:[#allocation11 + $0x14] sm:$0xf]
    %v1955 = vld [vmem:[#allocation11 + $0x18] sm:$0xf]
    %v1956 = vld [vmem:[#allocation11 + $0x1c] sm:$0xf]
    %v1957 = vsel %vm126, %v1949, -inf
    %v1958 = vsel %vm126, %v1950, -inf
    %v1959 = vsel %vm126, %v1951, -inf
    %v1960 = vsel %vm126, %v1952, -inf
    %v1961 = vsel %vm126, %v1953, -inf
    %v1962 = vsel %vm126, %v1954, -inf
    %v1963 = vsel %vm126, %v1955, -inf
    %v1964 = vsel %vm126, %v1956, -inf
    %vm1965 = vcmask 1043456
    %v1966 = vsel %vm1965, %v1957, -inf
    %1967 = vmax.xlane.f32.xlu0 %v1966
    %v1968 = vpop.xlane.xlu0 %1967
    %v1969 = vsel %vm1965, %v1958, -inf
    %1970 = vmax.xlane.f32.xlu0 %v1969
    %v1971 = vpop.xlane.xlu0 %1970
    %v1972 = vsel %vm1965, %v1959, -inf
    %1973 = vmax.xlane.f32.xlu0 %v1972
    %v1974 = vpop.xlane.xlu0 %1973
    %v1975 = vsel %vm1965, %v1960, -inf
    %1976 = vmax.xlane.f32.xlu0 %v1975
    %v1977 = vpop.xlane.xlu0 %1976
    %v1978 = vsel %vm1965, %v1961, -inf
    %1979 = vmax.xlane.f32.xlu0 %v1978
    %v1980 = vpop.xlane.xlu0 %1979
    %v1981 = vsel %vm1965, %v1962, -inf
    %1982 = vmax.xlane.f32.xlu0 %v1981
    %v1983 = vpop.xlane.xlu0 %1982
    %v1984 = vsel %vm1965, %v1963, -inf
    %1985 = vmax.xlane.f32.xlu0 %v1984
    %v1986 = vpop.xlane.xlu0 %1985
    %v1987 = vsel %vm1965, %v1964, -inf
    %1988 = vmax.xlane.f32.xlu0 %v1987
    %v1989 = vpop.xlane.xlu0 %1988
    %v1990 = vsub.f32 %v1957, %v1968
    %v1991 = vsub.f32 %v1958, %v1971
    %v1992 = vsub.f32 %v1959, %v1974
    %v1993 = vsub.f32 %v1960, %v1977
    %v1994 = vsub.f32 %v1961, %v1980
    %v1995 = vsub.f32 %v1962, %v1983
    %v1996 = vsub.f32 %v1963, %v1986
    %v1997 = vsub.f32 %v1964, %v1989
    %v1998 = vmul.f32 %v1990, 1.442695
    %v1999 = vpow.pop %v1998
    %v2000 = vmul.f32 %v1991, 1.442695
    %v2001 = vpow.pop %v2000
    %v2002 = vmul.f32 %v1992, 1.442695
    %v2003 = vpow.pop %v2002
    %v2004 = vmul.f32 %v1993, 1.442695
    %v2005 = vpow.pop %v2004
    %v2006 = vmul.f32 %v1994, 1.442695
    %v2007 = vpow.pop %v2006
    %v2008 = vmul.f32 %v1995, 1.442695
    %v2009 = vpow.pop %v2008
    %v2010 = vmul.f32 %v1996, 1.442695
    %v2011 = vpow.pop %v2010
    %v2012 = vmul.f32 %v1997, 1.442695
    %v2013 = vpow.pop %v2012
    %v2014 = vsel %vm1965, %v1999, 0.0
    %2015 = vadd.xlane.f32.xlu0 %v2014
    %v2016 = vpop.xlane.xlu0 %2015
    %v2017 = vsel %vm1965, %v2001, 0.0
    %2018 = vadd.xlane.f32.xlu0 %v2017
    %v2019 = vpop.xlane.xlu0 %2018
    %v2020 = vsel %vm1965, %v2003, 0.0
    %2021 = vadd.xlane.f32.xlu0 %v2020
    %v2022 = vpop.xlane.xlu0 %2021
    %v2023 = vsel %vm1965, %v2005, 0.0
    %2024 = vadd.xlane.f32.xlu0 %v2023
    %v2025 = vpop.xlane.xlu0 %2024
    %v2026 = vsel %vm1965, %v2007, 0.0
    %2027 = vadd.xlane.f32.xlu0 %v2026
    %v2028 = vpop.xlane.xlu0 %2027
    %v2029 = vsel %vm1965, %v2009, 0.0
    %2030 = vadd.xlane.f32.xlu0 %v2029
    %v2031 = vpop.xlane.xlu0 %2030
    %v2032 = vsel %vm1965, %v2011, 0.0
    %2033 = vadd.xlane.f32.xlu0 %v2032
    %v2034 = vpop.xlane.xlu0 %2033
    %v2035 = vsel %vm1965, %v2013, 0.0
    %2036 = vadd.xlane.f32.xlu0 %v2035
    %v2037 = vpop.xlane.xlu0 %2036
    %v2038 = vlog2.pop %v2016
    %v2039 = vmul.f32 %v2038, 0.6931472
    %v2040 = vlog2.pop %v2019
    %v2041 = vmul.f32 %v2040, 0.6931472
    %v2042 = vlog2.pop %v2022
    %v2043 = vmul.f32 %v2042, 0.6931472
    %v2044 = vlog2.pop %v2025
    %v2045 = vmul.f32 %v2044, 0.6931472
    %v2046 = vlog2.pop %v2028
    %v2047 = vmul.f32 %v2046, 0.6931472
    %v2048 = vlog2.pop %v2031
    %v2049 = vmul.f32 %v2048, 0.6931472
    %v2050 = vlog2.pop %v2034
    %v2051 = vmul.f32 %v2050, 0.6931472
    %v2052 = vlog2.pop %v2037
    %v2053 = vmul.f32 %v2052, 0.6931472
    %v2054 = vsel %vm129, %v1949, -inf
    %v2055 = vsel %vm129, %v1950, -inf
    %v2056 = vsel %vm129, %v1951, -inf
    %v2057 = vsel %vm129, %v1952, -inf
    %v2058 = vsel %vm129, %v1953, -inf
    %v2059 = vsel %vm129, %v1954, -inf
    %v2060 = vsel %vm129, %v1955, -inf
    %v2061 = vsel %vm129, %v1956, -inf
    %v2062 = vsel %vm1965, %v2054, -inf
    %2063 = vmax.xlane.f32.xlu0 %v2062
    %v2064 = vpop.xlane.xlu0 %2063
    %v2065 = vsel %vm1965, %v2055, -inf
    %2066 = vmax.xlane.f32.xlu0 %v2065
    %v2067 = vpop.xlane.xlu0 %2066
    %v2068 = vsel %vm1965, %v2056, -inf
    %2069 = vmax.xlane.f32.xlu0 %v2068
    %v2070 = vpop.xlane.xlu0 %2069
    %v2071 = vsel %vm1965, %v2057, -inf
    %2072 = vmax.xlane.f32.xlu0 %v2071
    %v2073 = vpop.xlane.xlu0 %2072
    %v2074 = vsel %vm1965, %v2058, -inf
    %2075 = vmax.xlane.f32.xlu0 %v2074
    %v2076 = vpop.xlane.xlu0 %2075
    %v2077 = vsel %vm1965, %v2059, -inf
    %2078 = vmax.xlane.f32.xlu0 %v2077
    %v2079 = vpop.xlane.xlu0 %2078
    %v2080 = vsel %vm1965, %v2060, -inf
    %2081 = vmax.xlane.f32.xlu0 %v2080
    %v2082 = vpop.xlane.xlu0 %2081
    %v2083 = vsel %vm1965, %v2061, -inf
    %2084 = vmax.xlane.f32.xlu0 %v2083
    %v2085 = vpop.xlane.xlu0 %2084
    %v2086 = vsub.f32 %v2054, %v2064
    %v2087 = vsub.f32 %v2055, %v2067
    %v2088 = vsub.f32 %v2056, %v2070
    %v2089 = vsub.f32 %v2057, %v2073
    %v2090 = vsub.f32 %v2058, %v2076
    %v2091 = vsub.f32 %v2059, %v2079
    %v2092 = vsub.f32 %v2060, %v2082
    %v2093 = vsub.f32 %v2061, %v2085
    %v2094 = vmul.f32 %v2086, 1.442695
    %v2095 = vpow.pop %v2094
    %v2096 = vmul.f32 %v2087, 1.442695
    %v2097 = vpow.pop %v2096
    %v2098 = vmul.f32 %v2088, 1.442695
    %v2099 = vpow.pop %v2098
    %v2100 = vmul.f32 %v2089, 1.442695
    %v2101 = vpow.pop %v2100
    %v2102 = vmul.f32 %v2090, 1.442695
    %v2103 = vpow.pop %v2102
    %v2104 = vmul.f32 %v2091, 1.442695
    %v2105 = vpow.pop %v2104
    %v2106 = vmul.f32 %v2092, 1.442695
    %v2107 = vpow.pop %v2106
    %v2108 = vmul.f32 %v2093, 1.442695
    %v2109 = vpow.pop %v2108
    %v2110 = vsel %vm1965, %v2095, 0.0
    %2111 = vadd.xlane.f32.xlu0 %v2110
    %v2112 = vpop.xlane.xlu0 %2111
    %v2113 = vsel %vm1965, %v2097, 0.0
    %2114 = vadd.xlane.f32.xlu0 %v2113
    %v2115 = vpop.xlane.xlu0 %2114
    %v2116 = vsel %vm1965, %v2099, 0.0
    %2117 = vadd.xlane.f32.xlu0 %v2116
    %v2118 = vpop.xlane.xlu0 %2117
    %v2119 = vsel %vm1965, %v2101, 0.0
    %2120 = vadd.xlane.f32.xlu0 %v2119
    %v2121 = vpop.xlane.xlu0 %2120
    %v2122 = vsel %vm1965, %v2103, 0.0
    %2123 = vadd.xlane.f32.xlu0 %v2122
    %v2124 = vpop.xlane.xlu0 %2123
    %v2125 = vsel %vm1965, %v2105, 0.0
    %2126 = vadd.xlane.f32.xlu0 %v2125
    %v2127 = vpop.xlane.xlu0 %2126
    %v2128 = vsel %vm1965, %v2107, 0.0
    %2129 = vadd.xlane.f32.xlu0 %v2128
    %v2130 = vpop.xlane.xlu0 %2129
    %v2131 = vsel %vm1965, %v2109, 0.0
    %2132 = vadd.xlane.f32.xlu0 %v2131
    %v2133 = vpop.xlane.xlu0 %2132
    %v2134 = vlog2.pop %v2112
    %v2135 = vmul.f32 %v2134, 0.6931472
    %v2136 = vlog2.pop %v2115
    %v2137 = vmul.f32 %v2136, 0.6931472
    %v2138 = vlog2.pop %v2118
    %v2139 = vmul.f32 %v2138, 0.6931472
    %v2140 = vlog2.pop %v2121
    %v2141 = vmul.f32 %v2140, 0.6931472
    %v2142 = vlog2.pop %v2124
    %v2143 = vmul.f32 %v2142, 0.6931472
    %v2144 = vlog2.pop %v2127
    %v2145 = vmul.f32 %v2144, 0.6931472
    %v2146 = vlog2.pop %v2130
    %v2147 = vmul.f32 %v2146, 0.6931472
    %v2148 = vlog2.pop %v2133
    %v2149 = vmul.f32 %v2148, 0.6931472
    %v2150 = vsel %vm1965, %v1949, -inf
    %v2151 = vsel %vm1965, %v1950, -inf
    %v2152 = vsel %vm1965, %v1951, -inf
    %v2153 = vsel %vm1965, %v1952, -inf
    %v2154 = vsel %vm1965, %v1953, -inf
    %v2155 = vmax.f32 %v2150, %v2154
    %v2156 = vsel %vm1965, %v1954, -inf
    %v2157 = vmax.f32 %v2151, %v2156
    %v2158 = vsel %vm1965, %v1955, -inf
    %v2159 = vmax.f32 %v2152, %v2158
    %v2160 = vsel %vm1965, %v1956, -inf
    %v2161 = vmax.f32 %v2153, %v2160
    %v2162 = vmax.f32 %v2155, %v2157
    %v2163 = vmax.f32 %v2159, %v2161
    %v2164 = vmax.f32 %v2162, %v2163
    %v2165 = vsub.f32 %v1949, %v2164
    %v2166 = vsub.f32 %v1950, %v2164
    %v2167 = vsub.f32 %v1951, %v2164
    %v2168 = vsub.f32 %v1952, %v2164
    %v2169 = vsub.f32 %v1953, %v2164
    %v2170 = vsub.f32 %v1954, %v2164
    %v2171 = vsub.f32 %v1955, %v2164
    %v2172 = vsub.f32 %v1956, %v2164
    %v2173 = vmul.f32 %v2165, 1.442695
    %v2174 = vpow.pop %v2173
    %v2175 = vmul.f32 %v2166, 1.442695
    %v2176 = vpow.pop %v2175
    %v2177 = vmul.f32 %v2167, 1.442695
    %v2178 = vpow.pop %v2177
    %v2179 = vmul.f32 %v2168, 1.442695
    %v2180 = vpow.pop %v2179
    %v2181 = vmul.f32 %v2169, 1.442695
    %v2182 = vpow.pop %v2181
    %v2183 = vmul.f32 %v2170, 1.442695
    %v2184 = vpow.pop %v2183
    %v2185 = vmul.f32 %v2171, 1.442695
    %v2186 = vpow.pop %v2185
    %v2187 = vmul.f32 %v2172, 1.442695
    %v2188 = vpow.pop %v2187
    %v2189 = vsel %vm1965, %v2174, 0.0
    %v2190 = vsel %vm1965, %v2176, 0.0
    %v2191 = vadd.f32 %v2189, %v2190
    %v2192 = vsel %vm1965, %v2178, 0.0
    %v2193 = vadd.f32 %v2191, %v2192
    %v2194 = vsel %vm1965, %v2180, 0.0
    %v2195 = vadd.f32 %v2193, %v2194
    %v2196 = vsel %vm1965, %v2182, 0.0
    %v2197 = vadd.f32 %v2195, %v2196
    %v2198 = vsel %vm1965, %v2184, 0.0
    %v2199 = vadd.f32 %v2197, %v2198
    %v2200 = vsel %vm1965, %v2186, 0.0
    %v2201 = vadd.f32 %v2199, %v2200
    %v2202 = vsel %vm1965, %v2188, 0.0
    %v2203 = vadd.f32 %v2201, %v2202
    %v2204 = vrcp.pop %v2203
    %v2205 = vmul.f32 %v2203, %v2204
    %v2206 = vsub.f32 1.0, %v2205
    %v2207 = vmul.f32 %v2204, %v2206
    %v2208 = vadd.f32 %v2204, %v2207
    %vm2209 = vweird.f32 %v2203
    %vm2210 = vweird.f32 %v2204
    %vm2211 = vmor %vm2209, %vm2210
    %v2212 = vsel %vm2211, %v2204, %v2208
    %v2213 = vand.u32 2147483647, %v2203
    %vm2214 = vcmp.eq.f32.partialorder %v2213, 8.507059e+37
    %v2215 = vand.u32 %v2203, 2147483648
    %v2216 = vor.u32 1.1754944e-38, %v2215
    %v2217 = vsel %vm2214, %v2216, %v2212
    %v2218 = vmul.f32 %v2174, %v2217
    %v2219 = vmul.f32 %v2176, %v2217
    %v2220 = vmul.f32 %v2178, %v2217
    %v2221 = vmul.f32 %v2180, %v2217
    %v2222 = vmul.f32 %v2182, %v2217
    %v2223 = vmul.f32 %v2184, %v2217
    %v2224 = vmul.f32 %v2186, %v2217
    %v2225 = vmul.f32 %v2188, %v2217
    %v2226 = vsub.f32 %v1949, %v1968
    %v2227 = vsub.f32 %v1950, %v1971
    %v2228 = vsub.f32 %v1951, %v1974
    %v2229 = vsub.f32 %v1952, %v1977
    %v2230 = vsub.f32 %v1953, %v1980
    %v2231 = vsub.f32 %v1954, %v1983
    %v2232 = vsub.f32 %v1955, %v1986
    %v2233 = vsub.f32 %v1956, %v1989
    %v2234 = vsub.f32 %v2226, %v2039
    %v2235 = vsub.f32 %v2227, %v2041
    %v2236 = vsub.f32 %v2228, %v2043
    %v2237 = vsub.f32 %v2229, %v2045
    %v2238 = vsub.f32 %v2230, %v2047
    %v2239 = vsub.f32 %v2231, %v2049
    %v2240 = vsub.f32 %v2232, %v2051
    %v2241 = vsub.f32 %v2233, %v2053
    %v2242 = vsub.f32 %v1949, %v2064
    %v2243 = vsub.f32 %v1950, %v2067
    %v2244 = vsub.f32 %v1951, %v2070
    %v2245 = vsub.f32 %v1952, %v2073
    %v2246 = vsub.f32 %v1953, %v2076
    %v2247 = vsub.f32 %v1954, %v2079
    %v2248 = vsub.f32 %v1955, %v2082
    %v2249 = vsub.f32 %v1956, %v2085
    %v2250 = vsub.f32 %v2242, %v2135
    %v2251 = vsub.f32 %v2243, %v2137
    %v2252 = vsub.f32 %v2244, %v2139
    %v2253 = vsub.f32 %v2245, %v2141
    %v2254 = vsub.f32 %v2246, %v2143
    %v2255 = vsub.f32 %v2247, %v2145
    %v2256 = vsub.f32 %v2248, %v2147
    %v2257 = vsub.f32 %v2249, %v2149
    %v2258 = vxor.u32 %v1949, 2147483648
    %v2259 = vxor.u32 %v1950, 2147483648
    %v2260 = vxor.u32 %v1951, 2147483648
    %v2261 = vxor.u32 %v1952, 2147483648
    %v2262 = vxor.u32 %v1953, 2147483648
    %v2263 = vxor.u32 %v1954, 2147483648
    %v2264 = vxor.u32 %v1955, 2147483648
    %v2265 = vxor.u32 %v1956, 2147483648
    %v2266 = vmul.f32 %v2258, 1.442695
    %v2267 = vpow.pop %v2266
    %v2268 = vmul.f32 %v2259, 1.442695
    %v2269 = vpow.pop %v2268
    %v2270 = vmul.f32 %v2260, 1.442695
    %v2271 = vpow.pop %v2270
    %v2272 = vmul.f32 %v2261, 1.442695
    %v2273 = vpow.pop %v2272
    %v2274 = vmul.f32 %v2262, 1.442695
    %v2275 = vpow.pop %v2274
    %v2276 = vmul.f32 %v2263, 1.442695
    %v2277 = vpow.pop %v2276
    %v2278 = vmul.f32 %v2264, 1.442695
    %v2279 = vpow.pop %v2278
    %v2280 = vmul.f32 %v2265, 1.442695
    %v2281 = vpow.pop %v2280
    %v2282 = vadd.f32 %v2267, 1.0
    %v2283 = vadd.f32 %v2269, 1.0
    %v2284 = vadd.f32 %v2271, 1.0
    %v2285 = vadd.f32 %v2273, 1.0
    %v2286 = vadd.f32 %v2275, 1.0
    %v2287 = vadd.f32 %v2277, 1.0
    %v2288 = vadd.f32 %v2279, 1.0
    %v2289 = vadd.f32 %v2281, 1.0
    %v2290 = vrcp.pop %v2282
    %v2291 = vmul.f32 %v2282, %v2290
    %v2292 = vsub.f32 1.0, %v2291
    %v2293 = vmul.f32 %v2290, %v2292
    %v2294 = vadd.f32 %v2290, %v2293
    %vm2295 = vweird.f32 %v2282
    %vm2296 = vweird.f32 %v2290
    %vm2297 = vmor %vm2295, %vm2296
    %v2298 = vsel %vm2297, %v2290, %v2294
    %v2299 = vand.u32 2147483647, %v2282
    %vm2300 = vcmp.eq.f32.partialorder %v2299, 8.507059e+37
    %v2301 = vand.u32 %v2282, 2147483648
    %v2302 = vor.u32 1.1754944e-38, %v2301
    %v2303 = vsel %vm2300, %v2302, %v2298
    %v2304 = vmul.f32 1.0, %v2303
    %v2305 = vrcp.pop %v2283
    %v2306 = vmul.f32 %v2283, %v2305
    %v2307 = vsub.f32 1.0, %v2306
    %v2308 = vmul.f32 %v2305, %v2307
    %v2309 = vadd.f32 %v2305, %v2308
    %vm2310 = vweird.f32 %v2283
    %vm2311 = vweird.f32 %v2305
    %vm2312 = vmor %vm2310, %vm2311
    %v2313 = vsel %vm2312, %v2305, %v2309
    %v2314 = vand.u32 2147483647, %v2283
    %vm2315 = vcmp.eq.f32.partialorder %v2314, 8.507059e+37
    %v2316 = vand.u32 %v2283, 2147483648
    %v2317 = vor.u32 1.1754944e-38, %v2316
    %v2318 = vsel %vm2315, %v2317, %v2313
    %v2319 = vmul.f32 1.0, %v2318
    %v2320 = vrcp.pop %v2284
    %v2321 = vmul.f32 %v2284, %v2320
    %v2322 = vsub.f32 1.0, %v2321
    %v2323 = vmul.f32 %v2320, %v2322
    %v2324 = vadd.f32 %v2320, %v2323
    %vm2325 = vweird.f32 %v2284
    %vm2326 = vweird.f32 %v2320
    %vm2327 = vmor %vm2325, %vm2326
    %v2328 = vsel %vm2327, %v2320, %v2324
    %v2329 = vand.u32 2147483647, %v2284
    %vm2330 = vcmp.eq.f32.partialorder %v2329, 8.507059e+37
    %v2331 = vand.u32 %v2284, 2147483648
    %v2332 = vor.u32 1.1754944e-38, %v2331
    %v2333 = vsel %vm2330, %v2332, %v2328
    %v2334 = vmul.f32 1.0, %v2333
    %v2335 = vrcp.pop %v2285
    %v2336 = vmul.f32 %v2285, %v2335
    %v2337 = vsub.f32 1.0, %v2336
    %v2338 = vmul.f32 %v2335, %v2337
    %v2339 = vadd.f32 %v2335, %v2338
    %vm2340 = vweird.f32 %v2285
    %vm2341 = vweird.f32 %v2335
    %vm2342 = vmor %vm2340, %vm2341
    %v2343 = vsel %vm2342, %v2335, %v2339
    %v2344 = vand.u32 2147483647, %v2285
    %vm2345 = vcmp.eq.f32.partialorder %v2344, 8.507059e+37
    %v2346 = vand.u32 %v2285, 2147483648
    %v2347 = vor.u32 1.1754944e-38, %v2346
    %v2348 = vsel %vm2345, %v2347, %v2343
    %v2349 = vmul.f32 1.0, %v2348
    %v2350 = vrcp.pop %v2286
    %v2351 = vmul.f32 %v2286, %v2350
    %v2352 = vsub.f32 1.0, %v2351
    %v2353 = vmul.f32 %v2350, %v2352
    %v2354 = vadd.f32 %v2350, %v2353
    %vm2355 = vweird.f32 %v2286
    %vm2356 = vweird.f32 %v2350
    %vm2357 = vmor %vm2355, %vm2356
    %v2358 = vsel %vm2357, %v2350, %v2354
    %v2359 = vand.u32 2147483647, %v2286
    %vm2360 = vcmp.eq.f32.partialorder %v2359, 8.507059e+37
    %v2361 = vand.u32 %v2286, 2147483648
    %v2362 = vor.u32 1.1754944e-38, %v2361
    %v2363 = vsel %vm2360, %v2362, %v2358
    %v2364 = vmul.f32 1.0, %v2363
    %v2365 = vrcp.pop %v2287
    %v2366 = vmul.f32 %v2287, %v2365
    %v2367 = vsub.f32 1.0, %v2366
    %v2368 = vmul.f32 %v2365, %v2367
    %v2369 = vadd.f32 %v2365, %v2368
    %vm2370 = vweird.f32 %v2287
    %vm2371 = vweird.f32 %v2365
    %vm2372 = vmor %vm2370, %vm2371
    %v2373 = vsel %vm2372, %v2365, %v2369
    %v2374 = vand.u32 2147483647, %v2287
    %vm2375 = vcmp.eq.f32.partialorder %v2374, 8.507059e+37
    %v2376 = vand.u32 %v2287, 2147483648
    %v2377 = vor.u32 1.1754944e-38, %v2376
    %v2378 = vsel %vm2375, %v2377, %v2373
    %v2379 = vmul.f32 1.0, %v2378
    %v2380 = vrcp.pop %v2288
    %v2381 = vmul.f32 %v2288, %v2380
    %v2382 = vsub.f32 1.0, %v2381
    %v2383 = vmul.f32 %v2380, %v2382
    %v2384 = vadd.f32 %v2380, %v2383
    %vm2385 = vweird.f32 %v2288
    %vm2386 = vweird.f32 %v2380
    %vm2387 = vmor %vm2385, %vm2386
    %v2388 = vsel %vm2387, %v2380, %v2384
    %v2389 = vand.u32 2147483647, %v2288
    %vm2390 = vcmp.eq.f32.partialorder %v2389, 8.507059e+37
    %v2391 = vand.u32 %v2288, 2147483648
    %v2392 = vor.u32 1.1754944e-38, %v2391
    %v2393 = vsel %vm2390, %v2392, %v2388
    %v2394 = vmul.f32 1.0, %v2393
    %v2395 = vrcp.pop %v2289
    %v2396 = vmul.f32 %v2289, %v2395
    %v2397 = vsub.f32 1.0, %v2396
    %v2398 = vmul.f32 %v2395, %v2397
    %v2399 = vadd.f32 %v2395, %v2398
    %vm2400 = vweird.f32 %v2289
    %vm2401 = vweird.f32 %v2395
    %vm2402 = vmor %vm2400, %vm2401
    %v2403 = vsel %vm2402, %v2395, %v2399
    %v2404 = vand.u32 2147483647, %v2289
    %vm2405 = vcmp.eq.f32.partialorder %v2404, 8.507059e+37
    %v2406 = vand.u32 %v2289, 2147483648
    %v2407 = vor.u32 1.1754944e-38, %v2406
    %v2408 = vsel %vm2405, %v2407, %v2403
    %v2409 = vmul.f32 1.0, %v2408
    %v2410 = vsel %vm385, %v2304, 0.0
    %v2411 = vsel %vm385, %v2319, 0.0
    %v2412 = vsel %vm385, %v2334, 0.0
    %v2413 = vsel %vm385, %v2349, 0.0
    %v2414 = vsel %vm385, %v2364, 0.0
    %v2415 = vsel %vm385, %v2379, 0.0
    %v2416 = vsel %vm385, %v2394, 0.0
    %v2417 = vsel %vm385, %v2409, 0.0
    %v2418 = vsel %vm382, %v2218, %v2410
    %v2419 = vsel %vm382, %v2219, %v2411
    %v2420 = vsel %vm382, %v2220, %v2412
    %v2421 = vsel %vm382, %v2221, %v2413
    %v2422 = vsel %vm382, %v2222, %v2414
    %v2423 = vsel %vm382, %v2223, %v2415
    %v2424 = vsel %vm382, %v2224, %v2416
    %v2425 = vsel %vm382, %v2225, %v2417
    %v2426 = vsel %vm129, %v2250, %v2418
    %v2427 = vsel %vm129, %v2251, %v2419
    %v2428 = vsel %vm129, %v2252, %v2420
    %v2429 = vsel %vm129, %v2253, %v2421
    %v2430 = vsel %vm129, %v2254, %v2422
    %v2431 = vsel %vm129, %v2255, %v2423
    %v2432 = vsel %vm129, %v2256, %v2424
    %v2433 = vsel %vm129, %v2257, %v2425
    %v2434 = vsel %vm126, %v2234, %v2426
    %v2435 = vsel %vm126, %v2235, %v2427
    %v2436 = vsel %vm126, %v2236, %v2428
    %v2437 = vsel %vm126, %v2237, %v2429
    %v2438 = vsel %vm126, %v2238, %v2430
    %v2439 = vsel %vm126, %v2239, %v2431
    %v2440 = vsel %vm126, %v2240, %v2432
    %v2441 = vsel %vm126, %v2241, %v2433
    %2442 = vst [vmem:[#allocation11] sm:$0xf] %v2434
    %2443 = vst [vmem:[#allocation11 + $0x4] sm:$0xf] %v2435
    %2444 = vst [vmem:[#allocation11 + $0x8] sm:$0xf] %v2436
    %2445 = vst [vmem:[#allocation11 + $0xc] sm:$0xf] %v2437
    %2446 = vst [vmem:[#allocation11 + $0x10] sm:$0xf] %v2438
    %2447 = vst [vmem:[#allocation11 + $0x14] sm:$0xf] %v2439
    %2448 = vst [vmem:[#allocation11 + $0x18] sm:$0xf] %v2440
    %2449 = vst [vmem:[#allocation11 + $0x1c] sm:$0xf] %v2441
    // Predicated region
    $region46: #{tpu_custom_call.1} parent=1 // pred_check
      _
    $region47: #{tpu_custom_call.1} parent=1 // pred_check_branch
      %2451 = sbr.rel (0) target = $region49
    $region48: #{tpu_custom_call.1} parent=1 // pred_region
      %2453 = vsyncadd [#allocation4], 0
      %s2454 = sshll.u32 [#allocation11], 4
      %s2455 = int_to_ptr.vmem [resolvable:$true] %s2454
      %s2456 = sshll.u32 %s6, 4
      %s2457 = int_to_ptr.hbm [resolvable:$true] %s2456
      %2462 = dma.vmem_to_hbm [thread:$0]  %s2455, 512, %s2457, [#allocation4], 64, 64, 4
    $region49: #{tpu_custom_call.1} parent=1 // pred_fallthru
      _
    // Predicated region
    $region50: #{tpu_custom_call.1} parent=1 // pred_check
      _
    $region51: #{tpu_custom_call.1} parent=1 // pred_check_branch
      %2464 = sbr.rel (0) target = $region53
    $region52: #{tpu_custom_call.1} parent=1 // pred_region
      %2466 = dma.done [#allocation4], 512
    $region53: #{tpu_custom_call.1} parent=1 // pred_fallthru
      _
    %2467 = vsyncpa [#allocation3], 1
    %2468 = vsyncpa [#allocation6], 1
    %2469 = vsyncpa [#allocation9], 1
    %2470 = vsyncpa [#allocation4], 1

</llo_original>
